<compile_context>
chip_gen: v7x
topology: tpu7x:2x2x1
jax: 0.10.0
libtpu: 0.0.40
codegen_flags: <defaults>
</compile_context>

<pallas_src>
import jax
import jax.numpy as jnp
from jax import lax
from jax.experimental import pallas as pl
from jax.experimental.pallas import tpu as pltpu

BN_EPS = 1e-5


# ----------------------------------------------------------------------------
# Pallas kernels (each invoked once on full-extent VMEM blocks)
# ----------------------------------------------------------------------------
def _conv1_pool_bn_kernel(p_ref, w_ref, b_ref, s_ref, t_ref, o_ref):
    """bn1(maxpool2x2(relu(conv1(x)))).

    p_ref[q] holds the im2col patches of pool quadrant q (q = dh*2+dw), so the
    2x2 maxpool is an elementwise max of 4 MXU results.  Bias/ReLU commute with
    the max (ReLU monotone, bias identical per quadrant), so they are applied
    after it; bn1 (inference) is a per-channel scale/shift epilogue.
    """
    m = jnp.dot(p_ref[0], w_ref[...], preferred_element_type=jnp.float32)
    for q in range(1, 4):
        m = jnp.maximum(
            m, jnp.dot(p_ref[q], w_ref[...], preferred_element_type=jnp.float32))
    y = jnp.maximum(m + b_ref[...], 0.0)
    o_ref[...] = (y * s_ref[...] + t_ref[...]).astype(o_ref.dtype)


def _conv_bn_kernel(p_ref, w_ref, b_ref, s_ref, t_ref, o_ref):
    """bn(relu(conv(x))) as matmul + bias + ReLU + per-channel scale/shift."""
    acc = jnp.dot(p_ref[...], w_ref[...], preferred_element_type=jnp.float32)
    y = jnp.maximum(acc + b_ref[...], 0.0)
    o_ref[...] = (y * s_ref[...] + t_ref[...]).astype(o_ref.dtype)


def _fc_kernel(x_ref, w1_ref, b1_ref, w2_ref, b2_ref, o_ref):
    """fc2(relu(fc1(x))) entirely in VMEM; only the [B,2] result is stored."""
    h = jnp.dot(x_ref[...], w1_ref[...], preferred_element_type=jnp.float32)
    h = jnp.maximum(h + b1_ref[...], 0.0)
    o = jnp.dot(h.astype(w2_ref.dtype), w2_ref[...],
                preferred_element_type=jnp.float32)
    o_ref[...] = (o + b2_ref[...]).astype(o_ref.dtype)


def _pallas_full(kernel, out_shape, *args):
    """Run `kernel` once with every operand as a single full-extent VMEM block."""
    in_specs = [pl.BlockSpec(a.shape, lambda i, n=a.ndim: (0,) * n) for a in args]
    out_spec = pl.BlockSpec(out_shape.shape,
                            lambda i, n=len(out_shape.shape): (0,) * n)
    return pl.pallas_call(
        kernel,
        out_shape=out_shape,
        grid=(1,),
        in_specs=in_specs,
        out_specs=out_spec,
        compiler_params=pltpu.CompilerParams(dimension_semantics=("arbitrary",)),
    )(*args)


# ----------------------------------------------------------------------------
# XLA glue: patch extraction + one-time parameter preparation
# ----------------------------------------------------------------------------
def _patches(x, k, stride, pad):
    """x: [B,H,W,C] NHWC -> [B,Ho,Wo, C*k*k]; feature order is (ci, kh, kw)."""
    return lax.conv_general_dilated_patches(
        x, (k, k), (stride, stride), [(pad, pad), (pad, pad)],
        dimension_numbers=("NHWC", "HWIO", "NHWC"))


def init_params(key):
    """Parameters in PyTorch layouts ([Cout,Cin,kH,kW] convs, [out,in] fcs)."""
    ks = jax.random.split(key, 16)
    n = lambda k, shape, s=0.05: jax.random.normal(k, shape, jnp.float32) * s

    def bn_params(k, c):
        k1, k2, k3, k4 = jax.random.split(k, 4)
        gamma = 1.0 + n(k1, (1, c), 0.1)
        beta = n(k2, (1, c), 0.1)
        mean = n(k3, (1, c), 0.1)
        var = 1.0 + jnp.abs(n(k4, (1, c), 0.1))
        return (gamma, beta, mean, var)

    return {
        "conv1_w": n(ks[0], (32, 4, 8, 8)),
        "conv1_b": n(ks[1], (32,)),
        "conv2_w": n(ks[2], (64, 32, 4, 4)),
        "conv2_b": n(ks[3], (64,)),
        "conv3_w": n(ks[4], (64, 64, 3, 3)),
        "conv3_b": n(ks[5], (64,)),
        "bn1": bn_params(ks[6], 32),
        "bn2": bn_params(ks[7], 64),
        "bn3": bn_params(ks[8], 64),
        "fc1_w": n(ks[9], (512, 1600)),
        "fc1_b": n(ks[10], (512,)),
        "fc2_w": n(ks[11], (2, 512)),
        "fc2_b": n(ks[12], (2,)),
    }


def prepare_params(p):
    """One-time layout conversion: conv weights -> matmul form matching the
    (ci,kh,kw) patch ordering, BN folded to (scale, shift), fc weights
    pre-transposed (fc1 rows permuted so the NHWC flatten matches PyTorch's
    NCHW .view(B,-1)).  Matmul operands stored as bf16."""
    def conv_mat(w):
        cout, cin, kh, kw = w.shape
        return (jnp.transpose(w, (1, 2, 3, 0))
                .reshape(cin * kh * kw, cout).astype(jnp.bfloat16))

    def bn_fold(bn):
        g, b, m, v = bn
        scale = g / jnp.sqrt(v + BN_EPS)
        return scale.astype(jnp.float32), (b - m * scale).astype(jnp.float32)

    s1, t1 = bn_fold(p["bn1"])
    s2, t2 = bn_fold(p["bn2"])
    s3, t3 = bn_fold(p["bn3"])

    # fc1: PyTorch flattens [B,64,5,5] in (c,h,w) order; our activation flattens
    # NHWC in (h,w,c) order -> permute the 1600 input rows once here.
    wf1 = (p["fc1_w"].reshape(512, 64, 5, 5).transpose(2, 3, 1, 0)
           .reshape(1600, 512).astype(jnp.bfloat16))
    wf2 = p["fc2_w"].T.astype(jnp.bfloat16)

    row = lambda b: b.reshape(1, -1).astype(jnp.float32)
    return {
        "w1": conv_mat(p["conv1_w"]), "b1": row(p["conv1_b"]), "s1": s1, "t1": t1,
        "w2": conv_mat(p["conv2_w"]), "b2": row(p["conv2_b"]), "s2": s2, "t2": t2,
        "w3": conv_mat(p["conv3_w"]), "b3": row(p["conv3_b"]), "s3": s3, "t3": t3,
        "wf1": wf1, "bf1": row(p["fc1_b"]),
        "wf2": wf2, "bf2": row(p["fc2_b"]),
    }


# ----------------------------------------------------------------------------
# Forward
# ----------------------------------------------------------------------------
def dqn_forward(x_nchw, P):
    x = jnp.transpose(x_nchw, (0, 2, 3, 1)).astype(jnp.bfloat16)   # NHWC, bf16
    B = x.shape[0]

    # ---- conv1 (k8,s4,p2) + ReLU + maxpool 2x2 + bn1  (single kernel) ----
    p = _patches(x, 8, 4, 2)                                       # [B,20,20,256]
    _, H1, W1, F1 = p.shape
    ho, wo = H1 // 2, W1 // 2
    # Group the 4 pool-quadrant patch sets on a leading axis: [4, B*ho*wo, F1].
    p = p.reshape(B, ho, 2, wo, 2, F1)
    p = jnp.transpose(p, (2, 4, 0, 1, 3, 5)).reshape(4, B * ho * wo, F1)
    y = _pallas_full(_conv1_pool_bn_kernel,
                     jax.ShapeDtypeStruct((B * ho * wo, 32), jnp.bfloat16),
                     p, P["w1"], P["b1"], P["s1"], P["t1"])
    y = y.reshape(B, ho, wo, 32)                                   # [B,10,10,32]

    # ---- conv2 (k4,s2,p1) + ReLU + bn2 ----
    p = _patches(y, 4, 2, 1)                                       # [B,5,5,512]
    _, H2, W2, F2 = p.shape
    y = _pallas_full(_conv_bn_kernel,
                     jax.ShapeDtypeStruct((B * H2 * W2, 64), jnp.bfloat16),
                     p.reshape(B * H2 * W2, F2),
                     P["w2"], P["b2"], P["s2"], P["t2"])
    y = y.reshape(B, H2, W2, 64)                                   # [B,5,5,64]

    # ---- conv3 (k3,s1,p1) + ReLU + bn3 ----
    p = _patches(y, 3, 1, 1)                                       # [B,5,5,576]
    _, H3, W3, F3 = p.shape
    y = _pallas_full(_conv_bn_kernel,
                     jax.ShapeDtypeStruct((B * H3 * W3, 64), jnp.bfloat16),
                     p.reshape(B * H3 * W3, F3),
                     P["w3"], P["b3"], P["s3"], P["t3"])

    # ---- fc1 + ReLU + fc2  (single kernel; flatten order folded into wf1) ----
    y = y.reshape(B, H3 * W3 * 64)                                 # [B,1600]
    return _pallas_full(_fc_kernel,
                        jax.ShapeDtypeStruct((B, 2), jnp.float32),
                        y, P["wf1"], P["bf1"], P["wf2"], P["bf2"])


if __name__ == "__main__":
    key = jax.random.PRNGKey(0)
    k_params, k_x = jax.random.split(key)
    # One-time parameter prep (layout conversion + BN folding), outside the jit.
    params = prepare_params(init_params(k_params))
    # Input spatial size 80x80 is required so the flattened conv3 output is 1600.
    x = jax.random.normal(k_x, (2, 4, 80, 80), jnp.float32)        # NCHW like PyTorch

    out = jax.jit(dqn_forward)(x, params)
    out = jax.block_until_ready(out)
    assert out.shape == (2, 2) and out.dtype == jnp.float32
    assert bool(jnp.all(jnp.isfinite(out)))
    print("KERNEL_OK")
</pallas_src>

<mosaic_0001>
module attributes {stable_mosaic.version = 11 : i64} {
  func.func @_conv1_pool_bn_kernel(%arg0: i32, %arg1: memref<4x200x256xbf16, #tpu.memory_space<vmem>>, %arg2: memref<256x32xbf16, #tpu.memory_space<vmem>>, %arg3: memref<1x32xf32, #tpu.memory_space<vmem>>, %arg4: memref<1x32xf32, #tpu.memory_space<vmem>>, %arg5: memref<1x32xf32, #tpu.memory_space<vmem>>, %arg6: memref<200x32xbf16, #tpu.memory_space<vmem>>) attributes {dimension_semantics = [#tpu.dimension_semantics<arbitrary>], iteration_bounds = array<i64: 1>, scalar_prefetch = 0 : i64, scratch_operands = 0 : i64, tpu.core_type = #tpu.core_type<tc>, window_params = [{pipeline_mode = #tpu.pipeline_mode<synchronous>, transform_indices = @transform_0, window_bounds = array<i64: 4, 200, 256>}, {pipeline_mode = #tpu.pipeline_mode<synchronous>, transform_indices = @transform_1, window_bounds = array<i64: 256, 32>}, {pipeline_mode = #tpu.pipeline_mode<synchronous>, transform_indices = @transform_2, window_bounds = array<i64: 1, 32>}, {pipeline_mode = #tpu.pipeline_mode<synchronous>, transform_indices = @transform_3, window_bounds = array<i64: 1, 32>}, {pipeline_mode = #tpu.pipeline_mode<synchronous>, transform_indices = @transform_4, window_bounds = array<i64: 1, 32>}, {pipeline_mode = #tpu.pipeline_mode<synchronous>, transform_indices = @transform_5, window_bounds = array<i64: 200, 32>}]} {
    %c0 = arith.constant 0 : index
    %c0_0 = arith.constant 0 : index
    %c0_1 = arith.constant 0 : index
    %0 = vector.load %arg1[%c0, %c0_0, %c0_1] : memref<4x200x256xbf16, #tpu.memory_space<vmem>>, vector<1x200x256xbf16>
    %1 = vector.shape_cast %0 : vector<1x200x256xbf16> to vector<200x256xbf16>
    %c0_2 = arith.constant 0 : index
    %c0_3 = arith.constant 0 : index
    %2 = vector.load %arg2[%c0_2, %c0_3] : memref<256x32xbf16, #tpu.memory_space<vmem>>, vector<256x32xbf16>
    %cst = arith.constant dense<0.000000e+00> : vector<200x32xf32>
    %3 = tpu.matmul %1, %2, %cst {dimension_numbers = #tpu.dot_dimension_numbers<[1], [0], [0], [1], [0, 0, 1, 1], [], []>} : vector<200x256xbf16>, vector<256x32xbf16>, vector<200x32xf32> -> vector<200x32xf32>
    %c1 = arith.constant 1 : index
    %c0_4 = arith.constant 0 : index
    %c0_5 = arith.constant 0 : index
    %4 = vector.load %arg1[%c1, %c0_4, %c0_5] : memref<4x200x256xbf16, #tpu.memory_space<vmem>>, vector<1x200x256xbf16>
    %5 = vector.shape_cast %4 : vector<1x200x256xbf16> to vector<200x256xbf16>
    %c0_6 = arith.constant 0 : index
    %c0_7 = arith.constant 0 : index
    %6 = vector.load %arg2[%c0_6, %c0_7] : memref<256x32xbf16, #tpu.memory_space<vmem>>, vector<256x32xbf16>
    %cst_8 = arith.constant dense<0.000000e+00> : vector<200x32xf32>
    %7 = tpu.matmul %5, %6, %cst_8 {dimension_numbers = #tpu.dot_dimension_numbers<[1], [0], [0], [1], [0, 0, 1, 1], [], []>} : vector<200x256xbf16>, vector<256x32xbf16>, vector<200x32xf32> -> vector<200x32xf32>
    %8 = arith.maximumf %3, %7 : vector<200x32xf32>
    %c2 = arith.constant 2 : index
    %c0_9 = arith.constant 0 : index
    %c0_10 = arith.constant 0 : index
    %9 = vector.load %arg1[%c2, %c0_9, %c0_10] : memref<4x200x256xbf16, #tpu.memory_space<vmem>>, vector<1x200x256xbf16>
    %10 = vector.shape_cast %9 : vector<1x200x256xbf16> to vector<200x256xbf16>
    %c0_11 = arith.constant 0 : index
    %c0_12 = arith.constant 0 : index
    %11 = vector.load %arg2[%c0_11, %c0_12] : memref<256x32xbf16, #tpu.memory_space<vmem>>, vector<256x32xbf16>
    %cst_13 = arith.constant dense<0.000000e+00> : vector<200x32xf32>
    %12 = tpu.matmul %10, %11, %cst_13 {dimension_numbers = #tpu.dot_dimension_numbers<[1], [0], [0], [1], [0, 0, 1, 1], [], []>} : vector<200x256xbf16>, vector<256x32xbf16>, vector<200x32xf32> -> vector<200x32xf32>
    %13 = arith.maximumf %8, %12 : vector<200x32xf32>
    %c3 = arith.constant 3 : index
    %c0_14 = arith.constant 0 : index
    %c0_15 = arith.constant 0 : index
    %14 = vector.load %arg1[%c3, %c0_14, %c0_15] : memref<4x200x256xbf16, #tpu.memory_space<vmem>>, vector<1x200x256xbf16>
    %15 = vector.shape_cast %14 : vector<1x200x256xbf16> to vector<200x256xbf16>
    %c0_16 = arith.constant 0 : index
    %c0_17 = arith.constant 0 : index
    %16 = vector.load %arg2[%c0_16, %c0_17] : memref<256x32xbf16, #tpu.memory_space<vmem>>, vector<256x32xbf16>
    %cst_18 = arith.constant dense<0.000000e+00> : vector<200x32xf32>
    %17 = tpu.matmul %15, %16, %cst_18 {dimension_numbers = #tpu.dot_dimension_numbers<[1], [0], [0], [1], [0, 0, 1, 1], [], []>} : vector<200x256xbf16>, vector<256x32xbf16>, vector<200x32xf32> -> vector<200x32xf32>
    %18 = arith.maximumf %13, %17 : vector<200x32xf32>
    %c0_19 = arith.constant 0 : index
    %c0_20 = arith.constant 0 : index
    %19 = vector.load %arg3[%c0_19, %c0_20] : memref<1x32xf32, #tpu.memory_space<vmem>>, vector<1x32xf32>
    %20 = vector.broadcast %19 : vector<1x32xf32> to vector<200x32xf32>
    %21 = arith.addf %18, %20 : vector<200x32xf32>
    %cst_21 = arith.constant 0.000000e+00 : f32
    %22 = vector.broadcast %cst_21 : f32 to vector<200x32xf32>
    %23 = arith.maximumf %21, %22 : vector<200x32xf32>
    %c0_22 = arith.constant 0 : index
    %c0_23 = arith.constant 0 : index
    %24 = vector.load %arg4[%c0_22, %c0_23] : memref<1x32xf32, #tpu.memory_space<vmem>>, vector<1x32xf32>
    %25 = vector.broadcast %24 : vector<1x32xf32> to vector<200x32xf32>
    %26 = arith.mulf %23, %25 : vector<200x32xf32>
    %c0_24 = arith.constant 0 : index
    %c0_25 = arith.constant 0 : index
    %27 = vector.load %arg5[%c0_24, %c0_25] : memref<1x32xf32, #tpu.memory_space<vmem>>, vector<1x32xf32>
    %28 = vector.broadcast %27 : vector<1x32xf32> to vector<200x32xf32>
    %29 = arith.addf %26, %28 : vector<200x32xf32>
    %30 = arith.truncf %29 : vector<200x32xf32> to vector<200x32xbf16>
    %c0_26 = arith.constant 0 : index
    %c0_27 = arith.constant 0 : index
    %31 = vector.load %arg6[%c0_26, %c0_27] : memref<200x32xbf16, #tpu.memory_space<vmem>>, vector<200x32xbf16>
    tpu.vector_store %arg6[%c0_26, %c0_27], %30 {strides = array<i32>} : memref<200x32xbf16, #tpu.memory_space<vmem>>, vector<200x32xbf16>,
    return
  }
  func.func @transform_0(%arg0: i32) -> (i32, i32, i32) {
    %c0_i32 = arith.constant 0 : i32
    %c0_i32_0 = arith.constant 0 : i32
    %c0_i32_1 = arith.constant 0 : i32
    %c0_i32_2 = arith.constant 0 : i32
    return %c0_i32, %c0_i32_0, %c0_i32_1 : i32, i32, i32
  }
  func.func @transform_1(%arg0: i32) -> (i32, i32) {
    %c0_i32 = arith.constant 0 : i32
    %c0_i32_0 = arith.constant 0 : i32
    %c0_i32_1 = arith.constant 0 : i32
    return %c0_i32, %c0_i32_0 : i32, i32
  }
  func.func @transform_2(%arg0: i32) -> (i32, i32) {
    %c0_i32 = arith.constant 0 : i32
    %c0_i32_0 = arith.constant 0 : i32
    %c0_i32_1 = arith.constant 0 : i32
    return %c0_i32, %c0_i32_0 : i32, i32
  }
  func.func @transform_3(%arg0: i32) -> (i32, i32) {
    %c0_i32 = arith.constant 0 : i32
    %c0_i32_0 = arith.constant 0 : i32
    %c0_i32_1 = arith.constant 0 : i32
    return %c0_i32, %c0_i32_0 : i32, i32
  }
  func.func @transform_4(%arg0: i32) -> (i32, i32) {
    %c0_i32 = arith.constant 0 : i32
    %c0_i32_0 = arith.constant 0 : i32
    %c0_i32_1 = arith.constant 0 : i32
    return %c0_i32, %c0_i32_0 : i32, i32
  }
  func.func @transform_5(%arg0: i32) -> (i32, i32) {
    %c0_i32 = arith.constant 0 : i32
    %c0_i32_0 = arith.constant 0 : i32
    %c0_i32_1 = arith.constant 0 : i32
    return %c0_i32, %c0_i32_0 : i32, i32
  }
}

module attributes {stable_mosaic.version = 11 : i64} {
  func.func @_conv_bn_kernel(%arg0: i32, %arg1: memref<50x512xbf16, #tpu.memory_space<vmem>>, %arg2: memref<512x64xbf16, #tpu.memory_space<vmem>>, %arg3: memref<1x64xf32, #tpu.memory_space<vmem>>, %arg4: memref<1x64xf32, #tpu.memory_space<vmem>>, %arg5: memref<1x64xf32, #tpu.memory_space<vmem>>, %arg6: memref<50x64xbf16, #tpu.memory_space<vmem>>) attributes {dimension_semantics = [#tpu.dimension_semantics<arbitrary>], iteration_bounds = array<i64: 1>, scalar_prefetch = 0 : i64, scratch_operands = 0 : i64, tpu.core_type = #tpu.core_type<tc>, window_params = [{pipeline_mode = #tpu.pipeline_mode<synchronous>, transform_indices = @transform_0, window_bounds = array<i64: 50, 512>}, {pipeline_mode = #tpu.pipeline_mode<synchronous>, transform_indices = @transform_1, window_bounds = array<i64: 512, 64>}, {pipeline_mode = #tpu.pipeline_mode<synchronous>, transform_indices = @transform_2, window_bounds = array<i64: 1, 64>}, {pipeline_mode = #tpu.pipeline_mode<synchronous>, transform_indices = @transform_3, window_bounds = array<i64: 1, 64>}, {pipeline_mode = #tpu.pipeline_mode<synchronous>, transform_indices = @transform_4, window_bounds = array<i64: 1, 64>}, {pipeline_mode = #tpu.pipeline_mode<synchronous>, transform_indices = @transform_5, window_bounds = array<i64: 50, 64>}]} {
    %c0 = arith.constant 0 : index
    %c0_0 = arith.constant 0 : index
    %0 = vector.load %arg1[%c0, %c0_0] : memref<50x512xbf16, #tpu.memory_space<vmem>>, vector<50x512xbf16>
    %c0_1 = arith.constant 0 : index
    %c0_2 = arith.constant 0 : index
    %1 = vector.load %arg2[%c0_1, %c0_2] : memref<512x64xbf16, #tpu.memory_space<vmem>>, vector<512x64xbf16>
    %cst = arith.constant dense<0.000000e+00> : vector<50x64xf32>
    %2 = tpu.matmul %0, %1, %cst {dimension_numbers = #tpu.dot_dimension_numbers<[1], [0], [0], [1], [0, 0, 1, 1], [], []>} : vector<50x512xbf16>, vector<512x64xbf16>, vector<50x64xf32> -> vector<50x64xf32>
    %c0_3 = arith.constant 0 : index
    %c0_4 = arith.constant 0 : index
    %3 = vector.load %arg3[%c0_3, %c0_4] : memref<1x64xf32, #tpu.memory_space<vmem>>, vector<1x64xf32>
    %4 = vector.broadcast %3 : vector<1x64xf32> to vector<50x64xf32>
    %5 = arith.addf %2, %4 : vector<50x64xf32>
    %cst_5 = arith.constant 0.000000e+00 : f32
    %6 = vector.broadcast %cst_5 : f32 to vector<50x64xf32>
    %7 = arith.maximumf %5, %6 : vector<50x64xf32>
    %c0_6 = arith.constant 0 : index
    %c0_7 = arith.constant 0 : index
    %8 = vector.load %arg4[%c0_6, %c0_7] : memref<1x64xf32, #tpu.memory_space<vmem>>, vector<1x64xf32>
    %9 = vector.broadcast %8 : vector<1x64xf32> to vector<50x64xf32>
    %10 = arith.mulf %7, %9 : vector<50x64xf32>
    %c0_8 = arith.constant 0 : index
    %c0_9 = arith.constant 0 : index
    %11 = vector.load %arg5[%c0_8, %c0_9] : memref<1x64xf32, #tpu.memory_space<vmem>>, vector<1x64xf32>
    %12 = vector.broadcast %11 : vector<1x64xf32> to vector<50x64xf32>
    %13 = arith.addf %10, %12 : vector<50x64xf32>
    %14 = arith.truncf %13 : vector<50x64xf32> to vector<50x64xbf16>
    %c0_10 = arith.constant 0 : index
    %c0_11 = arith.constant 0 : index
    %15 = vector.load %arg6[%c0_10, %c0_11] : memref<50x64xbf16, #tpu.memory_space<vmem>>, vector<50x64xbf16>
    tpu.vector_store %arg6[%c0_10, %c0_11], %14 {strides = array<i32>} : memref<50x64xbf16, #tpu.memory_space<vmem>>, vector<50x64xbf16>,
    return
  }
  func.func @transform_0(%arg0: i32) -> (i32, i32) {
    %c0_i32 = arith.constant 0 : i32
    %c0_i32_0 = arith.constant 0 : i32
    %c0_i32_1 = arith.constant 0 : i32
    return %c0_i32, %c0_i32_0 : i32, i32
  }
  func.func @transform_1(%arg0: i32) -> (i32, i32) {
    %c0_i32 = arith.constant 0 : i32
    %c0_i32_0 = arith.constant 0 : i32
    %c0_i32_1 = arith.constant 0 : i32
    return %c0_i32, %c0_i32_0 : i32, i32
  }
  func.func @transform_2(%arg0: i32) -> (i32, i32) {
    %c0_i32 = arith.constant 0 : i32
    %c0_i32_0 = arith.constant 0 : i32
    %c0_i32_1 = arith.constant 0 : i32
    return %c0_i32, %c0_i32_0 : i32, i32
  }
  func.func @transform_3(%arg0: i32) -> (i32, i32) {
    %c0_i32 = arith.constant 0 : i32
    %c0_i32_0 = arith.constant 0 : i32
    %c0_i32_1 = arith.constant 0 : i32
    return %c0_i32, %c0_i32_0 : i32, i32
  }
  func.func @transform_4(%arg0: i32) -> (i32, i32) {
    %c0_i32 = arith.constant 0 : i32
    %c0_i32_0 = arith.constant 0 : i32
    %c0_i32_1 = arith.constant 0 : i32
    return %c0_i32, %c0_i32_0 : i32, i32
  }
  func.func @transform_5(%arg0: i32) -> (i32, i32) {
    %c0_i32 = arith.constant 0 : i32
    %c0_i32_0 = arith.constant 0 : i32
    %c0_i32_1 = arith.constant 0 : i32
    return %c0_i32, %c0_i32_0 : i32, i32
  }
}

module attributes {stable_mosaic.version = 11 : i64} {
  func.func @_conv_bn_kernel(%arg0: i32, %arg1: memref<50x576xbf16, #tpu.memory_space<vmem>>, %arg2: memref<576x64xbf16, #tpu.memory_space<vmem>>, %arg3: memref<1x64xf32, #tpu.memory_space<vmem>>, %arg4: memref<1x64xf32, #tpu.memory_space<vmem>>, %arg5: memref<1x64xf32, #tpu.memory_space<vmem>>, %arg6: memref<50x64xbf16, #tpu.memory_space<vmem>>) attributes {dimension_semantics = [#tpu.dimension_semantics<arbitrary>], iteration_bounds = array<i64: 1>, scalar_prefetch = 0 : i64, scratch_operands = 0 : i64, tpu.core_type = #tpu.core_type<tc>, window_params = [{pipeline_mode = #tpu.pipeline_mode<synchronous>, transform_indices = @transform_0, window_bounds = array<i64: 50, 576>}, {pipeline_mode = #tpu.pipeline_mode<synchronous>, transform_indices = @transform_1, window_bounds = array<i64: 576, 64>}, {pipeline_mode = #tpu.pipeline_mode<synchronous>, transform_indices = @transform_2, window_bounds = array<i64: 1, 64>}, {pipeline_mode = #tpu.pipeline_mode<synchronous>, transform_indices = @transform_3, window_bounds = array<i64: 1, 64>}, {pipeline_mode = #tpu.pipeline_mode<synchronous>, transform_indices = @transform_4, window_bounds = array<i64: 1, 64>}, {pipeline_mode = #tpu.pipeline_mode<synchronous>, transform_indices = @transform_5, window_bounds = array<i64: 50, 64>}]} {
    %c0 = arith.constant 0 : index
    %c0_0 = arith.constant 0 : index
    %0 = vector.load %arg1[%c0, %c0_0] : memref<50x576xbf16, #tpu.memory_space<vmem>>, vector<50x576xbf16>
    %c0_1 = arith.constant 0 : index
    %c0_2 = arith.constant 0 : index
    %1 = vector.load %arg2[%c0_1, %c0_2] : memref<576x64xbf16, #tpu.memory_space<vmem>>, vector<576x64xbf16>
    %cst = arith.constant dense<0.000000e+00> : vector<50x64xf32>
    %2 = tpu.matmul %0, %1, %cst {dimension_numbers = #tpu.dot_dimension_numbers<[1], [0], [0], [1], [0, 0, 1, 1], [], []>} : vector<50x576xbf16>, vector<576x64xbf16>, vector<50x64xf32> -> vector<50x64xf32>
    %c0_3 = arith.constant 0 : index
    %c0_4 = arith.constant 0 : index
    %3 = vector.load %arg3[%c0_3, %c0_4] : memref<1x64xf32, #tpu.memory_space<vmem>>, vector<1x64xf32>
    %4 = vector.broadcast %3 : vector<1x64xf32> to vector<50x64xf32>
    %5 = arith.addf %2, %4 : vector<50x64xf32>
    %cst_5 = arith.constant 0.000000e+00 : f32
    %6 = vector.broadcast %cst_5 : f32 to vector<50x64xf32>
    %7 = arith.maximumf %5, %6 : vector<50x64xf32>
    %c0_6 = arith.constant 0 : index
    %c0_7 = arith.constant 0 : index
    %8 = vector.load %arg4[%c0_6, %c0_7] : memref<1x64xf32, #tpu.memory_space<vmem>>, vector<1x64xf32>
    %9 = vector.broadcast %8 : vector<1x64xf32> to vector<50x64xf32>
    %10 = arith.mulf %7, %9 : vector<50x64xf32>
    %c0_8 = arith.constant 0 : index
    %c0_9 = arith.constant 0 : index
    %11 = vector.load %arg5[%c0_8, %c0_9] : memref<1x64xf32, #tpu.memory_space<vmem>>, vector<1x64xf32>
    %12 = vector.broadcast %11 : vector<1x64xf32> to vector<50x64xf32>
    %13 = arith.addf %10, %12 : vector<50x64xf32>
    %14 = arith.truncf %13 : vector<50x64xf32> to vector<50x64xbf16>
    %c0_10 = arith.constant 0 : index
    %c0_11 = arith.constant 0 : index
    %15 = vector.load %arg6[%c0_10, %c0_11] : memref<50x64xbf16, #tpu.memory_space<vmem>>, vector<50x64xbf16>
    tpu.vector_store %arg6[%c0_10, %c0_11], %14 {strides = array<i32>} : memref<50x64xbf16, #tpu.memory_space<vmem>>, vector<50x64xbf16>,
    return
  }
  func.func @transform_0(%arg0: i32) -> (i32, i32) {
    %c0_i32 = arith.constant 0 : i32
    %c0_i32_0 = arith.constant 0 : i32
    %c0_i32_1 = arith.constant 0 : i32
    return %c0_i32, %c0_i32_0 : i32, i32
  }
  func.func @transform_1(%arg0: i32) -> (i32, i32) {
    %c0_i32 = arith.constant 0 : i32
    %c0_i32_0 = arith.constant 0 : i32
    %c0_i32_1 = arith.constant 0 : i32
    return %c0_i32, %c0_i32_0 : i32, i32
  }
  func.func @transform_2(%arg0: i32) -> (i32, i32) {
    %c0_i32 = arith.constant 0 : i32
    %c0_i32_0 = arith.constant 0 : i32
    %c0_i32_1 = arith.constant 0 : i32
    return %c0_i32, %c0_i32_0 : i32, i32
  }
  func.func @transform_3(%arg0: i32) -> (i32, i32) {
    %c0_i32 = arith.constant 0 : i32
    %c0_i32_0 = arith.constant 0 : i32
    %c0_i32_1 = arith.constant 0 : i32
    return %c0_i32, %c0_i32_0 : i32, i32
  }
  func.func @transform_4(%arg0: i32) -> (i32, i32) {
    %c0_i32 = arith.constant 0 : i32
    %c0_i32_0 = arith.constant 0 : i32
    %c0_i32_1 = arith.constant 0 : i32
    return %c0_i32, %c0_i32_0 : i32, i32
  }
  func.func @transform_5(%arg0: i32) -> (i32, i32) {
    %c0_i32 = arith.constant 0 : i32
    %c0_i32_0 = arith.constant 0 : i32
    %c0_i32_1 = arith.constant 0 : i32
    return %c0_i32, %c0_i32_0 : i32, i32
  }
}

module attributes {stable_mosaic.version = 11 : i64} {
  func.func @_fc_kernel(%arg0: i32, %arg1: memref<2x1600xbf16, #tpu.memory_space<vmem>>, %arg2: memref<1600x512xbf16, #tpu.memory_space<vmem>>, %arg3: memref<1x512xf32, #tpu.memory_space<vmem>>, %arg4: memref<512x2xbf16, #tpu.memory_space<vmem>>, %arg5: memref<1x2xf32, #tpu.memory_space<vmem>>, %arg6: memref<2x2xf32, #tpu.memory_space<vmem>>) attributes {dimension_semantics = [#tpu.dimension_semantics<arbitrary>], iteration_bounds = array<i64: 1>, scalar_prefetch = 0 : i64, scratch_operands = 0 : i64, tpu.core_type = #tpu.core_type<tc>, window_params = [{pipeline_mode = #tpu.pipeline_mode<synchronous>, transform_indices = @transform_0, window_bounds = array<i64: 2, 1600>}, {pipeline_mode = #tpu.pipeline_mode<synchronous>, transform_indices = @transform_1, window_bounds = array<i64: 1600, 512>}, {pipeline_mode = #tpu.pipeline_mode<synchronous>, transform_indices = @transform_2, window_bounds = array<i64: 1, 512>}, {pipeline_mode = #tpu.pipeline_mode<synchronous>, transform_indices = @transform_3, window_bounds = array<i64: 512, 2>}, {pipeline_mode = #tpu.pipeline_mode<synchronous>, transform_indices = @transform_4, window_bounds = array<i64: 1, 2>}, {pipeline_mode = #tpu.pipeline_mode<synchronous>, transform_indices = @transform_5, window_bounds = array<i64: 2, 2>}]} {
    %c0 = arith.constant 0 : index
    %c0_0 = arith.constant 0 : index
    %0 = vector.load %arg1[%c0, %c0_0] : memref<2x1600xbf16, #tpu.memory_space<vmem>>, vector<2x1600xbf16>
    %c0_1 = arith.constant 0 : index
    %c0_2 = arith.constant 0 : index
    %1 = vector.load %arg2[%c0_1, %c0_2] : memref<1600x512xbf16, #tpu.memory_space<vmem>>, vector<1600x512xbf16>
    %cst = arith.constant dense<0.000000e+00> : vector<2x512xf32>
    %2 = tpu.matmul %0, %1, %cst {dimension_numbers = #tpu.dot_dimension_numbers<[1], [0], [0], [1], [0, 0, 1, 1], [], []>} : vector<2x1600xbf16>, vector<1600x512xbf16>, vector<2x512xf32> -> vector<2x512xf32>
    %c0_3 = arith.constant 0 : index
    %c0_4 = arith.constant 0 : index
    %3 = vector.load %arg3[%c0_3, %c0_4] : memref<1x512xf32, #tpu.memory_space<vmem>>, vector<1x512xf32>
    %4 = vector.broadcast %3 : vector<1x512xf32> to vector<2x512xf32>
    %5 = arith.addf %2, %4 : vector<2x512xf32>
    %cst_5 = arith.constant 0.000000e+00 : f32
    %6 = vector.broadcast %cst_5 : f32 to vector<2x512xf32>
    %7 = arith.maximumf %5, %6 : vector<2x512xf32>
    %8 = arith.truncf %7 : vector<2x512xf32> to vector<2x512xbf16>
    %c0_6 = arith.constant 0 : index
    %c0_7 = arith.constant 0 : index
    %9 = vector.load %arg4[%c0_6, %c0_7] : memref<512x2xbf16, #tpu.memory_space<vmem>>, vector<512x2xbf16>
    %cst_8 = arith.constant dense<0.000000e+00> : vector<2x2xf32>
    %10 = tpu.matmul %8, %9, %cst_8 {dimension_numbers = #tpu.dot_dimension_numbers<[1], [0], [0], [1], [0, 0, 1, 1], [], []>} : vector<2x512xbf16>, vector<512x2xbf16>, vector<2x2xf32> -> vector<2x2xf32>
    %c0_9 = arith.constant 0 : index
    %c0_10 = arith.constant 0 : index
    %11 = vector.load %arg5[%c0_9, %c0_10] : memref<1x2xf32, #tpu.memory_space<vmem>>, vector<1x2xf32>
    %12 = vector.broadcast %11 : vector<1x2xf32> to vector<2x2xf32>
    %13 = arith.addf %10, %12 : vector<2x2xf32>
    %c0_11 = arith.constant 0 : index
    %c0_12 = arith.constant 0 : index
    %14 = vector.load %arg6[%c0_11, %c0_12] : memref<2x2xf32, #tpu.memory_space<vmem>>, vector<2x2xf32>
    tpu.vector_store %arg6[%c0_11, %c0_12], %13 {strides = array<i32>} : memref<2x2xf32, #tpu.memory_space<vmem>>, vector<2x2xf32>,
    return
  }
  func.func @transform_0(%arg0: i32) -> (i32, i32) {
    %c0_i32 = arith.constant 0 : i32
    %c0_i32_0 = arith.constant 0 : i32
    %c0_i32_1 = arith.constant 0 : i32
    return %c0_i32, %c0_i32_0 : i32, i32
  }
  func.func @transform_1(%arg0: i32) -> (i32, i32) {
    %c0_i32 = arith.constant 0 : i32
    %c0_i32_0 = arith.constant 0 : i32
    %c0_i32_1 = arith.constant 0 : i32
    return %c0_i32, %c0_i32_0 : i32, i32
  }
  func.func @transform_2(%arg0: i32) -> (i32, i32) {
    %c0_i32 = arith.constant 0 : i32
    %c0_i32_0 = arith.constant 0 : i32
    %c0_i32_1 = arith.constant 0 : i32
    return %c0_i32, %c0_i32_0 : i32, i32
  }
  func.func @transform_3(%arg0: i32) -> (i32, i32) {
    %c0_i32 = arith.constant 0 : i32
    %c0_i32_0 = arith.constant 0 : i32
    %c0_i32_1 = arith.constant 0 : i32
    return %c0_i32, %c0_i32_0 : i32, i32
  }
  func.func @transform_4(%arg0: i32) -> (i32, i32) {
    %c0_i32 = arith.constant 0 : i32
    %c0_i32_0 = arith.constant 0 : i32
    %c0_i32_1 = arith.constant 0 : i32
    return %c0_i32, %c0_i32_0 : i32, i32
  }
  func.func @transform_5(%arg0: i32) -> (i32, i32) {
    %c0_i32 = arith.constant 0 : i32
    %c0_i32_0 = arith.constant 0 : i32
    %c0_i32_1 = arith.constant 0 : i32
    return %c0_i32, %c0_i32_0 : i32, i32
  }
}

</mosaic_0001>

<llo_original>
// kernel: dqn_forward.4
$region0: #{dqn_forward.4}
  #allocation0 [shape = 'u32[]', space=smem, size = 0x4, offset = 0x4, fixed_abs, tag = 'smem constant byte address 0x4 - core index']
  #allocation1 [shape = 'u32[144,128]{1,0:T(1,128)}', space=vmem, size = 0x12000, scoped, tag = 'internal scratch']
  %s0 = inlined_call_operand.vmem [shape: bf16[4,200,256], index: 0, kind: input, shape index: {}]
  %s1 = inlined_call_operand.vmem [shape: bf16[256,32], index: 1, kind: input, shape index: {}]
  %s2 = inlined_call_operand.vmem [shape: f32[1,32], index: 2, kind: input, shape index: {}]
  %s3 = inlined_call_operand.vmem [shape: f32[1,32], index: 3, kind: input, shape index: {}]
  %s4 = inlined_call_operand.vmem [shape: f32[1,32], index: 4, kind: input, shape index: {}]
  %s5 = inlined_call_operand.vmem [shape: bf16[200,32], index: 5, kind: output, shape index: {}]
  %s6 = sld [smem:[#allocation0]]
  $region30: #{dqn_forward.4} parent=0
    _
  %s8 = ssub.s32 1, %s6
  %s9 = scalar_select 0, %s8, %s6
  // Predicated region
  $region2: #{dqn_forward.4} parent=0 // pred_check
    _
  $region3: #{dqn_forward.4} parent=0 // pred_check_branch
    %11 = sbr.rel (0) target = $region5
  $region4: #{dqn_forward.4} parent=0 // pred_region
    _
  $region5: #{dqn_forward.4} parent=0 // pred_fallthru
    _
  // Predicated region
  $region6: #{dqn_forward.4} parent=0 // pred_check
    _
  $region7: #{dqn_forward.4} parent=0 // pred_check_branch
    %13 = sbr.rel (0) target = $region9
  $region8: #{dqn_forward.4} parent=0 // pred_region
    _
  $region9: #{dqn_forward.4} parent=0 // pred_fallthru
    _
  // Predicated region
  $region10: #{dqn_forward.4} parent=0 // pred_check
    _
  $region11: #{dqn_forward.4} parent=0 // pred_check_branch
    %15 = sbr.rel (0) target = $region13
  $region12: #{dqn_forward.4} parent=0 // pred_region
    _
  $region13: #{dqn_forward.4} parent=0 // pred_fallthru
    _
  // Predicated region
  $region14: #{dqn_forward.4} parent=0 // pred_check
    _
  $region15: #{dqn_forward.4} parent=0 // pred_check_branch
    %17 = sbr.rel (0) target = $region17
  $region16: #{dqn_forward.4} parent=0 // pred_region
    _
  $region17: #{dqn_forward.4} parent=0 // pred_fallthru
    _
  // Predicated region
  $region18: #{dqn_forward.4} parent=0 // pred_check
    _
  $region19: #{dqn_forward.4} parent=0 // pred_check_branch
    %19 = sbr.rel (0) target = $region21
  $region20: #{dqn_forward.4} parent=0 // pred_region
    _
  $region21: #{dqn_forward.4} parent=0 // pred_fallthru
    _
  %v21 = vld [vmem:[%s0] sm:$0xff]
  %v22 = vld [vmem:[%s0 + $0x8] sm:$0xff]
  %v23 = vld [vmem:[%s0 + $0x10] sm:$0xff]
  %v24 = vld [vmem:[%s0 + $0x18] sm:$0xff]
  %v25 = vld [vmem:[%s0 + $0x20] sm:$0xff]
  %v26 = vld [vmem:[%s0 + $0x28] sm:$0xff]
  %v27 = vld [vmem:[%s0 + $0x30] sm:$0xff]
  %v28 = vld [vmem:[%s0 + $0x38] sm:$0xff]
  %v29 = vld [vmem:[%s0 + $0x40] sm:$0xff]
  %v30 = vld [vmem:[%s0 + $0x48] sm:$0xff]
  %v31 = vld [vmem:[%s0 + $0x50] sm:$0xff]
  %v32 = vld [vmem:[%s0 + $0x58] sm:$0xff]
  %v33 = vld [vmem:[%s0 + $0x60] sm:$0xff]
  %v34 = vld [vmem:[%s0 + $0x68] sm:$0xff]
  %v35 = vld [vmem:[%s0 + $0x70] sm:$0xff]
  %v36 = vld [vmem:[%s0 + $0x78] sm:$0xff]
  %v37 = vld [vmem:[%s0 + $0x80] sm:$0xff]
  %v38 = vld [vmem:[%s0 + $0x88] sm:$0xff]
  %v39 = vld [vmem:[%s0 + $0x90] sm:$0xff]
  %v40 = vld [vmem:[%s0 + $0x98] sm:$0xff]
  %v41 = vld [vmem:[%s0 + $0xa0] sm:$0xff]
  %v42 = vld [vmem:[%s0 + $0xa8] sm:$0xff]
  %v43 = vld [vmem:[%s0 + $0xb0] sm:$0xff]
  %v44 = vld [vmem:[%s0 + $0xb8] sm:$0xff]
  %v45 = vld [vmem:[%s0 + $0xc0] sm:$0xff]
  %v46 = vld [vmem:[%s1] sm:$0xf]
  %v47 = vld [vmem:[%s1 + $0x4] sm:$0xf]
  %v48 = vld [vmem:[%s1 + $0x8] sm:$0xf]
  %v49 = vld [vmem:[%s1 + $0xc] sm:$0xf]
  %v50 = vld [vmem:[%s1 + $0x10] sm:$0xf]
  %v51 = vld [vmem:[%s1 + $0x14] sm:$0xf]
  %v52 = vld [vmem:[%s1 + $0x18] sm:$0xf]
  %v53 = vld [vmem:[%s1 + $0x1c] sm:$0xf]
  %v54 = vld [vmem:[%s1 + $0x20] sm:$0xf]
  %v55 = vld [vmem:[%s1 + $0x24] sm:$0xf]
  %v56 = vld [vmem:[%s1 + $0x28] sm:$0xf]
  %v57 = vld [vmem:[%s1 + $0x2c] sm:$0xf]
  %v58 = vld [vmem:[%s1 + $0x30] sm:$0xf]
  %v59 = vld [vmem:[%s1 + $0x34] sm:$0xf]
  %v60 = vld [vmem:[%s1 + $0x38] sm:$0xf]
  %v61 = vld [vmem:[%s1 + $0x3c] sm:$0xf]
  %v62 = vld [vmem:[%s1 + $0x40] sm:$0xf]
  %v63 = vld [vmem:[%s1 + $0x44] sm:$0xf]
  %v64 = vld [vmem:[%s1 + $0x48] sm:$0xf]
  %v65 = vld [vmem:[%s1 + $0x4c] sm:$0xf]
  %v66 = vld [vmem:[%s1 + $0x50] sm:$0xf]
  %v67 = vld [vmem:[%s1 + $0x54] sm:$0xf]
  %v68 = vld [vmem:[%s1 + $0x58] sm:$0xf]
  %v69 = vld [vmem:[%s1 + $0x5c] sm:$0xf]
  %v70 = vld [vmem:[%s1 + $0x60] sm:$0xf]
  %v71 = vld [vmem:[%s1 + $0x64] sm:$0xf]
  %v72 = vld [vmem:[%s1 + $0x68] sm:$0xf]
  %v73 = vld [vmem:[%s1 + $0x6c] sm:$0xf]
  %v74 = vld [vmem:[%s1 + $0x70] sm:$0xf]
  %v75 = vld [vmem:[%s1 + $0x74] sm:$0xf]
  %v76 = vld [vmem:[%s1 + $0x78] sm:$0xf]
  %v77 = vld [vmem:[%s1 + $0x7c] sm:$0xf]
  %v103 = vunpack.c.l.b16 %v21
  %v104 = vunpack.c.h.b16 %v21
  %v105 = vunpack.c.l.b16 %v22
  %v106 = vunpack.c.h.b16 %v22
  %v107 = vunpack.c.l.b16 %v23
  %v108 = vunpack.c.h.b16 %v23
  %v109 = vunpack.c.l.b16 %v24
  %v110 = vunpack.c.h.b16 %v24
  %v111 = vunpack.c.l.b16 %v25
  %v112 = vunpack.c.h.b16 %v25
  %v113 = vunpack.c.l.b16 %v26
  %v114 = vunpack.c.h.b16 %v26
  %v115 = vunpack.c.l.b16 %v27
  %v116 = vunpack.c.h.b16 %v27
  %v117 = vunpack.c.l.b16 %v28
  %v118 = vunpack.c.h.b16 %v28
  %v119 = vunpack.c.l.b16 %v29
  %v120 = vunpack.c.h.b16 %v29
  %v121 = vunpack.c.l.b16 %v30
  %v122 = vunpack.c.h.b16 %v30
  %v123 = vunpack.c.l.b16 %v31
  %v124 = vunpack.c.h.b16 %v31
  %v125 = vunpack.c.l.b16 %v32
  %v126 = vunpack.c.h.b16 %v32
  %v127 = vunpack.c.l.b16 %v33
  %v128 = vunpack.c.h.b16 %v33
  %v129 = vunpack.c.l.b16 %v34
  %v130 = vunpack.c.h.b16 %v34
  %v131 = vunpack.c.l.b16 %v35
  %v132 = vunpack.c.h.b16 %v35
  %v133 = vunpack.c.l.b16 %v36
  %v134 = vunpack.c.h.b16 %v36
  %v135 = vunpack.c.l.b16 %v37
  %v136 = vunpack.c.h.b16 %v37
  %v137 = vunpack.c.l.b16 %v38
  %v138 = vunpack.c.h.b16 %v38
  %v139 = vunpack.c.l.b16 %v39
  %v140 = vunpack.c.h.b16 %v39
  %v141 = vunpack.c.l.b16 %v40
  %v142 = vunpack.c.h.b16 %v40
  %v143 = vunpack.c.l.b16 %v41
  %v144 = vunpack.c.h.b16 %v41
  %v145 = vunpack.c.l.b16 %v42
  %v146 = vunpack.c.h.b16 %v42
  %v147 = vunpack.c.l.b16 %v43
  %v148 = vunpack.c.h.b16 %v43
  %v149 = vunpack.c.l.b16 %v44
  %v150 = vunpack.c.h.b16 %v44
  %v151 = vunpack.c.l.b16 %v45
  %v152 = vunpack.c.h.b16 %v45
  %v153 = vpack.c.b16 %v105, %v103
  %v154 = vpack.c.b16 %v106, %v104
  %v155 = vpack.c.b16 %v109, %v107
  %v156 = vpack.c.b16 %v110, %v108
  %v157 = vpack.c.b16 %v113, %v111
  %v158 = vpack.c.b16 %v114, %v112
  %v159 = vpack.c.b16 %v117, %v115
  %v160 = vpack.c.b16 %v118, %v116
  %v161 = vpack.c.b16 %v121, %v119
  %v162 = vpack.c.b16 %v122, %v120
  %v163 = vpack.c.b16 %v125, %v123
  %v164 = vpack.c.b16 %v126, %v124
  %v165 = vpack.c.b16 %v129, %v127
  %v166 = vpack.c.b16 %v130, %v128
  %v167 = vpack.c.b16 %v133, %v131
  %v168 = vpack.c.b16 %v134, %v132
  %v169 = vpack.c.b16 %v137, %v135
  %v170 = vpack.c.b16 %v138, %v136
  %v171 = vpack.c.b16 %v141, %v139
  %v172 = vpack.c.b16 %v142, %v140
  %v173 = vpack.c.b16 %v145, %v143
  %v174 = vpack.c.b16 %v146, %v144
  %v175 = vpack.c.b16 %v149, %v147
  %v176 = vpack.c.b16 %v150, %v148
  %v177 = vpack.c.b16 %v151, %v151
  %v178 = vpack.c.b16 %v152, %v152
  %v237 = vunpack.c.l.b16 %v46
  %v238 = vunpack.c.l.b16 %v47
  %v239 = vunpack.c.l.b16 %v48
  %v240 = vunpack.c.l.b16 %v49
  %v241 = vunpack.c.l.b16 %v50
  %v242 = vunpack.c.l.b16 %v51
  %v243 = vunpack.c.l.b16 %v52
  %v244 = vunpack.c.l.b16 %v53
  %v245 = vunpack.c.l.b16 %v54
  %v246 = vunpack.c.l.b16 %v55
  %v247 = vunpack.c.l.b16 %v56
  %v248 = vunpack.c.l.b16 %v57
  %v249 = vunpack.c.l.b16 %v58
  %v250 = vunpack.c.l.b16 %v59
  %v251 = vunpack.c.l.b16 %v60
  %v252 = vunpack.c.l.b16 %v61
  %v253 = vunpack.c.l.b16 %v62
  %v254 = vunpack.c.l.b16 %v63
  %v255 = vunpack.c.l.b16 %v64
  %v256 = vunpack.c.l.b16 %v65
  %v257 = vunpack.c.l.b16 %v66
  %v258 = vunpack.c.l.b16 %v67
  %v259 = vunpack.c.l.b16 %v68
  %v260 = vunpack.c.l.b16 %v69
  %v261 = vunpack.c.l.b16 %v70
  %v262 = vunpack.c.l.b16 %v71
  %v263 = vunpack.c.l.b16 %v72
  %v264 = vunpack.c.l.b16 %v73
  %v265 = vunpack.c.l.b16 %v74
  %v266 = vunpack.c.l.b16 %v75
  %v267 = vunpack.c.l.b16 %v76
  %v268 = vunpack.c.l.b16 %v77
  %v269 = vpack.c.b16 %v238, %v237
  %v270 = vpack.c.b16 %v240, %v239
  %v271 = vpack.c.b16 %v242, %v241
  %v272 = vpack.c.b16 %v244, %v243
  %v273 = vpack.c.b16 %v246, %v245
  %v274 = vpack.c.b16 %v248, %v247
  %v275 = vpack.c.b16 %v250, %v249
  %v276 = vpack.c.b16 %v252, %v251
  %v277 = vpack.c.b16 %v254, %v253
  %v278 = vpack.c.b16 %v256, %v255
  %v279 = vpack.c.b16 %v258, %v257
  %v280 = vpack.c.b16 %v260, %v259
  %v281 = vpack.c.b16 %v262, %v261
  %v282 = vpack.c.b16 %v264, %v263
  %v283 = vpack.c.b16 %v266, %v265
  %v284 = vpack.c.b16 %v268, %v267
  %301 = vmatprep.subr.bf16.mxu0 0
  %302 = vmatpush1.bf16.msra.mxu0 %v269
  %303 = vmatprep.subr.bf16.mxu0 0
  %304 = vmatpush1.bf16.msra.mxu0 %v270
  %305 = vmatprep.subr.bf16.mxu0 0
  %306 = vmatpush1.bf16.msra.mxu0 %v271
  %307 = vmatprep.subr.bf16.mxu0 0
  %308 = vmatpush1.bf16.msra.mxu0 %v272
  %309 = vmatprep.subr.bf16.mxu0 0
  %310 = vmatpush1.bf16.msra.mxu0 %v273
  %311 = vmatprep.subr.bf16.mxu0 0
  %312 = vmatpush1.bf16.msra.mxu0 %v274
  %313 = vmatprep.subr.bf16.mxu0 0
  %314 = vmatpush1.bf16.msra.mxu0 %v275
  %315 = vmatprep.subr.bf16.mxu0 0
  %316 = vmatpush1.bf16.msra.mxu0 %v276
  %317 = vmatprep.subr.bf16.mxu0 0
  %318 = vmatpush1.bf16.msra.mxu0 %v277
  %319 = vmatprep.subr.bf16.mxu0 0
  %320 = vmatpush1.bf16.msra.mxu0 %v278
  %321 = vmatprep.subr.bf16.mxu0 0
  %322 = vmatpush1.bf16.msra.mxu0 %v279
  %323 = vmatprep.subr.bf16.mxu0 0
  %324 = vmatpush1.bf16.msra.mxu0 %v280
  %325 = vmatprep.subr.bf16.mxu0 0
  %326 = vmatpush1.bf16.msra.mxu0 %v281
  %327 = vmatprep.subr.bf16.mxu0 0
  %328 = vmatpush1.bf16.msra.mxu0 %v282
  %329 = vmatprep.subr.bf16.mxu0 0
  %330 = vmatpush1.bf16.msra.mxu0 %v283
  %331 = vmatprep.subr.bf16.mxu0 0
  %332 = vmatpush1.bf16.msra.mxu0 %v284
  %333 = vmatprep.mubr.bf16.mxu0 %v154
  %334 = vmatmul.mubr.bf16.gmra.mrb[0].mxu0 %v153
  %v335 = vpop.f32.mrb[0].mxu0
  %v336 = vadd.f32 0.0, %v335
  %v337 = vpop.f32.mrb[0].mxu0
  %v338 = vpop.f32.mrb[0].mxu0
  %v339 = vadd.f32 0.0, %v338
  %v340 = vpop.f32.mrb[0].mxu0
  %341 = vmatprep.mubr.bf16.mxu0 %v156
  %342 = vmatmul.mubr.bf16.gmra.mrb[0].mxu0 %v155
  %v343 = vpop.f32.mrb[0].mxu0
  %v344 = vadd.f32 0.0, %v343
  %v345 = vpop.f32.mrb[0].mxu0
  %v346 = vpop.f32.mrb[0].mxu0
  %v347 = vadd.f32 0.0, %v346
  %v348 = vpop.f32.mrb[0].mxu0
  %349 = vmatprep.mubr.bf16.mxu0 %v158
  %350 = vmatmul.mubr.bf16.gmra.mrb[0].mxu0 %v157
  %v351 = vpop.f32.mrb[0].mxu0
  %v352 = vadd.f32 0.0, %v351
  %v353 = vpop.f32.mrb[0].mxu0
  %v354 = vpop.f32.mrb[0].mxu0
  %v355 = vadd.f32 0.0, %v354
  %v356 = vpop.f32.mrb[0].mxu0
  %357 = vmatprep.mubr.bf16.mxu0 %v160
  %358 = vmatmul.mubr.bf16.gmra.mrb[0].mxu0 %v159
  %v359 = vpop.f32.mrb[0].mxu0
  %v360 = vadd.f32 0.0, %v359
  %v361 = vpop.f32.mrb[0].mxu0
  %v362 = vpop.f32.mrb[0].mxu0
  %v363 = vadd.f32 0.0, %v362
  %v364 = vpop.f32.mrb[0].mxu0
  %365 = vmatprep.mubr.bf16.mxu0 %v162
  %366 = vmatmul.mubr.bf16.gmra.mrb[0].mxu0 %v161
  %v367 = vpop.f32.mrb[0].mxu0
  %v368 = vadd.f32 0.0, %v367
  %v369 = vpop.f32.mrb[0].mxu0
  %v370 = vpop.f32.mrb[0].mxu0
  %v371 = vadd.f32 0.0, %v370
  %v372 = vpop.f32.mrb[0].mxu0
  %373 = vmatprep.mubr.bf16.mxu0 %v164
  %374 = vmatmul.mubr.bf16.gmra.mrb[0].mxu0 %v163
  %v375 = vpop.f32.mrb[0].mxu0
  %v376 = vadd.f32 0.0, %v375
  %v377 = vpop.f32.mrb[0].mxu0
  %v378 = vpop.f32.mrb[0].mxu0
  %v379 = vadd.f32 0.0, %v378
  %v380 = vpop.f32.mrb[0].mxu0
  %381 = vmatprep.mubr.bf16.mxu0 %v166
  %382 = vmatmul.mubr.bf16.gmra.mrb[0].mxu0 %v165
  %v383 = vpop.f32.mrb[0].mxu0
  %v384 = vadd.f32 0.0, %v383
  %v385 = vpop.f32.mrb[0].mxu0
  %v386 = vpop.f32.mrb[0].mxu0
  %v387 = vadd.f32 0.0, %v386
  %v388 = vpop.f32.mrb[0].mxu0
  %389 = vmatprep.mubr.bf16.mxu0 %v168
  %390 = vmatmul.mubr.bf16.gmra.mrb[0].mxu0 %v167
  %v391 = vpop.f32.mrb[0].mxu0
  %v392 = vadd.f32 0.0, %v391
  %v393 = vpop.f32.mrb[0].mxu0
  %v394 = vpop.f32.mrb[0].mxu0
  %v395 = vadd.f32 0.0, %v394
  %v396 = vpop.f32.mrb[0].mxu0
  %397 = vmatprep.mubr.bf16.mxu0 %v170
  %398 = vmatmul.mubr.bf16.gmra.mrb[0].mxu0 %v169
  %v399 = vpop.f32.mrb[0].mxu0
  %v400 = vadd.f32 0.0, %v399
  %v401 = vpop.f32.mrb[0].mxu0
  %v402 = vpop.f32.mrb[0].mxu0
  %v403 = vadd.f32 0.0, %v402
  %v404 = vpop.f32.mrb[0].mxu0
  %405 = vmatprep.mubr.bf16.mxu0 %v172
  %406 = vmatmul.mubr.bf16.gmra.mrb[0].mxu0 %v171
  %v407 = vpop.f32.mrb[0].mxu0
  %v408 = vadd.f32 0.0, %v407
  %v409 = vpop.f32.mrb[0].mxu0
  %v410 = vpop.f32.mrb[0].mxu0
  %v411 = vadd.f32 0.0, %v410
  %v412 = vpop.f32.mrb[0].mxu0
  %413 = vmatprep.mubr.bf16.mxu0 %v174
  %414 = vmatmul.mubr.bf16.gmra.mrb[0].mxu0 %v173
  %v415 = vpop.f32.mrb[0].mxu0
  %v416 = vadd.f32 0.0, %v415
  %v417 = vpop.f32.mrb[0].mxu0
  %v418 = vpop.f32.mrb[0].mxu0
  %v419 = vadd.f32 0.0, %v418
  %v420 = vpop.f32.mrb[0].mxu0
  %421 = vmatprep.mubr.bf16.mxu0 %v176
  %422 = vmatmul.mubr.bf16.gmra.mrb[0].mxu0 %v175
  %v423 = vpop.f32.mrb[0].mxu0
  %v424 = vadd.f32 0.0, %v423
  %v425 = vpop.f32.mrb[0].mxu0
  %v426 = vpop.f32.mrb[0].mxu0
  %v427 = vadd.f32 0.0, %v426
  %v428 = vpop.f32.mrb[0].mxu0
  %429 = vmatprep.mubr.bf16.mxu0 %v178
  %430 = vmatmul.mubr.bf16.gmra.mrb[0].mxu0 %v177
  %v431 = vpop.f32.mrb[0].mxu0
  %v432 = vadd.f32 0.0, %v431
  %v433 = vpop.f32.mrb[0].mxu0
  %v434 = vpop.f32.mrb[0].mxu0
  %v435 = vpop.f32.mrb[0].mxu0
  %436 = vdwg.mxu0
  %s437 = scalar_lea.vmem %s0, 200
  %v438 = vld [vmem:[%s437] sm:$0xff]
  %v439 = vld [vmem:[%s437 + $0x8] sm:$0xff]
  %v440 = vld [vmem:[%s437 + $0x10] sm:$0xff]
  %v441 = vld [vmem:[%s437 + $0x18] sm:$0xff]
  %v442 = vld [vmem:[%s437 + $0x20] sm:$0xff]
  %v443 = vld [vmem:[%s437 + $0x28] sm:$0xff]
  %v444 = vld [vmem:[%s437 + $0x30] sm:$0xff]
  %v445 = vld [vmem:[%s437 + $0x38] sm:$0xff]
  %v446 = vld [vmem:[%s437 + $0x40] sm:$0xff]
  %v447 = vld [vmem:[%s437 + $0x48] sm:$0xff]
  %v448 = vld [vmem:[%s437 + $0x50] sm:$0xff]
  %v449 = vld [vmem:[%s437 + $0x58] sm:$0xff]
  %v450 = vld [vmem:[%s437 + $0x60] sm:$0xff]
  %v451 = vld [vmem:[%s437 + $0x68] sm:$0xff]
  %v452 = vld [vmem:[%s437 + $0x70] sm:$0xff]
  %v453 = vld [vmem:[%s437 + $0x78] sm:$0xff]
  %v454 = vld [vmem:[%s437 + $0x80] sm:$0xff]
  %v455 = vld [vmem:[%s437 + $0x88] sm:$0xff]
  %v456 = vld [vmem:[%s437 + $0x90] sm:$0xff]
  %v457 = vld [vmem:[%s437 + $0x98] sm:$0xff]
  %v458 = vld [vmem:[%s437 + $0xa0] sm:$0xff]
  %v459 = vld [vmem:[%s437 + $0xa8] sm:$0xff]
  %v460 = vld [vmem:[%s437 + $0xb0] sm:$0xff]
  %v461 = vld [vmem:[%s437 + $0xb8] sm:$0xff]
  %v462 = vld [vmem:[%s437 + $0xc0] sm:$0xff]
  %v488 = vunpack.c.l.b16 %v438
  %v489 = vunpack.c.h.b16 %v438
  %v490 = vunpack.c.l.b16 %v439
  %v491 = vunpack.c.h.b16 %v439
  %v492 = vunpack.c.l.b16 %v440
  %v493 = vunpack.c.h.b16 %v440
  %v494 = vunpack.c.l.b16 %v441
  %v495 = vunpack.c.h.b16 %v441
  %v496 = vunpack.c.l.b16 %v442
  %v497 = vunpack.c.h.b16 %v442
  %v498 = vunpack.c.l.b16 %v443
  %v499 = vunpack.c.h.b16 %v443
  %v500 = vunpack.c.l.b16 %v444
  %v501 = vunpack.c.h.b16 %v444
  %v502 = vunpack.c.l.b16 %v445
  %v503 = vunpack.c.h.b16 %v445
  %v504 = vunpack.c.l.b16 %v446
  %v505 = vunpack.c.h.b16 %v446
  %v506 = vunpack.c.l.b16 %v447
  %v507 = vunpack.c.h.b16 %v447
  %v508 = vunpack.c.l.b16 %v448
  %v509 = vunpack.c.h.b16 %v448
  %v510 = vunpack.c.l.b16 %v449
  %v511 = vunpack.c.h.b16 %v449
  %v512 = vunpack.c.l.b16 %v450
  %v513 = vunpack.c.h.b16 %v450
  %v514 = vunpack.c.l.b16 %v451
  %v515 = vunpack.c.h.b16 %v451
  %v516 = vunpack.c.l.b16 %v452
  %v517 = vunpack.c.h.b16 %v452
  %v518 = vunpack.c.l.b16 %v453
  %v519 = vunpack.c.h.b16 %v453
  %v520 = vunpack.c.l.b16 %v454
  %v521 = vunpack.c.h.b16 %v454
  %v522 = vunpack.c.l.b16 %v455
  %v523 = vunpack.c.h.b16 %v455
  %v524 = vunpack.c.l.b16 %v456
  %v525 = vunpack.c.h.b16 %v456
  %v526 = vunpack.c.l.b16 %v457
  %v527 = vunpack.c.h.b16 %v457
  %v528 = vunpack.c.l.b16 %v458
  %v529 = vunpack.c.h.b16 %v458
  %v530 = vunpack.c.l.b16 %v459
  %v531 = vunpack.c.h.b16 %v459
  %v532 = vunpack.c.l.b16 %v460
  %v533 = vunpack.c.h.b16 %v460
  %v534 = vunpack.c.l.b16 %v461
  %v535 = vunpack.c.h.b16 %v461
  %v536 = vunpack.c.l.b16 %v462
  %v537 = vunpack.c.h.b16 %v462
  %v538 = vpack.c.b16 %v490, %v488
  %v539 = vpack.c.b16 %v491, %v489
  %v540 = vpack.c.b16 %v494, %v492
  %v541 = vpack.c.b16 %v495, %v493
  %v542 = vpack.c.b16 %v498, %v496
  %v543 = vpack.c.b16 %v499, %v497
  %v544 = vpack.c.b16 %v502, %v500
  %v545 = vpack.c.b16 %v503, %v501
  %v546 = vpack.c.b16 %v506, %v504
  %v547 = vpack.c.b16 %v507, %v505
  %v548 = vpack.c.b16 %v510, %v508
  %v549 = vpack.c.b16 %v511, %v509
  %v550 = vpack.c.b16 %v514, %v512
  %v551 = vpack.c.b16 %v515, %v513
  %v552 = vpack.c.b16 %v518, %v516
  %v553 = vpack.c.b16 %v519, %v517
  %v554 = vpack.c.b16 %v522, %v520
  %v555 = vpack.c.b16 %v523, %v521
  %v556 = vpack.c.b16 %v526, %v524
  %v557 = vpack.c.b16 %v527, %v525
  %v558 = vpack.c.b16 %v530, %v528
  %v559 = vpack.c.b16 %v531, %v529
  %v560 = vpack.c.b16 %v534, %v532
  %v561 = vpack.c.b16 %v535, %v533
  %v562 = vpack.c.b16 %v536, %v536
  %v563 = vpack.c.b16 %v537, %v537
  %590 = vmatprep.subr.bf16.mxu0 0
  %591 = vmatpush1.bf16.msra.mxu0 %v269
  %592 = vmatprep.subr.bf16.mxu0 0
  %593 = vmatpush1.bf16.msra.mxu0 %v270
  %594 = vmatprep.subr.bf16.mxu0 0
  %595 = vmatpush1.bf16.msra.mxu0 %v271
  %596 = vmatprep.subr.bf16.mxu0 0
  %597 = vmatpush1.bf16.msra.mxu0 %v272
  %598 = vmatprep.subr.bf16.mxu0 0
  %599 = vmatpush1.bf16.msra.mxu0 %v273
  %600 = vmatprep.subr.bf16.mxu0 0
  %601 = vmatpush1.bf16.msra.mxu0 %v274
  %602 = vmatprep.subr.bf16.mxu0 0
  %603 = vmatpush1.bf16.msra.mxu0 %v275
  %604 = vmatprep.subr.bf16.mxu0 0
  %605 = vmatpush1.bf16.msra.mxu0 %v276
  %606 = vmatprep.subr.bf16.mxu0 0
  %607 = vmatpush1.bf16.msra.mxu0 %v277
  %608 = vmatprep.subr.bf16.mxu0 0
  %609 = vmatpush1.bf16.msra.mxu0 %v278
  %610 = vmatprep.subr.bf16.mxu0 0
  %611 = vmatpush1.bf16.msra.mxu0 %v279
  %612 = vmatprep.subr.bf16.mxu0 0
  %613 = vmatpush1.bf16.msra.mxu0 %v280
  %614 = vmatprep.subr.bf16.mxu0 0
  %615 = vmatpush1.bf16.msra.mxu0 %v281
  %616 = vmatprep.subr.bf16.mxu0 0
  %617 = vmatpush1.bf16.msra.mxu0 %v282
  %618 = vmatprep.subr.bf16.mxu0 0
  %619 = vmatpush1.bf16.msra.mxu0 %v283
  %620 = vmatprep.subr.bf16.mxu0 0
  %621 = vmatpush1.bf16.msra.mxu0 %v284
  %622 = vmatprep.mubr.bf16.mxu0 %v539
  %623 = vmatmul.mubr.bf16.gmra.mrb[0].mxu0 %v538
  %v624 = vpop.f32.mrb[0].mxu0
  %v625 = vadd.f32 0.0, %v624
  %v626 = vpop.f32.mrb[0].mxu0
  %v627 = vpop.f32.mrb[0].mxu0
  %v628 = vadd.f32 0.0, %v627
  %v629 = vpop.f32.mrb[0].mxu0
  %630 = vmatprep.mubr.bf16.mxu0 %v541
  %631 = vmatmul.mubr.bf16.gmra.mrb[0].mxu0 %v540
  %v632 = vpop.f32.mrb[0].mxu0
  %v633 = vadd.f32 0.0, %v632
  %v634 = vpop.f32.mrb[0].mxu0
  %v635 = vpop.f32.mrb[0].mxu0
  %v636 = vadd.f32 0.0, %v635
  %v637 = vpop.f32.mrb[0].mxu0
  %638 = vmatprep.mubr.bf16.mxu0 %v543
  %639 = vmatmul.mubr.bf16.gmra.mrb[0].mxu0 %v542
  %v640 = vpop.f32.mrb[0].mxu0
  %v641 = vadd.f32 0.0, %v640
  %v642 = vpop.f32.mrb[0].mxu0
  %v643 = vpop.f32.mrb[0].mxu0
  %v644 = vadd.f32 0.0, %v643
  %v645 = vpop.f32.mrb[0].mxu0
  %646 = vmatprep.mubr.bf16.mxu0 %v545
  %647 = vmatmul.mubr.bf16.gmra.mrb[0].mxu0 %v544
  %v648 = vpop.f32.mrb[0].mxu0
  %v649 = vadd.f32 0.0, %v648
  %v650 = vpop.f32.mrb[0].mxu0
  %v651 = vpop.f32.mrb[0].mxu0
  %v652 = vadd.f32 0.0, %v651
  %v653 = vpop.f32.mrb[0].mxu0
  %654 = vmatprep.mubr.bf16.mxu0 %v547
  %655 = vmatmul.mubr.bf16.gmra.mrb[0].mxu0 %v546
  %v656 = vpop.f32.mrb[0].mxu0
  %v657 = vadd.f32 0.0, %v656
  %v658 = vpop.f32.mrb[0].mxu0
  %v659 = vpop.f32.mrb[0].mxu0
  %v660 = vadd.f32 0.0, %v659
  %v661 = vpop.f32.mrb[0].mxu0
  %662 = vmatprep.mubr.bf16.mxu0 %v549
  %663 = vmatmul.mubr.bf16.gmra.mrb[0].mxu0 %v548
  %v664 = vpop.f32.mrb[0].mxu0
  %v665 = vadd.f32 0.0, %v664
  %v666 = vpop.f32.mrb[0].mxu0
  %v667 = vpop.f32.mrb[0].mxu0
  %v668 = vadd.f32 0.0, %v667
  %v669 = vpop.f32.mrb[0].mxu0
  %670 = vmatprep.mubr.bf16.mxu0 %v551
  %671 = vmatmul.mubr.bf16.gmra.mrb[0].mxu0 %v550
  %v672 = vpop.f32.mrb[0].mxu0
  %v673 = vadd.f32 0.0, %v672
  %v674 = vpop.f32.mrb[0].mxu0
  %v675 = vpop.f32.mrb[0].mxu0
  %v676 = vadd.f32 0.0, %v675
  %v677 = vpop.f32.mrb[0].mxu0
  %678 = vmatprep.mubr.bf16.mxu0 %v553
  %679 = vmatmul.mubr.bf16.gmra.mrb[0].mxu0 %v552
  %v680 = vpop.f32.mrb[0].mxu0
  %v681 = vadd.f32 0.0, %v680
  %v682 = vpop.f32.mrb[0].mxu0
  %v683 = vpop.f32.mrb[0].mxu0
  %v684 = vadd.f32 0.0, %v683
  %v685 = vpop.f32.mrb[0].mxu0
  %686 = vmatprep.mubr.bf16.mxu0 %v555
  %687 = vmatmul.mubr.bf16.gmra.mrb[0].mxu0 %v554
  %v688 = vpop.f32.mrb[0].mxu0
  %v689 = vadd.f32 0.0, %v688
  %v690 = vpop.f32.mrb[0].mxu0
  %v691 = vpop.f32.mrb[0].mxu0
  %v692 = vadd.f32 0.0, %v691
  %v693 = vpop.f32.mrb[0].mxu0
  %694 = vmatprep.mubr.bf16.mxu0 %v557
  %695 = vmatmul.mubr.bf16.gmra.mrb[0].mxu0 %v556
  %v696 = vpop.f32.mrb[0].mxu0
  %v697 = vadd.f32 0.0, %v696
  %v698 = vpop.f32.mrb[0].mxu0
  %v699 = vpop.f32.mrb[0].mxu0
  %v700 = vadd.f32 0.0, %v699
  %v701 = vpop.f32.mrb[0].mxu0
  %702 = vmatprep.mubr.bf16.mxu0 %v559
  %703 = vmatmul.mubr.bf16.gmra.mrb[0].mxu0 %v558
  %v704 = vpop.f32.mrb[0].mxu0
  %v705 = vadd.f32 0.0, %v704
  %v706 = vpop.f32.mrb[0].mxu0
  %v707 = vpop.f32.mrb[0].mxu0
  %v708 = vadd.f32 0.0, %v707
  %v709 = vpop.f32.mrb[0].mxu0
  %710 = vmatprep.mubr.bf16.mxu0 %v561
  %711 = vmatmul.mubr.bf16.gmra.mrb[0].mxu0 %v560
  %v712 = vpop.f32.mrb[0].mxu0
  %v713 = vadd.f32 0.0, %v712
  %v714 = vpop.f32.mrb[0].mxu0
  %v715 = vpop.f32.mrb[0].mxu0
  %v716 = vadd.f32 0.0, %v715
  %v717 = vpop.f32.mrb[0].mxu0
  %718 = vmatprep.mubr.bf16.mxu0 %v563
  %719 = vmatmul.mubr.bf16.gmra.mrb[0].mxu0 %v562
  %v720 = vpop.f32.mrb[0].mxu0
  %v721 = vadd.f32 0.0, %v720
  %v722 = vpop.f32.mrb[0].mxu0
  %v723 = vpop.f32.mrb[0].mxu0
  %v724 = vpop.f32.mrb[0].mxu0
  %725 = vdwg.mxu0
  %v726 = vmax.f32 %v336, %v625
  %v727 = vmax.f32 %v339, %v628
  %v728 = vmax.f32 %v344, %v633
  %v729 = vmax.f32 %v347, %v636
  %v730 = vmax.f32 %v352, %v641
  %v731 = vmax.f32 %v355, %v644
  %v732 = vmax.f32 %v360, %v649
  %v733 = vmax.f32 %v363, %v652
  %v734 = vmax.f32 %v368, %v657
  %v735 = vmax.f32 %v371, %v660
  %v736 = vmax.f32 %v376, %v665
  %v737 = vmax.f32 %v379, %v668
  %v738 = vmax.f32 %v384, %v673
  %v739 = vmax.f32 %v387, %v676
  %v740 = vmax.f32 %v392, %v681
  %v741 = vmax.f32 %v395, %v684
  %v742 = vmax.f32 %v400, %v689
  %v743 = vmax.f32 %v403, %v692
  %v744 = vmax.f32 %v408, %v697
  %v745 = vmax.f32 %v411, %v700
  %v746 = vmax.f32 %v416, %v705
  %v747 = vmax.f32 %v419, %v708
  %v748 = vmax.f32 %v424, %v713
  %v749 = vmax.f32 %v427, %v716
  %v750 = vmax.f32 %v432, %v721
  %s751 = scalar_lea.vmem %s0, 400
  %v752 = vld [vmem:[%s751] sm:$0xff]
  %v753 = vld [vmem:[%s751 + $0x8] sm:$0xff]
  %v754 = vld [vmem:[%s751 + $0x10] sm:$0xff]
  %v755 = vld [vmem:[%s751 + $0x18] sm:$0xff]
  %v756 = vld [vmem:[%s751 + $0x20] sm:$0xff]
  %v757 = vld [vmem:[%s751 + $0x28] sm:$0xff]
  %v758 = vld [vmem:[%s751 + $0x30] sm:$0xff]
  %v759 = vld [vmem:[%s751 + $0x38] sm:$0xff]
  %v760 = vld [vmem:[%s751 + $0x40] sm:$0xff]
  %v761 = vld [vmem:[%s751 + $0x48] sm:$0xff]
  %v762 = vld [vmem:[%s751 + $0x50] sm:$0xff]
  %v763 = vld [vmem:[%s751 + $0x58] sm:$0xff]
  %v764 = vld [vmem:[%s751 + $0x60] sm:$0xff]
  %v765 = vld [vmem:[%s751 + $0x68] sm:$0xff]
  %v766 = vld [vmem:[%s751 + $0x70] sm:$0xff]
  %v767 = vld [vmem:[%s751 + $0x78] sm:$0xff]
  %v768 = vld [vmem:[%s751 + $0x80] sm:$0xff]
  %v769 = vld [vmem:[%s751 + $0x88] sm:$0xff]
  %v770 = vld [vmem:[%s751 + $0x90] sm:$0xff]
  %v771 = vld [vmem:[%s751 + $0x98] sm:$0xff]
  %v772 = vld [vmem:[%s751 + $0xa0] sm:$0xff]
  %v773 = vld [vmem:[%s751 + $0xa8] sm:$0xff]
  %v774 = vld [vmem:[%s751 + $0xb0] sm:$0xff]
  %v775 = vld [vmem:[%s751 + $0xb8] sm:$0xff]
  %v776 = vld [vmem:[%s751 + $0xc0] sm:$0xff]
  %v802 = vunpack.c.l.b16 %v752
  %v803 = vunpack.c.h.b16 %v752
  %v804 = vunpack.c.l.b16 %v753
  %v805 = vunpack.c.h.b16 %v753
  %v806 = vunpack.c.l.b16 %v754
  %v807 = vunpack.c.h.b16 %v754
  %v808 = vunpack.c.l.b16 %v755
  %v809 = vunpack.c.h.b16 %v755
  %v810 = vunpack.c.l.b16 %v756
  %v811 = vunpack.c.h.b16 %v756
  %v812 = vunpack.c.l.b16 %v757
  %v813 = vunpack.c.h.b16 %v757
  %v814 = vunpack.c.l.b16 %v758
  %v815 = vunpack.c.h.b16 %v758
  %v816 = vunpack.c.l.b16 %v759
  %v817 = vunpack.c.h.b16 %v759
  %v818 = vunpack.c.l.b16 %v760
  %v819 = vunpack.c.h.b16 %v760
  %v820 = vunpack.c.l.b16 %v761
  %v821 = vunpack.c.h.b16 %v761
  %v822 = vunpack.c.l.b16 %v762
  %v823 = vunpack.c.h.b16 %v762
  %v824 = vunpack.c.l.b16 %v763
  %v825 = vunpack.c.h.b16 %v763
  %v826 = vunpack.c.l.b16 %v764
  %v827 = vunpack.c.h.b16 %v764
  %v828 = vunpack.c.l.b16 %v765
  %v829 = vunpack.c.h.b16 %v765
  %v830 = vunpack.c.l.b16 %v766
  %v831 = vunpack.c.h.b16 %v766
  %v832 = vunpack.c.l.b16 %v767
  %v833 = vunpack.c.h.b16 %v767
  %v834 = vunpack.c.l.b16 %v768
  %v835 = vunpack.c.h.b16 %v768
  %v836 = vunpack.c.l.b16 %v769
  %v837 = vunpack.c.h.b16 %v769
  %v838 = vunpack.c.l.b16 %v770
  %v839 = vunpack.c.h.b16 %v770
  %v840 = vunpack.c.l.b16 %v771
  %v841 = vunpack.c.h.b16 %v771
  %v842 = vunpack.c.l.b16 %v772
  %v843 = vunpack.c.h.b16 %v772
  %v844 = vunpack.c.l.b16 %v773
  %v845 = vunpack.c.h.b16 %v773
  %v846 = vunpack.c.l.b16 %v774
  %v847 = vunpack.c.h.b16 %v774
  %v848 = vunpack.c.l.b16 %v775
  %v849 = vunpack.c.h.b16 %v775
  %v850 = vunpack.c.l.b16 %v776
  %v851 = vunpack.c.h.b16 %v776
  %v852 = vpack.c.b16 %v804, %v802
  %v853 = vpack.c.b16 %v805, %v803
  %v854 = vpack.c.b16 %v808, %v806
  %v855 = vpack.c.b16 %v809, %v807
  %v856 = vpack.c.b16 %v812, %v810
  %v857 = vpack.c.b16 %v813, %v811
  %v858 = vpack.c.b16 %v816, %v814
  %v859 = vpack.c.b16 %v817, %v815
  %v860 = vpack.c.b16 %v820, %v818
  %v861 = vpack.c.b16 %v821, %v819
  %v862 = vpack.c.b16 %v824, %v822
  %v863 = vpack.c.b16 %v825, %v823
  %v864 = vpack.c.b16 %v828, %v826
  %v865 = vpack.c.b16 %v829, %v827
  %v866 = vpack.c.b16 %v832, %v830
  %v867 = vpack.c.b16 %v833, %v831
  %v868 = vpack.c.b16 %v836, %v834
  %v869 = vpack.c.b16 %v837, %v835
  %v870 = vpack.c.b16 %v840, %v838
  %v871 = vpack.c.b16 %v841, %v839
  %v872 = vpack.c.b16 %v844, %v842
  %v873 = vpack.c.b16 %v845, %v843
  %v874 = vpack.c.b16 %v848, %v846
  %v875 = vpack.c.b16 %v849, %v847
  %v876 = vpack.c.b16 %v850, %v850
  %v877 = vpack.c.b16 %v851, %v851
  %904 = vmatprep.subr.bf16.mxu0 0
  %905 = vmatpush1.bf16.msra.mxu0 %v269
  %906 = vmatprep.subr.bf16.mxu0 0
  %907 = vmatpush1.bf16.msra.mxu0 %v270
  %908 = vmatprep.subr.bf16.mxu0 0
  %909 = vmatpush1.bf16.msra.mxu0 %v271
  %910 = vmatprep.subr.bf16.mxu0 0
  %911 = vmatpush1.bf16.msra.mxu0 %v272
  %912 = vmatprep.subr.bf16.mxu0 0
  %913 = vmatpush1.bf16.msra.mxu0 %v273
  %914 = vmatprep.subr.bf16.mxu0 0
  %915 = vmatpush1.bf16.msra.mxu0 %v274
  %916 = vmatprep.subr.bf16.mxu0 0
  %917 = vmatpush1.bf16.msra.mxu0 %v275
  %918 = vmatprep.subr.bf16.mxu0 0
  %919 = vmatpush1.bf16.msra.mxu0 %v276
  %920 = vmatprep.subr.bf16.mxu0 0
  %921 = vmatpush1.bf16.msra.mxu0 %v277
  %922 = vmatprep.subr.bf16.mxu0 0
  %923 = vmatpush1.bf16.msra.mxu0 %v278
  %924 = vmatprep.subr.bf16.mxu0 0
  %925 = vmatpush1.bf16.msra.mxu0 %v279
  %926 = vmatprep.subr.bf16.mxu0 0
  %927 = vmatpush1.bf16.msra.mxu0 %v280
  %928 = vmatprep.subr.bf16.mxu0 0
  %929 = vmatpush1.bf16.msra.mxu0 %v281
  %930 = vmatprep.subr.bf16.mxu0 0
  %931 = vmatpush1.bf16.msra.mxu0 %v282
  %932 = vmatprep.subr.bf16.mxu0 0
  %933 = vmatpush1.bf16.msra.mxu0 %v283
  %934 = vmatprep.subr.bf16.mxu0 0
  %935 = vmatpush1.bf16.msra.mxu0 %v284
  %936 = vmatprep.mubr.bf16.mxu0 %v853
  %937 = vmatmul.mubr.bf16.gmra.mrb[0].mxu0 %v852
  %v938 = vpop.f32.mrb[0].mxu0
  %v939 = vadd.f32 0.0, %v938
  %v940 = vpop.f32.mrb[0].mxu0
  %v941 = vpop.f32.mrb[0].mxu0
  %v942 = vadd.f32 0.0, %v941
  %v943 = vpop.f32.mrb[0].mxu0
  %944 = vmatprep.mubr.bf16.mxu0 %v855
  %945 = vmatmul.mubr.bf16.gmra.mrb[0].mxu0 %v854
  %v946 = vpop.f32.mrb[0].mxu0
  %v947 = vadd.f32 0.0, %v946
  %v948 = vpop.f32.mrb[0].mxu0
  %v949 = vpop.f32.mrb[0].mxu0
  %v950 = vadd.f32 0.0, %v949
  %v951 = vpop.f32.mrb[0].mxu0
  %952 = vmatprep.mubr.bf16.mxu0 %v857
  %953 = vmatmul.mubr.bf16.gmra.mrb[0].mxu0 %v856
  %v954 = vpop.f32.mrb[0].mxu0
  %v955 = vadd.f32 0.0, %v954
  %v956 = vpop.f32.mrb[0].mxu0
  %v957 = vpop.f32.mrb[0].mxu0
  %v958 = vadd.f32 0.0, %v957
  %v959 = vpop.f32.mrb[0].mxu0
  %960 = vmatprep.mubr.bf16.mxu0 %v859
  %961 = vmatmul.mubr.bf16.gmra.mrb[0].mxu0 %v858
  %v962 = vpop.f32.mrb[0].mxu0
  %v963 = vadd.f32 0.0, %v962
  %v964 = vpop.f32.mrb[0].mxu0
  %v965 = vpop.f32.mrb[0].mxu0
  %v966 = vadd.f32 0.0, %v965
  %v967 = vpop.f32.mrb[0].mxu0
  %968 = vmatprep.mubr.bf16.mxu0 %v861
  %969 = vmatmul.mubr.bf16.gmra.mrb[0].mxu0 %v860
  %v970 = vpop.f32.mrb[0].mxu0
  %v971 = vadd.f32 0.0, %v970
  %v972 = vpop.f32.mrb[0].mxu0
  %v973 = vpop.f32.mrb[0].mxu0
  %v974 = vadd.f32 0.0, %v973
  %v975 = vpop.f32.mrb[0].mxu0
  %976 = vmatprep.mubr.bf16.mxu0 %v863
  %977 = vmatmul.mubr.bf16.gmra.mrb[0].mxu0 %v862
  %v978 = vpop.f32.mrb[0].mxu0
  %v979 = vadd.f32 0.0, %v978
  %v980 = vpop.f32.mrb[0].mxu0
  %v981 = vpop.f32.mrb[0].mxu0
  %v982 = vadd.f32 0.0, %v981
  %v983 = vpop.f32.mrb[0].mxu0
  %984 = vmatprep.mubr.bf16.mxu0 %v865
  %985 = vmatmul.mubr.bf16.gmra.mrb[0].mxu0 %v864
  %v986 = vpop.f32.mrb[0].mxu0
  %v987 = vadd.f32 0.0, %v986
  %v988 = vpop.f32.mrb[0].mxu0
  %v989 = vpop.f32.mrb[0].mxu0
  %v990 = vadd.f32 0.0, %v989
  %v991 = vpop.f32.mrb[0].mxu0
  %992 = vmatprep.mubr.bf16.mxu0 %v867
  %993 = vmatmul.mubr.bf16.gmra.mrb[0].mxu0 %v866
  %v994 = vpop.f32.mrb[0].mxu0
  %v995 = vadd.f32 0.0, %v994
  %v996 = vpop.f32.mrb[0].mxu0
  %v997 = vpop.f32.mrb[0].mxu0
  %v998 = vadd.f32 0.0, %v997
  %v999 = vpop.f32.mrb[0].mxu0
  %1000 = vmatprep.mubr.bf16.mxu0 %v869
  %1001 = vmatmul.mubr.bf16.gmra.mrb[0].mxu0 %v868
  %v1002 = vpop.f32.mrb[0].mxu0
  %v1003 = vadd.f32 0.0, %v1002
  %v1004 = vpop.f32.mrb[0].mxu0
  %v1005 = vpop.f32.mrb[0].mxu0
  %v1006 = vadd.f32 0.0, %v1005
  %v1007 = vpop.f32.mrb[0].mxu0
  %1008 = vmatprep.mubr.bf16.mxu0 %v871
  %1009 = vmatmul.mubr.bf16.gmra.mrb[0].mxu0 %v870
  %v1010 = vpop.f32.mrb[0].mxu0
  %v1011 = vadd.f32 0.0, %v1010
  %v1012 = vpop.f32.mrb[0].mxu0
  %v1013 = vpop.f32.mrb[0].mxu0
  %v1014 = vadd.f32 0.0, %v1013
  %v1015 = vpop.f32.mrb[0].mxu0
  %1016 = vmatprep.mubr.bf16.mxu0 %v873
  %1017 = vmatmul.mubr.bf16.gmra.mrb[0].mxu0 %v872
  %v1018 = vpop.f32.mrb[0].mxu0
  %v1019 = vadd.f32 0.0, %v1018
  %v1020 = vpop.f32.mrb[0].mxu0
  %v1021 = vpop.f32.mrb[0].mxu0
  %v1022 = vadd.f32 0.0, %v1021
  %v1023 = vpop.f32.mrb[0].mxu0
  %1024 = vmatprep.mubr.bf16.mxu0 %v875
  %1025 = vmatmul.mubr.bf16.gmra.mrb[0].mxu0 %v874
  %v1026 = vpop.f32.mrb[0].mxu0
  %v1027 = vadd.f32 0.0, %v1026
  %v1028 = vpop.f32.mrb[0].mxu0
  %v1029 = vpop.f32.mrb[0].mxu0
  %v1030 = vadd.f32 0.0, %v1029
  %v1031 = vpop.f32.mrb[0].mxu0
  %1032 = vmatprep.mubr.bf16.mxu0 %v877
  %1033 = vmatmul.mubr.bf16.gmra.mrb[0].mxu0 %v876
  %v1034 = vpop.f32.mrb[0].mxu0
  %v1035 = vadd.f32 0.0, %v1034
  %v1036 = vpop.f32.mrb[0].mxu0
  %v1037 = vpop.f32.mrb[0].mxu0
  %v1038 = vpop.f32.mrb[0].mxu0
  %1039 = vdwg.mxu0
  %v1040 = vmax.f32 %v726, %v939
  %v1041 = vmax.f32 %v727, %v942
  %v1042 = vmax.f32 %v728, %v947
  %v1043 = vmax.f32 %v729, %v950
  %v1044 = vmax.f32 %v730, %v955
  %v1045 = vmax.f32 %v731, %v958
  %v1046 = vmax.f32 %v732, %v963
  %v1047 = vmax.f32 %v733, %v966
  %v1048 = vmax.f32 %v734, %v971
  %v1049 = vmax.f32 %v735, %v974
  %v1050 = vmax.f32 %v736, %v979
  %v1051 = vmax.f32 %v737, %v982
  %v1052 = vmax.f32 %v738, %v987
  %v1053 = vmax.f32 %v739, %v990
  %v1054 = vmax.f32 %v740, %v995
  %v1055 = vmax.f32 %v741, %v998
  %v1056 = vmax.f32 %v742, %v1003
  %v1057 = vmax.f32 %v743, %v1006
  %v1058 = vmax.f32 %v744, %v1011
  %v1059 = vmax.f32 %v745, %v1014
  %v1060 = vmax.f32 %v746, %v1019
  %v1061 = vmax.f32 %v747, %v1022
  %v1062 = vmax.f32 %v748, %v1027
  %v1063 = vmax.f32 %v749, %v1030
  %v1064 = vmax.f32 %v750, %v1035
  %s1065 = scalar_lea.vmem %s0, 600
  %v1066 = vld [vmem:[%s1065] sm:$0xff]
  %v1067 = vld [vmem:[%s1065 + $0x8] sm:$0xff]
  %v1068 = vld [vmem:[%s1065 + $0x10] sm:$0xff]
  %v1069 = vld [vmem:[%s1065 + $0x18] sm:$0xff]
  %v1070 = vld [vmem:[%s1065 + $0x20] sm:$0xff]
  %v1071 = vld [vmem:[%s1065 + $0x28] sm:$0xff]
  %v1072 = vld [vmem:[%s1065 + $0x30] sm:$0xff]
  %v1073 = vld [vmem:[%s1065 + $0x38] sm:$0xff]
  %v1074 = vld [vmem:[%s1065 + $0x40] sm:$0xff]
  %v1075 = vld [vmem:[%s1065 + $0x48] sm:$0xff]
  %v1076 = vld [vmem:[%s1065 + $0x50] sm:$0xff]
  %v1077 = vld [vmem:[%s1065 + $0x58] sm:$0xff]
  %v1078 = vld [vmem:[%s1065 + $0x60] sm:$0xff]
  %v1079 = vld [vmem:[%s1065 + $0x68] sm:$0xff]
  %v1080 = vld [vmem:[%s1065 + $0x70] sm:$0xff]
  %v1081 = vld [vmem:[%s1065 + $0x78] sm:$0xff]
  %v1082 = vld [vmem:[%s1065 + $0x80] sm:$0xff]
  %v1083 = vld [vmem:[%s1065 + $0x88] sm:$0xff]
  %v1084 = vld [vmem:[%s1065 + $0x90] sm:$0xff]
  %v1085 = vld [vmem:[%s1065 + $0x98] sm:$0xff]
  %v1086 = vld [vmem:[%s1065 + $0xa0] sm:$0xff]
  %v1087 = vld [vmem:[%s1065 + $0xa8] sm:$0xff]
  %v1088 = vld [vmem:[%s1065 + $0xb0] sm:$0xff]
  %v1089 = vld [vmem:[%s1065 + $0xb8] sm:$0xff]
  %v1090 = vld [vmem:[%s1065 + $0xc0] sm:$0xff]
  %v1116 = vunpack.c.l.b16 %v1066
  %v1117 = vunpack.c.h.b16 %v1066
  %v1118 = vunpack.c.l.b16 %v1067
  %v1119 = vunpack.c.h.b16 %v1067
  %v1120 = vunpack.c.l.b16 %v1068
  %v1121 = vunpack.c.h.b16 %v1068
  %v1122 = vunpack.c.l.b16 %v1069
  %v1123 = vunpack.c.h.b16 %v1069
  %v1124 = vunpack.c.l.b16 %v1070
  %v1125 = vunpack.c.h.b16 %v1070
  %v1126 = vunpack.c.l.b16 %v1071
  %v1127 = vunpack.c.h.b16 %v1071
  %v1128 = vunpack.c.l.b16 %v1072
  %v1129 = vunpack.c.h.b16 %v1072
  %v1130 = vunpack.c.l.b16 %v1073
  %v1131 = vunpack.c.h.b16 %v1073
  %v1132 = vunpack.c.l.b16 %v1074
  %v1133 = vunpack.c.h.b16 %v1074
  %v1134 = vunpack.c.l.b16 %v1075
  %v1135 = vunpack.c.h.b16 %v1075
  %v1136 = vunpack.c.l.b16 %v1076
  %v1137 = vunpack.c.h.b16 %v1076
  %v1138 = vunpack.c.l.b16 %v1077
  %v1139 = vunpack.c.h.b16 %v1077
  %v1140 = vunpack.c.l.b16 %v1078
  %v1141 = vunpack.c.h.b16 %v1078
  %v1142 = vunpack.c.l.b16 %v1079
  %v1143 = vunpack.c.h.b16 %v1079
  %v1144 = vunpack.c.l.b16 %v1080
  %v1145 = vunpack.c.h.b16 %v1080
  %v1146 = vunpack.c.l.b16 %v1081
  %v1147 = vunpack.c.h.b16 %v1081
  %v1148 = vunpack.c.l.b16 %v1082
  %v1149 = vunpack.c.h.b16 %v1082
  %v1150 = vunpack.c.l.b16 %v1083
  %v1151 = vunpack.c.h.b16 %v1083
  %v1152 = vunpack.c.l.b16 %v1084
  %v1153 = vunpack.c.h.b16 %v1084
  %v1154 = vunpack.c.l.b16 %v1085
  %v1155 = vunpack.c.h.b16 %v1085
  %v1156 = vunpack.c.l.b16 %v1086
  %v1157 = vunpack.c.h.b16 %v1086
  %v1158 = vunpack.c.l.b16 %v1087
  %v1159 = vunpack.c.h.b16 %v1087
  %v1160 = vunpack.c.l.b16 %v1088
  %v1161 = vunpack.c.h.b16 %v1088
  %v1162 = vunpack.c.l.b16 %v1089
  %v1163 = vunpack.c.h.b16 %v1089
  %v1164 = vunpack.c.l.b16 %v1090
  %v1165 = vunpack.c.h.b16 %v1090
  %v1166 = vpack.c.b16 %v1118, %v1116
  %v1167 = vpack.c.b16 %v1119, %v1117
  %v1168 = vpack.c.b16 %v1122, %v1120
  %v1169 = vpack.c.b16 %v1123, %v1121
  %v1170 = vpack.c.b16 %v1126, %v1124
  %v1171 = vpack.c.b16 %v1127, %v1125
  %v1172 = vpack.c.b16 %v1130, %v1128
  %v1173 = vpack.c.b16 %v1131, %v1129
  %v1174 = vpack.c.b16 %v1134, %v1132
  %v1175 = vpack.c.b16 %v1135, %v1133
  %v1176 = vpack.c.b16 %v1138, %v1136
  %v1177 = vpack.c.b16 %v1139, %v1137
  %v1178 = vpack.c.b16 %v1142, %v1140
  %v1179 = vpack.c.b16 %v1143, %v1141
  %v1180 = vpack.c.b16 %v1146, %v1144
  %v1181 = vpack.c.b16 %v1147, %v1145
  %v1182 = vpack.c.b16 %v1150, %v1148
  %v1183 = vpack.c.b16 %v1151, %v1149
  %v1184 = vpack.c.b16 %v1154, %v1152
  %v1185 = vpack.c.b16 %v1155, %v1153
  %v1186 = vpack.c.b16 %v1158, %v1156
  %v1187 = vpack.c.b16 %v1159, %v1157
  %v1188 = vpack.c.b16 %v1162, %v1160
  %v1189 = vpack.c.b16 %v1163, %v1161
  %v1190 = vpack.c.b16 %v1164, %v1164
  %v1191 = vpack.c.b16 %v1165, %v1165
  %1218 = vmatprep.subr.bf16.mxu0 0
  %1219 = vmatpush1.bf16.msra.mxu0 %v269
  %1220 = vmatprep.subr.bf16.mxu0 0
  %1221 = vmatpush1.bf16.msra.mxu0 %v270
  %1222 = vmatprep.subr.bf16.mxu0 0
  %1223 = vmatpush1.bf16.msra.mxu0 %v271
  %1224 = vmatprep.subr.bf16.mxu0 0
  %1225 = vmatpush1.bf16.msra.mxu0 %v272
  %1226 = vmatprep.subr.bf16.mxu0 0
  %1227 = vmatpush1.bf16.msra.mxu0 %v273
  %1228 = vmatprep.subr.bf16.mxu0 0
  %1229 = vmatpush1.bf16.msra.mxu0 %v274
  %1230 = vmatprep.subr.bf16.mxu0 0
  %1231 = vmatpush1.bf16.msra.mxu0 %v275
  %1232 = vmatprep.subr.bf16.mxu0 0
  %1233 = vmatpush1.bf16.msra.mxu0 %v276
  %1234 = vmatprep.subr.bf16.mxu0 0
  %1235 = vmatpush1.bf16.msra.mxu0 %v277
  %1236 = vmatprep.subr.bf16.mxu0 0
  %1237 = vmatpush1.bf16.msra.mxu0 %v278
  %1238 = vmatprep.subr.bf16.mxu0 0
  %1239 = vmatpush1.bf16.msra.mxu0 %v279
  %1240 = vmatprep.subr.bf16.mxu0 0
  %1241 = vmatpush1.bf16.msra.mxu0 %v280
  %1242 = vmatprep.subr.bf16.mxu0 0
  %1243 = vmatpush1.bf16.msra.mxu0 %v281
  %1244 = vmatprep.subr.bf16.mxu0 0
  %1245 = vmatpush1.bf16.msra.mxu0 %v282
  %1246 = vmatprep.subr.bf16.mxu0 0
  %1247 = vmatpush1.bf16.msra.mxu0 %v283
  %1248 = vmatprep.subr.bf16.mxu0 0
  %1249 = vmatpush1.bf16.msra.mxu0 %v284
  %1250 = vmatprep.mubr.bf16.mxu0 %v1167
  %1251 = vmatmul.mubr.bf16.gmra.mrb[0].mxu0 %v1166
  %v1252 = vpop.f32.mrb[0].mxu0
  %v1253 = vadd.f32 0.0, %v1252
  %v1254 = vpop.f32.mrb[0].mxu0
  %v1255 = vpop.f32.mrb[0].mxu0
  %v1256 = vadd.f32 0.0, %v1255
  %v1257 = vpop.f32.mrb[0].mxu0
  %1258 = vmatprep.mubr.bf16.mxu0 %v1169
  %1259 = vmatmul.mubr.bf16.gmra.mrb[0].mxu0 %v1168
  %v1260 = vpop.f32.mrb[0].mxu0
  %v1261 = vadd.f32 0.0, %v1260
  %v1262 = vpop.f32.mrb[0].mxu0
  %v1263 = vpop.f32.mrb[0].mxu0
  %v1264 = vadd.f32 0.0, %v1263
  %v1265 = vpop.f32.mrb[0].mxu0
  %1266 = vmatprep.mubr.bf16.mxu0 %v1171
  %1267 = vmatmul.mubr.bf16.gmra.mrb[0].mxu0 %v1170
  %v1268 = vpop.f32.mrb[0].mxu0
  %v1269 = vadd.f32 0.0, %v1268
  %v1270 = vpop.f32.mrb[0].mxu0
  %v1271 = vpop.f32.mrb[0].mxu0
  %v1272 = vadd.f32 0.0, %v1271
  %v1273 = vpop.f32.mrb[0].mxu0
  %1274 = vmatprep.mubr.bf16.mxu0 %v1173
  %1275 = vmatmul.mubr.bf16.gmra.mrb[0].mxu0 %v1172
  %v1276 = vpop.f32.mrb[0].mxu0
  %v1277 = vadd.f32 0.0, %v1276
  %v1278 = vpop.f32.mrb[0].mxu0
  %v1279 = vpop.f32.mrb[0].mxu0
  %v1280 = vadd.f32 0.0, %v1279
  %v1281 = vpop.f32.mrb[0].mxu0
  %1282 = vmatprep.mubr.bf16.mxu0 %v1175
  %1283 = vmatmul.mubr.bf16.gmra.mrb[0].mxu0 %v1174
  %v1284 = vpop.f32.mrb[0].mxu0
  %v1285 = vadd.f32 0.0, %v1284
  %v1286 = vpop.f32.mrb[0].mxu0
  %v1287 = vpop.f32.mrb[0].mxu0
  %v1288 = vadd.f32 0.0, %v1287
  %v1289 = vpop.f32.mrb[0].mxu0
  %1290 = vmatprep.mubr.bf16.mxu0 %v1177
  %1291 = vmatmul.mubr.bf16.gmra.mrb[0].mxu0 %v1176
  %v1292 = vpop.f32.mrb[0].mxu0
  %v1293 = vadd.f32 0.0, %v1292
  %v1294 = vpop.f32.mrb[0].mxu0
  %v1295 = vpop.f32.mrb[0].mxu0
  %v1296 = vadd.f32 0.0, %v1295
  %v1297 = vpop.f32.mrb[0].mxu0
  %1298 = vmatprep.mubr.bf16.mxu0 %v1179
  %1299 = vmatmul.mubr.bf16.gmra.mrb[0].mxu0 %v1178
  %v1300 = vpop.f32.mrb[0].mxu0
  %v1301 = vadd.f32 0.0, %v1300
  %v1302 = vpop.f32.mrb[0].mxu0
  %v1303 = vpop.f32.mrb[0].mxu0
  %v1304 = vadd.f32 0.0, %v1303
  %v1305 = vpop.f32.mrb[0].mxu0
  %1306 = vmatprep.mubr.bf16.mxu0 %v1181
  %1307 = vmatmul.mubr.bf16.gmra.mrb[0].mxu0 %v1180
  %v1308 = vpop.f32.mrb[0].mxu0
  %v1309 = vadd.f32 0.0, %v1308
  %v1310 = vpop.f32.mrb[0].mxu0
  %v1311 = vpop.f32.mrb[0].mxu0
  %v1312 = vadd.f32 0.0, %v1311
  %v1313 = vpop.f32.mrb[0].mxu0
  %1314 = vmatprep.mubr.bf16.mxu0 %v1183
  %1315 = vmatmul.mubr.bf16.gmra.mrb[0].mxu0 %v1182
  %v1316 = vpop.f32.mrb[0].mxu0
  %v1317 = vadd.f32 0.0, %v1316
  %v1318 = vpop.f32.mrb[0].mxu0
  %v1319 = vpop.f32.mrb[0].mxu0
  %v1320 = vadd.f32 0.0, %v1319
  %v1321 = vpop.f32.mrb[0].mxu0
  %1322 = vmatprep.mubr.bf16.mxu0 %v1185
  %1323 = vmatmul.mubr.bf16.gmra.mrb[0].mxu0 %v1184
  %v1324 = vpop.f32.mrb[0].mxu0
  %v1325 = vadd.f32 0.0, %v1324
  %v1326 = vpop.f32.mrb[0].mxu0
  %v1327 = vpop.f32.mrb[0].mxu0
  %v1328 = vadd.f32 0.0, %v1327
  %v1329 = vpop.f32.mrb[0].mxu0
  %1330 = vmatprep.mubr.bf16.mxu0 %v1187
  %1331 = vmatmul.mubr.bf16.gmra.mrb[0].mxu0 %v1186
  %v1332 = vpop.f32.mrb[0].mxu0
  %v1333 = vadd.f32 0.0, %v1332
  %v1334 = vpop.f32.mrb[0].mxu0
  %v1335 = vpop.f32.mrb[0].mxu0
  %v1336 = vadd.f32 0.0, %v1335
  %v1337 = vpop.f32.mrb[0].mxu0
  %1338 = vmatprep.mubr.bf16.mxu0 %v1189
  %1339 = vmatmul.mubr.bf16.gmra.mrb[0].mxu0 %v1188
  %v1340 = vpop.f32.mrb[0].mxu0
  %v1341 = vadd.f32 0.0, %v1340
  %v1342 = vpop.f32.mrb[0].mxu0
  %v1343 = vpop.f32.mrb[0].mxu0
  %v1344 = vadd.f32 0.0, %v1343
  %v1345 = vpop.f32.mrb[0].mxu0
  %1346 = vmatprep.mubr.bf16.mxu0 %v1191
  %1347 = vmatmul.mubr.bf16.gmra.mrb[0].mxu0 %v1190
  %v1348 = vpop.f32.mrb[0].mxu0
  %v1349 = vadd.f32 0.0, %v1348
  %v1350 = vpop.f32.mrb[0].mxu0
  %v1351 = vpop.f32.mrb[0].mxu0
  %v1352 = vpop.f32.mrb[0].mxu0
  %1353 = vdwg.mxu0
  %v1354 = vmax.f32 %v1040, %v1253
  %v1355 = vmax.f32 %v1041, %v1256
  %v1356 = vmax.f32 %v1042, %v1261
  %v1357 = vmax.f32 %v1043, %v1264
  %v1358 = vmax.f32 %v1044, %v1269
  %v1359 = vmax.f32 %v1045, %v1272
  %v1360 = vmax.f32 %v1046, %v1277
  %v1361 = vmax.f32 %v1047, %v1280
  %v1362 = vmax.f32 %v1048, %v1285
  %v1363 = vmax.f32 %v1049, %v1288
  %v1364 = vmax.f32 %v1050, %v1293
  %v1365 = vmax.f32 %v1051, %v1296
  %v1366 = vmax.f32 %v1052, %v1301
  %v1367 = vmax.f32 %v1053, %v1304
  %v1368 = vmax.f32 %v1054, %v1309
  %v1369 = vmax.f32 %v1055, %v1312
  %v1370 = vmax.f32 %v1056, %v1317
  %v1371 = vmax.f32 %v1057, %v1320
  %v1372 = vmax.f32 %v1058, %v1325
  %v1373 = vmax.f32 %v1059, %v1328
  %v1374 = vmax.f32 %v1060, %v1333
  %v1375 = vmax.f32 %v1061, %v1336
  %v1376 = vmax.f32 %v1062, %v1341
  %v1377 = vmax.f32 %v1063, %v1344
  %v1378 = vmax.f32 %v1064, %v1349
  %v1379 = vld [vmem:[%s2] sm:$0x1]
  %v1381 = vlaneseq
  %v1382 = vshrl.u32 %v1381, 7
  %v1383 = vsub.s32 0, %v1382
  %v1384 = vrot.slane %v1379, %v1383
  %v1386 = vadd.f32 %v1354, %v1384
  %v1387 = vadd.f32 %v1355, %v1384
  %v1388 = vadd.f32 %v1356, %v1384
  %v1389 = vadd.f32 %v1357, %v1384
  %v1390 = vadd.f32 %v1358, %v1384
  %v1391 = vadd.f32 %v1359, %v1384
  %v1392 = vadd.f32 %v1360, %v1384
  %v1393 = vadd.f32 %v1361, %v1384
  %v1394 = vadd.f32 %v1362, %v1384
  %v1395 = vadd.f32 %v1363, %v1384
  %v1396 = vadd.f32 %v1364, %v1384
  %v1397 = vadd.f32 %v1365, %v1384
  %v1398 = vadd.f32 %v1366, %v1384
  %v1399 = vadd.f32 %v1367, %v1384
  %v1400 = vadd.f32 %v1368, %v1384
  %v1401 = vadd.f32 %v1369, %v1384
  %v1402 = vadd.f32 %v1370, %v1384
  %v1403 = vadd.f32 %v1371, %v1384
  %v1404 = vadd.f32 %v1372, %v1384
  %v1405 = vadd.f32 %v1373, %v1384
  %v1406 = vadd.f32 %v1374, %v1384
  %v1407 = vadd.f32 %v1375, %v1384
  %v1408 = vadd.f32 %v1376, %v1384
  %v1409 = vadd.f32 %v1377, %v1384
  %v1410 = vadd.f32 %v1378, %v1384
  %v1411 = vmax.f32 %v1386, 0.0
  %v1412 = vmax.f32 %v1387, 0.0
  %v1413 = vmax.f32 %v1388, 0.0
  %v1414 = vmax.f32 %v1389, 0.0
  %v1415 = vmax.f32 %v1390, 0.0
  %v1416 = vmax.f32 %v1391, 0.0
  %v1417 = vmax.f32 %v1392, 0.0
  %v1418 = vmax.f32 %v1393, 0.0
  %v1419 = vmax.f32 %v1394, 0.0
  %v1420 = vmax.f32 %v1395, 0.0
  %v1421 = vmax.f32 %v1396, 0.0
  %v1422 = vmax.f32 %v1397, 0.0
  %v1423 = vmax.f32 %v1398, 0.0
  %v1424 = vmax.f32 %v1399, 0.0
  %v1425 = vmax.f32 %v1400, 0.0
  %v1426 = vmax.f32 %v1401, 0.0
  %v1427 = vmax.f32 %v1402, 0.0
  %v1428 = vmax.f32 %v1403, 0.0
  %v1429 = vmax.f32 %v1404, 0.0
  %v1430 = vmax.f32 %v1405, 0.0
  %v1431 = vmax.f32 %v1406, 0.0
  %v1432 = vmax.f32 %v1407, 0.0
  %v1433 = vmax.f32 %v1408, 0.0
  %v1434 = vmax.f32 %v1409, 0.0
  %v1435 = vmax.f32 %v1410, 0.0
  %v1436 = vld [vmem:[%s3] sm:$0x1]
  %v1438 = vlaneseq
  %v1439 = vshrl.u32 %v1438, 7
  %v1440 = vsub.s32 0, %v1439
  %v1441 = vrot.slane %v1436, %v1440
  %v1443 = vmul.f32 %v1411, %v1441
  %v1444 = vmul.f32 %v1412, %v1441
  %v1445 = vmul.f32 %v1413, %v1441
  %v1446 = vmul.f32 %v1414, %v1441
  %v1447 = vmul.f32 %v1415, %v1441
  %v1448 = vmul.f32 %v1416, %v1441
  %v1449 = vmul.f32 %v1417, %v1441
  %v1450 = vmul.f32 %v1418, %v1441
  %v1451 = vmul.f32 %v1419, %v1441
  %v1452 = vmul.f32 %v1420, %v1441
  %v1453 = vmul.f32 %v1421, %v1441
  %v1454 = vmul.f32 %v1422, %v1441
  %v1455 = vmul.f32 %v1423, %v1441
  %v1456 = vmul.f32 %v1424, %v1441
  %v1457 = vmul.f32 %v1425, %v1441
  %v1458 = vmul.f32 %v1426, %v1441
  %v1459 = vmul.f32 %v1427, %v1441
  %v1460 = vmul.f32 %v1428, %v1441
  %v1461 = vmul.f32 %v1429, %v1441
  %v1462 = vmul.f32 %v1430, %v1441
  %v1463 = vmul.f32 %v1431, %v1441
  %v1464 = vmul.f32 %v1432, %v1441
  %v1465 = vmul.f32 %v1433, %v1441
  %v1466 = vmul.f32 %v1434, %v1441
  %v1467 = vmul.f32 %v1435, %v1441
  %v1468 = vld [vmem:[%s4] sm:$0x1]
  %v1470 = vlaneseq
  %v1471 = vshrl.u32 %v1470, 7
  %v1472 = vsub.s32 0, %v1471
  %v1473 = vrot.slane %v1468, %v1472
  %v1475 = vadd.f32 %v1443, %v1473
  %v1476 = vadd.f32 %v1444, %v1473
  %v1477 = vadd.f32 %v1445, %v1473
  %v1478 = vadd.f32 %v1446, %v1473
  %v1479 = vadd.f32 %v1447, %v1473
  %v1480 = vadd.f32 %v1448, %v1473
  %v1481 = vadd.f32 %v1449, %v1473
  %v1482 = vadd.f32 %v1450, %v1473
  %v1483 = vadd.f32 %v1451, %v1473
  %v1484 = vadd.f32 %v1452, %v1473
  %v1485 = vadd.f32 %v1453, %v1473
  %v1486 = vadd.f32 %v1454, %v1473
  %v1487 = vadd.f32 %v1455, %v1473
  %v1488 = vadd.f32 %v1456, %v1473
  %v1489 = vadd.f32 %v1457, %v1473
  %v1490 = vadd.f32 %v1458, %v1473
  %v1491 = vadd.f32 %v1459, %v1473
  %v1492 = vadd.f32 %v1460, %v1473
  %v1493 = vadd.f32 %v1461, %v1473
  %v1494 = vadd.f32 %v1462, %v1473
  %v1495 = vadd.f32 %v1463, %v1473
  %v1496 = vadd.f32 %v1464, %v1473
  %v1497 = vadd.f32 %v1465, %v1473
  %v1498 = vadd.f32 %v1466, %v1473
  %v1499 = vadd.f32 %v1467, %v1473
  %v1500 = vpack.c.bf16 %v1476, %v1475
  %v1501 = vpack.c.bf16 %v1478, %v1477
  %v1502 = vpack.c.bf16 %v1480, %v1479
  %v1503 = vpack.c.bf16 %v1482, %v1481
  %v1504 = vpack.c.bf16 %v1484, %v1483
  %v1505 = vpack.c.bf16 %v1486, %v1485
  %v1506 = vpack.c.bf16 %v1488, %v1487
  %v1507 = vpack.c.bf16 %v1490, %v1489
  %v1508 = vpack.c.bf16 %v1492, %v1491
  %v1509 = vpack.c.bf16 %v1494, %v1493
  %v1510 = vpack.c.bf16 %v1496, %v1495
  %v1511 = vpack.c.bf16 %v1498, %v1497
  %v1512 = vpack.c.bf16 %v1499, %v1499
  %v1526 = vunpack.c.l.b16 %v1500
  %v1527 = vunpack.c.h.b16 %v1500
  %v1528 = vunpack.c.l.b16 %v1501
  %v1529 = vunpack.c.h.b16 %v1501
  %v1530 = vunpack.c.l.b16 %v1502
  %v1531 = vunpack.c.h.b16 %v1502
  %v1532 = vunpack.c.l.b16 %v1503
  %v1533 = vunpack.c.h.b16 %v1503
  %v1534 = vunpack.c.l.b16 %v1504
  %v1535 = vunpack.c.h.b16 %v1504
  %v1536 = vunpack.c.l.b16 %v1505
  %v1537 = vunpack.c.h.b16 %v1505
  %v1538 = vunpack.c.l.b16 %v1506
  %v1539 = vunpack.c.h.b16 %v1506
  %v1540 = vunpack.c.l.b16 %v1507
  %v1541 = vunpack.c.h.b16 %v1507
  %v1542 = vunpack.c.l.b16 %v1508
  %v1543 = vunpack.c.h.b16 %v1508
  %v1544 = vunpack.c.l.b16 %v1509
  %v1545 = vunpack.c.h.b16 %v1509
  %v1546 = vunpack.c.l.b16 %v1510
  %v1547 = vunpack.c.h.b16 %v1510
  %v1548 = vunpack.c.l.b16 %v1511
  %v1549 = vunpack.c.h.b16 %v1511
  %v1550 = vunpack.c.l.b16 %v1512
  %v1551 = vpack.c.b16 %v1526, %v1526
  %v1552 = vpack.c.b16 %v1527, %v1527
  %v1553 = vpack.c.b16 %v1528, %v1528
  %v1554 = vpack.c.b16 %v1529, %v1529
  %v1555 = vpack.c.b16 %v1530, %v1530
  %v1556 = vpack.c.b16 %v1531, %v1531
  %v1557 = vpack.c.b16 %v1532, %v1532
  %v1558 = vpack.c.b16 %v1533, %v1533
  %v1559 = vpack.c.b16 %v1534, %v1534
  %v1560 = vpack.c.b16 %v1535, %v1535
  %v1561 = vpack.c.b16 %v1536, %v1536
  %v1562 = vpack.c.b16 %v1537, %v1537
  %v1563 = vpack.c.b16 %v1538, %v1538
  %v1564 = vpack.c.b16 %v1539, %v1539
  %v1565 = vpack.c.b16 %v1540, %v1540
  %v1566 = vpack.c.b16 %v1541, %v1541
  %v1567 = vpack.c.b16 %v1542, %v1542
  %v1568 = vpack.c.b16 %v1543, %v1543
  %v1569 = vpack.c.b16 %v1544, %v1544
  %v1570 = vpack.c.b16 %v1545, %v1545
  %v1571 = vpack.c.b16 %v1546, %v1546
  %v1572 = vpack.c.b16 %v1547, %v1547
  %v1573 = vpack.c.b16 %v1548, %v1548
  %v1574 = vpack.c.b16 %v1549, %v1549
  %v1575 = vpack.c.b16 %v1550, %v1550
  %vm1601 = vcmask 257024
  %1602 = vst.msk [vmem:[%s5] sm:$0xf] %vm1601, %v1551
  %1603 = vst.msk [vmem:[%s5 + $0x4] sm:$0xf] %vm1601, %v1552
  %1604 = vst.msk [vmem:[%s5 + $0x8] sm:$0xf] %vm1601, %v1553
  %1605 = vst.msk [vmem:[%s5 + $0xc] sm:$0xf] %vm1601, %v1554
  %1606 = vst.msk [vmem:[%s5 + $0x10] sm:$0xf] %vm1601, %v1555
  %1607 = vst.msk [vmem:[%s5 + $0x14] sm:$0xf] %vm1601, %v1556
  %1608 = vst.msk [vmem:[%s5 + $0x18] sm:$0xf] %vm1601, %v1557
  %1609 = vst.msk [vmem:[%s5 + $0x1c] sm:$0xf] %vm1601, %v1558
  %1610 = vst.msk [vmem:[%s5 + $0x20] sm:$0xf] %vm1601, %v1559
  %1611 = vst.msk [vmem:[%s5 + $0x24] sm:$0xf] %vm1601, %v1560
  %1612 = vst.msk [vmem:[%s5 + $0x28] sm:$0xf] %vm1601, %v1561
  %1613 = vst.msk [vmem:[%s5 + $0x2c] sm:$0xf] %vm1601, %v1562
  %1614 = vst.msk [vmem:[%s5 + $0x30] sm:$0xf] %vm1601, %v1563
  %1615 = vst.msk [vmem:[%s5 + $0x34] sm:$0xf] %vm1601, %v1564
  %1616 = vst.msk [vmem:[%s5 + $0x38] sm:$0xf] %vm1601, %v1565
  %1617 = vst.msk [vmem:[%s5 + $0x3c] sm:$0xf] %vm1601, %v1566
  %1618 = vst.msk [vmem:[%s5 + $0x40] sm:$0xf] %vm1601, %v1567
  %1619 = vst.msk [vmem:[%s5 + $0x44] sm:$0xf] %vm1601, %v1568
  %1620 = vst.msk [vmem:[%s5 + $0x48] sm:$0xf] %vm1601, %v1569
  %1621 = vst.msk [vmem:[%s5 + $0x4c] sm:$0xf] %vm1601, %v1570
  %1622 = vst.msk [vmem:[%s5 + $0x50] sm:$0xf] %vm1601, %v1571
  %1623 = vst.msk [vmem:[%s5 + $0x54] sm:$0xf] %vm1601, %v1572
  %1624 = vst.msk [vmem:[%s5 + $0x58] sm:$0xf] %vm1601, %v1573
  %1625 = vst.msk [vmem:[%s5 + $0x5c] sm:$0xf] %vm1601, %v1574
  %1626 = vst.msk [vmem:[%s5 + $0x60] sm:$0xf] %vm1601, %v1575
  // Predicated region
  $region22: #{dqn_forward.4} parent=0 // pred_check
    _
  $region23: #{dqn_forward.4} parent=0 // pred_check_branch
    %1628 = sbr.rel (0) target = $region25
  $region24: #{dqn_forward.4} parent=0 // pred_region
    _
  $region25: #{dqn_forward.4} parent=0 // pred_fallthru
    _
  // Predicated region
  $region26: #{dqn_forward.4} parent=0 // pred_check
    _
  $region27: #{dqn_forward.4} parent=0 // pred_check_branch
    %1630 = sbr.rel (0) target = $region29
  $region28: #{dqn_forward.4} parent=0 // pred_region
    _
  $region29: #{dqn_forward.4} parent=0 // pred_fallthru
    _

// kernel: dqn_forward.5
$region0: #{dqn_forward.5}
  #allocation0 [shape = 'u32[]', space=smem, size = 0x4, offset = 0x4, fixed_abs, tag = 'smem constant byte address 0x4 - core index']
  #allocation1 [shape = 'u32[144,128]{1,0:T(1,128)}', space=vmem, size = 0x12000, scoped, tag = 'internal scratch']
  %s0 = inlined_call_operand.vmem [shape: bf16[50,512], index: 0, kind: input, shape index: {}]
  %s1 = inlined_call_operand.vmem [shape: bf16[512,64], index: 1, kind: input, shape index: {}]
  %s2 = inlined_call_operand.vmem [shape: f32[1,64], index: 2, kind: input, shape index: {}]
  %s3 = inlined_call_operand.vmem [shape: f32[1,64], index: 3, kind: input, shape index: {}]
  %s4 = inlined_call_operand.vmem [shape: f32[1,64], index: 4, kind: input, shape index: {}]
  %s5 = inlined_call_operand.vmem [shape: bf16[50,64], index: 5, kind: output, shape index: {}]
  %s6 = sld [smem:[#allocation0]]
  $region30: #{dqn_forward.5} parent=0
    _
  %s8 = ssub.s32 1, %s6
  %s9 = scalar_select 0, %s8, %s6
  // Predicated region
  $region2: #{dqn_forward.5} parent=0 // pred_check
    _
  $region3: #{dqn_forward.5} parent=0 // pred_check_branch
    %11 = sbr.rel (0) target = $region5
  $region4: #{dqn_forward.5} parent=0 // pred_region
    _
  $region5: #{dqn_forward.5} parent=0 // pred_fallthru
    _
  // Predicated region
  $region6: #{dqn_forward.5} parent=0 // pred_check
    _
  $region7: #{dqn_forward.5} parent=0 // pred_check_branch
    %13 = sbr.rel (0) target = $region9
  $region8: #{dqn_forward.5} parent=0 // pred_region
    _
  $region9: #{dqn_forward.5} parent=0 // pred_fallthru
    _
  // Predicated region
  $region10: #{dqn_forward.5} parent=0 // pred_check
    _
  $region11: #{dqn_forward.5} parent=0 // pred_check_branch
    %15 = sbr.rel (0) target = $region13
  $region12: #{dqn_forward.5} parent=0 // pred_region
    _
  $region13: #{dqn_forward.5} parent=0 // pred_fallthru
    _
  // Predicated region
  $region14: #{dqn_forward.5} parent=0 // pred_check
    _
  $region15: #{dqn_forward.5} parent=0 // pred_check_branch
    %17 = sbr.rel (0) target = $region17
  $region16: #{dqn_forward.5} parent=0 // pred_region
    _
  $region17: #{dqn_forward.5} parent=0 // pred_fallthru
    _
  // Predicated region
  $region18: #{dqn_forward.5} parent=0 // pred_check
    _
  $region19: #{dqn_forward.5} parent=0 // pred_check_branch
    %19 = sbr.rel (0) target = $region21
  $region20: #{dqn_forward.5} parent=0 // pred_region
    _
  $region21: #{dqn_forward.5} parent=0 // pred_fallthru
    _
  %v21 = vld [vmem:[%s0] sm:$0xff]
  %v22 = vld [vmem:[%s0 + $0x8] sm:$0xff]
  %v23 = vld [vmem:[%s0 + $0x10] sm:$0xff]
  %v24 = vld [vmem:[%s0 + $0x18] sm:$0xff]
  %v25 = vld [vmem:[%s0 + $0x20] sm:$0xff]
  %v26 = vld [vmem:[%s0 + $0x28] sm:$0xff]
  %v27 = vld [vmem:[%s0 + $0x30] sm:$0xff]
  %v28 = vld [vmem:[%s0 + $0x38] sm:$0xff]
  %v29 = vld [vmem:[%s0 + $0x40] sm:$0xff]
  %v30 = vld [vmem:[%s0 + $0x48] sm:$0xff]
  %v31 = vld [vmem:[%s0 + $0x50] sm:$0xff]
  %v32 = vld [vmem:[%s0 + $0x58] sm:$0xff]
  %v33 = vld [vmem:[%s0 + $0x60] sm:$0x11]
  %v34 = vld [vmem:[%s0 + $0x68] sm:$0x11]
  %v35 = vld [vmem:[%s1] sm:$0xf]
  %v36 = vld [vmem:[%s1 + $0x4] sm:$0xf]
  %v37 = vld [vmem:[%s1 + $0x8] sm:$0xf]
  %v38 = vld [vmem:[%s1 + $0xc] sm:$0xf]
  %v39 = vld [vmem:[%s1 + $0x10] sm:$0xf]
  %v40 = vld [vmem:[%s1 + $0x14] sm:$0xf]
  %v41 = vld [vmem:[%s1 + $0x18] sm:$0xf]
  %v42 = vld [vmem:[%s1 + $0x1c] sm:$0xf]
  %v43 = vld [vmem:[%s1 + $0x20] sm:$0xf]
  %v44 = vld [vmem:[%s1 + $0x24] sm:$0xf]
  %v45 = vld [vmem:[%s1 + $0x28] sm:$0xf]
  %v46 = vld [vmem:[%s1 + $0x2c] sm:$0xf]
  %v47 = vld [vmem:[%s1 + $0x30] sm:$0xf]
  %v48 = vld [vmem:[%s1 + $0x34] sm:$0xf]
  %v49 = vld [vmem:[%s1 + $0x38] sm:$0xf]
  %v50 = vld [vmem:[%s1 + $0x3c] sm:$0xf]
  %v51 = vld [vmem:[%s1 + $0x40] sm:$0xf]
  %v52 = vld [vmem:[%s1 + $0x44] sm:$0xf]
  %v53 = vld [vmem:[%s1 + $0x48] sm:$0xf]
  %v54 = vld [vmem:[%s1 + $0x4c] sm:$0xf]
  %v55 = vld [vmem:[%s1 + $0x50] sm:$0xf]
  %v56 = vld [vmem:[%s1 + $0x54] sm:$0xf]
  %v57 = vld [vmem:[%s1 + $0x58] sm:$0xf]
  %v58 = vld [vmem:[%s1 + $0x5c] sm:$0xf]
  %v59 = vld [vmem:[%s1 + $0x60] sm:$0xf]
  %v60 = vld [vmem:[%s1 + $0x64] sm:$0xf]
  %v61 = vld [vmem:[%s1 + $0x68] sm:$0xf]
  %v62 = vld [vmem:[%s1 + $0x6c] sm:$0xf]
  %v63 = vld [vmem:[%s1 + $0x70] sm:$0xf]
  %v64 = vld [vmem:[%s1 + $0x74] sm:$0xf]
  %v65 = vld [vmem:[%s1 + $0x78] sm:$0xf]
  %v66 = vld [vmem:[%s1 + $0x7c] sm:$0xf]
  %v67 = vld [vmem:[%s1 + $0x80] sm:$0xf]
  %v68 = vld [vmem:[%s1 + $0x84] sm:$0xf]
  %v69 = vld [vmem:[%s1 + $0x88] sm:$0xf]
  %v70 = vld [vmem:[%s1 + $0x8c] sm:$0xf]
  %v71 = vld [vmem:[%s1 + $0x90] sm:$0xf]
  %v72 = vld [vmem:[%s1 + $0x94] sm:$0xf]
  %v73 = vld [vmem:[%s1 + $0x98] sm:$0xf]
  %v74 = vld [vmem:[%s1 + $0x9c] sm:$0xf]
  %v75 = vld [vmem:[%s1 + $0xa0] sm:$0xf]
  %v76 = vld [vmem:[%s1 + $0xa4] sm:$0xf]
  %v77 = vld [vmem:[%s1 + $0xa8] sm:$0xf]
  %v78 = vld [vmem:[%s1 + $0xac] sm:$0xf]
  %v79 = vld [vmem:[%s1 + $0xb0] sm:$0xf]
  %v80 = vld [vmem:[%s1 + $0xb4] sm:$0xf]
  %v81 = vld [vmem:[%s1 + $0xb8] sm:$0xf]
  %v82 = vld [vmem:[%s1 + $0xbc] sm:$0xf]
  %v83 = vld [vmem:[%s1 + $0xc0] sm:$0xf]
  %v84 = vld [vmem:[%s1 + $0xc4] sm:$0xf]
  %v85 = vld [vmem:[%s1 + $0xc8] sm:$0xf]
  %v86 = vld [vmem:[%s1 + $0xcc] sm:$0xf]
  %v87 = vld [vmem:[%s1 + $0xd0] sm:$0xf]
  %v88 = vld [vmem:[%s1 + $0xd4] sm:$0xf]
  %v89 = vld [vmem:[%s1 + $0xd8] sm:$0xf]
  %v90 = vld [vmem:[%s1 + $0xdc] sm:$0xf]
  %v91 = vld [vmem:[%s1 + $0xe0] sm:$0xf]
  %v92 = vld [vmem:[%s1 + $0xe4] sm:$0xf]
  %v93 = vld [vmem:[%s1 + $0xe8] sm:$0xf]
  %v94 = vld [vmem:[%s1 + $0xec] sm:$0xf]
  %v95 = vld [vmem:[%s1 + $0xf0] sm:$0xf]
  %v96 = vld [vmem:[%s1 + $0xf4] sm:$0xf]
  %v97 = vld [vmem:[%s1 + $0xf8] sm:$0xf]
  %v98 = vld [vmem:[%s1 + $0xfc] sm:$0xf]
  %v99 = vld [vmem:[%s2] sm:$0x1]
  %v101 = vlaneseq
  %v102 = vshrl.u32 %v101, 7
  %v103 = vsub.s32 0, %v102
  %v104 = vrot.slane %v99, %v103
  %v120 = vunpack.c.l.b16 %v21
  %v121 = vunpack.c.h.b16 %v21
  %v122 = vunpack.c.l.b16 %v22
  %v123 = vunpack.c.h.b16 %v22
  %v124 = vunpack.c.l.b16 %v23
  %v125 = vunpack.c.h.b16 %v23
  %v126 = vunpack.c.l.b16 %v24
  %v127 = vunpack.c.h.b16 %v24
  %v128 = vunpack.c.l.b16 %v25
  %v129 = vunpack.c.h.b16 %v25
  %v130 = vunpack.c.l.b16 %v26
  %v131 = vunpack.c.h.b16 %v26
  %v132 = vunpack.c.l.b16 %v27
  %v133 = vunpack.c.h.b16 %v27
  %v134 = vunpack.c.l.b16 %v28
  %v135 = vunpack.c.h.b16 %v28
  %v136 = vunpack.c.l.b16 %v29
  %v137 = vunpack.c.h.b16 %v29
  %v138 = vunpack.c.l.b16 %v30
  %v139 = vunpack.c.h.b16 %v30
  %v140 = vunpack.c.l.b16 %v31
  %v141 = vunpack.c.h.b16 %v31
  %v142 = vunpack.c.l.b16 %v32
  %v143 = vunpack.c.h.b16 %v32
  %v144 = vunpack.c.l.b16 %v33
  %v145 = vunpack.c.h.b16 %v33
  %v146 = vunpack.c.l.b16 %v34
  %v147 = vunpack.c.h.b16 %v34
  %v148 = vpack.c.b16 %v124, %v120
  %v149 = vpack.c.b16 %v125, %v121
  %v150 = vpack.c.b16 %v126, %v122
  %v151 = vpack.c.b16 %v127, %v123
  %v152 = vpack.c.b16 %v132, %v128
  %v153 = vpack.c.b16 %v133, %v129
  %v154 = vpack.c.b16 %v134, %v130
  %v155 = vpack.c.b16 %v135, %v131
  %v156 = vpack.c.b16 %v140, %v136
  %v157 = vpack.c.b16 %v141, %v137
  %v158 = vpack.c.b16 %v142, %v138
  %v159 = vpack.c.b16 %v143, %v139
  %v160 = vpack.c.b16 %v144, %v144
  %v161 = vpack.c.b16 %v145, %v145
  %v162 = vpack.c.b16 %v146, %v146
  %v163 = vpack.c.b16 %v147, %v147
  %v244 = vunpack.c.l.b16 %v35
  %v245 = vunpack.c.l.b16 %v36
  %v246 = vunpack.c.l.b16 %v37
  %v247 = vunpack.c.l.b16 %v38
  %v248 = vunpack.c.l.b16 %v39
  %v249 = vunpack.c.l.b16 %v40
  %v250 = vunpack.c.l.b16 %v41
  %v251 = vunpack.c.l.b16 %v42
  %v252 = vunpack.c.l.b16 %v43
  %v253 = vunpack.c.l.b16 %v44
  %v254 = vunpack.c.l.b16 %v45
  %v255 = vunpack.c.l.b16 %v46
  %v256 = vunpack.c.l.b16 %v47
  %v257 = vunpack.c.l.b16 %v48
  %v258 = vunpack.c.l.b16 %v49
  %v259 = vunpack.c.l.b16 %v50
  %v260 = vunpack.c.l.b16 %v51
  %v261 = vunpack.c.l.b16 %v52
  %v262 = vunpack.c.l.b16 %v53
  %v263 = vunpack.c.l.b16 %v54
  %v264 = vunpack.c.l.b16 %v55
  %v265 = vunpack.c.l.b16 %v56
  %v266 = vunpack.c.l.b16 %v57
  %v267 = vunpack.c.l.b16 %v58
  %v268 = vunpack.c.l.b16 %v59
  %v269 = vunpack.c.l.b16 %v60
  %v270 = vunpack.c.l.b16 %v61
  %v271 = vunpack.c.l.b16 %v62
  %v272 = vunpack.c.l.b16 %v63
  %v273 = vunpack.c.l.b16 %v64
  %v274 = vunpack.c.l.b16 %v65
  %v275 = vunpack.c.l.b16 %v66
  %v276 = vunpack.c.l.b16 %v67
  %v277 = vunpack.c.l.b16 %v68
  %v278 = vunpack.c.l.b16 %v69
  %v279 = vunpack.c.l.b16 %v70
  %v280 = vunpack.c.l.b16 %v71
  %v281 = vunpack.c.l.b16 %v72
  %v282 = vunpack.c.l.b16 %v73
  %v283 = vunpack.c.l.b16 %v74
  %v284 = vunpack.c.l.b16 %v75
  %v285 = vunpack.c.l.b16 %v76
  %v286 = vunpack.c.l.b16 %v77
  %v287 = vunpack.c.l.b16 %v78
  %v288 = vunpack.c.l.b16 %v79
  %v289 = vunpack.c.l.b16 %v80
  %v290 = vunpack.c.l.b16 %v81
  %v291 = vunpack.c.l.b16 %v82
  %v292 = vunpack.c.l.b16 %v83
  %v293 = vunpack.c.l.b16 %v84
  %v294 = vunpack.c.l.b16 %v85
  %v295 = vunpack.c.l.b16 %v86
  %v296 = vunpack.c.l.b16 %v87
  %v297 = vunpack.c.l.b16 %v88
  %v298 = vunpack.c.l.b16 %v89
  %v299 = vunpack.c.l.b16 %v90
  %v300 = vunpack.c.l.b16 %v91
  %v301 = vunpack.c.l.b16 %v92
  %v302 = vunpack.c.l.b16 %v93
  %v303 = vunpack.c.l.b16 %v94
  %v304 = vunpack.c.l.b16 %v95
  %v305 = vunpack.c.l.b16 %v96
  %v306 = vunpack.c.l.b16 %v97
  %v307 = vunpack.c.l.b16 %v98
  %v308 = vpack.c.b16 %v245, %v244
  %v309 = vpack.c.b16 %v247, %v246
  %v310 = vpack.c.b16 %v249, %v248
  %v311 = vpack.c.b16 %v251, %v250
  %v312 = vpack.c.b16 %v253, %v252
  %v313 = vpack.c.b16 %v255, %v254
  %v314 = vpack.c.b16 %v257, %v256
  %v315 = vpack.c.b16 %v259, %v258
  %v316 = vpack.c.b16 %v261, %v260
  %v317 = vpack.c.b16 %v263, %v262
  %v318 = vpack.c.b16 %v265, %v264
  %v319 = vpack.c.b16 %v267, %v266
  %v320 = vpack.c.b16 %v269, %v268
  %v321 = vpack.c.b16 %v271, %v270
  %v322 = vpack.c.b16 %v273, %v272
  %v323 = vpack.c.b16 %v275, %v274
  %v324 = vpack.c.b16 %v277, %v276
  %v325 = vpack.c.b16 %v279, %v278
  %v326 = vpack.c.b16 %v281, %v280
  %v327 = vpack.c.b16 %v283, %v282
  %v328 = vpack.c.b16 %v285, %v284
  %v329 = vpack.c.b16 %v287, %v286
  %v330 = vpack.c.b16 %v289, %v288
  %v331 = vpack.c.b16 %v291, %v290
  %v332 = vpack.c.b16 %v293, %v292
  %v333 = vpack.c.b16 %v295, %v294
  %v334 = vpack.c.b16 %v297, %v296
  %v335 = vpack.c.b16 %v299, %v298
  %v336 = vpack.c.b16 %v301, %v300
  %v337 = vpack.c.b16 %v303, %v302
  %v338 = vpack.c.b16 %v305, %v304
  %v339 = vpack.c.b16 %v307, %v306
  %372 = vmatprep.subr.bf16.mxu0 0
  %373 = vmatpush1.bf16.msra.mxu0 %v308
  %374 = vmatprep.subr.bf16.mxu0 0
  %375 = vmatpush1.bf16.msra.mxu0 %v309
  %376 = vmatprep.subr.bf16.mxu0 0
  %377 = vmatpush1.bf16.msra.mxu0 %v310
  %378 = vmatprep.subr.bf16.mxu0 0
  %379 = vmatpush1.bf16.msra.mxu0 %v311
  %380 = vmatprep.subr.bf16.mxu0 0
  %381 = vmatpush1.bf16.msra.mxu0 %v312
  %382 = vmatprep.subr.bf16.mxu0 0
  %383 = vmatpush1.bf16.msra.mxu0 %v313
  %384 = vmatprep.subr.bf16.mxu0 0
  %385 = vmatpush1.bf16.msra.mxu0 %v314
  %386 = vmatprep.subr.bf16.mxu0 0
  %387 = vmatpush1.bf16.msra.mxu0 %v315
  %388 = vmatprep.subr.bf16.mxu0 0
  %389 = vmatpush1.bf16.msra.mxu0 %v316
  %390 = vmatprep.subr.bf16.mxu0 0
  %391 = vmatpush1.bf16.msra.mxu0 %v317
  %392 = vmatprep.subr.bf16.mxu0 0
  %393 = vmatpush1.bf16.msra.mxu0 %v318
  %394 = vmatprep.subr.bf16.mxu0 0
  %395 = vmatpush1.bf16.msra.mxu0 %v319
  %396 = vmatprep.subr.bf16.mxu0 0
  %397 = vmatpush1.bf16.msra.mxu0 %v320
  %398 = vmatprep.subr.bf16.mxu0 0
  %399 = vmatpush1.bf16.msra.mxu0 %v321
  %400 = vmatprep.subr.bf16.mxu0 0
  %401 = vmatpush1.bf16.msra.mxu0 %v322
  %402 = vmatprep.subr.bf16.mxu0 0
  %403 = vmatpush1.bf16.msra.mxu0 %v323
  %404 = vmatprep.mubr.bf16.mxu0 %v149
  %405 = vmatmul.mubr.bf16.gmra.mrb[0].mxu0 %v148
  %v406 = vpop.f32.mrb[0].mxu0
  %v407 = vadd.f32 %v104, %v406
  %v408 = vpop.f32.mrb[0].mxu0
  %v409 = vpop.f32.mrb[0].mxu0
  %v410 = vadd.f32 %v104, %v409
  %v411 = vpop.f32.mrb[0].mxu0
  %412 = vmatprep.mubr.bf16.mxu0 %v153
  %413 = vmatmul.mubr.bf16.gmra.mrb[0].mxu0 %v152
  %v414 = vpop.f32.mrb[0].mxu0
  %v415 = vadd.f32 %v104, %v414
  %v416 = vpop.f32.mrb[0].mxu0
  %v417 = vpop.f32.mrb[0].mxu0
  %v418 = vadd.f32 %v104, %v417
  %v419 = vpop.f32.mrb[0].mxu0
  %420 = vmatprep.mubr.bf16.mxu0 %v157
  %421 = vmatmul.mubr.bf16.gmra.mrb[0].mxu0 %v156
  %v422 = vpop.f32.mrb[0].mxu0
  %v423 = vadd.f32 %v104, %v422
  %v424 = vpop.f32.mrb[0].mxu0
  %v425 = vpop.f32.mrb[0].mxu0
  %v426 = vadd.f32 %v104, %v425
  %v427 = vpop.f32.mrb[0].mxu0
  %428 = vmatprep.mubr.bf16.mxu0 %v161
  %429 = vmatmul.mubr.bf16.gmra.mrb[0].mxu0 %v160
  %v430 = vpop.f32.mrb[0].mxu0
  %v431 = vadd.f32 %v104, %v430
  %v432 = vpop.f32.mrb[0].mxu0
  %v433 = vpop.f32.mrb[0].mxu0
  %v434 = vpop.f32.mrb[0].mxu0
  %435 = vdwg.mxu0
  %436 = vmatprep.subr.bf16.mxu0 0
  %437 = vmatpush1.bf16.msra.mxu0 %v324
  %438 = vmatprep.subr.bf16.mxu0 0
  %439 = vmatpush1.bf16.msra.mxu0 %v325
  %440 = vmatprep.subr.bf16.mxu0 0
  %441 = vmatpush1.bf16.msra.mxu0 %v326
  %442 = vmatprep.subr.bf16.mxu0 0
  %443 = vmatpush1.bf16.msra.mxu0 %v327
  %444 = vmatprep.subr.bf16.mxu0 0
  %445 = vmatpush1.bf16.msra.mxu0 %v328
  %446 = vmatprep.subr.bf16.mxu0 0
  %447 = vmatpush1.bf16.msra.mxu0 %v329
  %448 = vmatprep.subr.bf16.mxu0 0
  %449 = vmatpush1.bf16.msra.mxu0 %v330
  %450 = vmatprep.subr.bf16.mxu0 0
  %451 = vmatpush1.bf16.msra.mxu0 %v331
  %452 = vmatprep.subr.bf16.mxu0 0
  %453 = vmatpush1.bf16.msra.mxu0 %v332
  %454 = vmatprep.subr.bf16.mxu0 0
  %455 = vmatpush1.bf16.msra.mxu0 %v333
  %456 = vmatprep.subr.bf16.mxu0 0
  %457 = vmatpush1.bf16.msra.mxu0 %v334
  %458 = vmatprep.subr.bf16.mxu0 0
  %459 = vmatpush1.bf16.msra.mxu0 %v335
  %460 = vmatprep.subr.bf16.mxu0 0
  %461 = vmatpush1.bf16.msra.mxu0 %v336
  %462 = vmatprep.subr.bf16.mxu0 0
  %463 = vmatpush1.bf16.msra.mxu0 %v337
  %464 = vmatprep.subr.bf16.mxu0 0
  %465 = vmatpush1.bf16.msra.mxu0 %v338
  %466 = vmatprep.subr.bf16.mxu0 0
  %467 = vmatpush1.bf16.msra.mxu0 %v339
  %468 = vmatprep.mubr.bf16.mxu0 %v151
  %469 = vmatmul.mubr.bf16.gmra.mrb[0].mxu0 %v150
  %v470 = vpop.f32.mrb[0].mxu0
  %v471 = vadd.f32 %v407, %v470
  %v472 = vpop.f32.mrb[0].mxu0
  %v473 = vpop.f32.mrb[0].mxu0
  %v474 = vadd.f32 %v410, %v473
  %v475 = vpop.f32.mrb[0].mxu0
  %476 = vmatprep.mubr.bf16.mxu0 %v155
  %477 = vmatmul.mubr.bf16.gmra.mrb[0].mxu0 %v154
  %v478 = vpop.f32.mrb[0].mxu0
  %v479 = vadd.f32 %v415, %v478
  %v480 = vpop.f32.mrb[0].mxu0
  %v481 = vpop.f32.mrb[0].mxu0
  %v482 = vadd.f32 %v418, %v481
  %v483 = vpop.f32.mrb[0].mxu0
  %484 = vmatprep.mubr.bf16.mxu0 %v159
  %485 = vmatmul.mubr.bf16.gmra.mrb[0].mxu0 %v158
  %v486 = vpop.f32.mrb[0].mxu0
  %v487 = vadd.f32 %v423, %v486
  %v488 = vpop.f32.mrb[0].mxu0
  %v489 = vpop.f32.mrb[0].mxu0
  %v490 = vadd.f32 %v426, %v489
  %v491 = vpop.f32.mrb[0].mxu0
  %492 = vmatprep.mubr.bf16.mxu0 %v163
  %493 = vmatmul.mubr.bf16.gmra.mrb[0].mxu0 %v162
  %v494 = vpop.f32.mrb[0].mxu0
  %v495 = vadd.f32 %v431, %v494
  %v496 = vpop.f32.mrb[0].mxu0
  %v497 = vpop.f32.mrb[0].mxu0
  %v498 = vpop.f32.mrb[0].mxu0
  %499 = vdwg.mxu0
  %v500 = vmax.f32 %v471, 0.0
  %v501 = vmax.f32 %v474, 0.0
  %v502 = vmax.f32 %v479, 0.0
  %v503 = vmax.f32 %v482, 0.0
  %v504 = vmax.f32 %v487, 0.0
  %v505 = vmax.f32 %v490, 0.0
  %v506 = vmax.f32 %v495, 0.0
  %v507 = vld [vmem:[%s3] sm:$0x1]
  %v509 = vlaneseq
  %v510 = vshrl.u32 %v509, 7
  %v511 = vsub.s32 0, %v510
  %v512 = vrot.slane %v507, %v511
  %v514 = vmul.f32 %v500, %v512
  %v515 = vmul.f32 %v501, %v512
  %v516 = vmul.f32 %v502, %v512
  %v517 = vmul.f32 %v503, %v512
  %v518 = vmul.f32 %v504, %v512
  %v519 = vmul.f32 %v505, %v512
  %v520 = vmul.f32 %v506, %v512
  %v521 = vld [vmem:[%s4] sm:$0x1]
  %v523 = vlaneseq
  %v524 = vshrl.u32 %v523, 7
  %v525 = vsub.s32 0, %v524
  %v526 = vrot.slane %v521, %v525
  %v528 = vadd.f32 %v514, %v526
  %v529 = vadd.f32 %v515, %v526
  %v530 = vadd.f32 %v516, %v526
  %v531 = vadd.f32 %v517, %v526
  %v532 = vadd.f32 %v518, %v526
  %v533 = vadd.f32 %v519, %v526
  %v534 = vadd.f32 %v520, %v526
  %v535 = vpack.c.bf16 %v529, %v528
  %v536 = vpack.c.bf16 %v531, %v530
  %v537 = vpack.c.bf16 %v533, %v532
  %v538 = vpack.c.bf16 %v534, %v534
  %v543 = vunpack.c.l.b16 %v535
  %v544 = vunpack.c.h.b16 %v535
  %v545 = vunpack.c.l.b16 %v536
  %v546 = vunpack.c.h.b16 %v536
  %v547 = vunpack.c.l.b16 %v537
  %v548 = vunpack.c.h.b16 %v537
  %v549 = vunpack.c.l.b16 %v538
  %v550 = vpack.c.b16 %v543, %v543
  %v551 = vpack.c.b16 %v544, %v544
  %v552 = vpack.c.b16 %v545, %v545
  %v553 = vpack.c.b16 %v546, %v546
  %v554 = vpack.c.b16 %v547, %v547
  %v555 = vpack.c.b16 %v548, %v548
  %v556 = vpack.c.b16 %v549, %v549
  %vm564 = vcmask 519168
  %565 = vst.msk [vmem:[%s5] sm:$0xf] %vm564, %v550
  %566 = vst.msk [vmem:[%s5 + $0x4] sm:$0xf] %vm564, %v551
  %567 = vst.msk [vmem:[%s5 + $0x8] sm:$0xf] %vm564, %v552
  %568 = vst.msk [vmem:[%s5 + $0xc] sm:$0xf] %vm564, %v553
  %569 = vst.msk [vmem:[%s5 + $0x10] sm:$0xf] %vm564, %v554
  %570 = vst.msk [vmem:[%s5 + $0x14] sm:$0xf] %vm564, %v555
  %vm571 = vcmask 516096
  %572 = vst.msk [vmem:[%s5 + $0x18] sm:$0x1] %vm571, %v556
  // Predicated region
  $region22: #{dqn_forward.5} parent=0 // pred_check
    _
  $region23: #{dqn_forward.5} parent=0 // pred_check_branch
    %574 = sbr.rel (0) target = $region25
  $region24: #{dqn_forward.5} parent=0 // pred_region
    _
  $region25: #{dqn_forward.5} parent=0 // pred_fallthru
    _
  // Predicated region
  $region26: #{dqn_forward.5} parent=0 // pred_check
    _
  $region27: #{dqn_forward.5} parent=0 // pred_check_branch
    %576 = sbr.rel (0) target = $region29
  $region28: #{dqn_forward.5} parent=0 // pred_region
    _
  $region29: #{dqn_forward.5} parent=0 // pred_fallthru
    _

// kernel: dqn_forward.6
$region0: #{dqn_forward.6}
  #allocation0 [shape = 'u32[]', space=smem, size = 0x4, offset = 0x4, fixed_abs, tag = 'smem constant byte address 0x4 - core index']
  #allocation1 [shape = 'u32[144,128]{1,0:T(1,128)}', space=vmem, size = 0x12000, scoped, tag = 'internal scratch']
  %s0 = inlined_call_operand.vmem [shape: bf16[50,576], index: 0, kind: input, shape index: {}]
  %s1 = inlined_call_operand.vmem [shape: bf16[576,64], index: 1, kind: input, shape index: {}]
  %s2 = inlined_call_operand.vmem [shape: f32[1,64], index: 2, kind: input, shape index: {}]
  %s3 = inlined_call_operand.vmem [shape: f32[1,64], index: 3, kind: input, shape index: {}]
  %s4 = inlined_call_operand.vmem [shape: f32[1,64], index: 4, kind: input, shape index: {}]
  %s5 = inlined_call_operand.vmem [shape: bf16[50,64], index: 5, kind: output, shape index: {}]
  %s6 = sld [smem:[#allocation0]]
  $region30: #{dqn_forward.6} parent=0
    _
  %s8 = ssub.s32 1, %s6
  %s9 = scalar_select 0, %s8, %s6
  // Predicated region
  $region2: #{dqn_forward.6} parent=0 // pred_check
    _
  $region3: #{dqn_forward.6} parent=0 // pred_check_branch
    %11 = sbr.rel (0) target = $region5
  $region4: #{dqn_forward.6} parent=0 // pred_region
    _
  $region5: #{dqn_forward.6} parent=0 // pred_fallthru
    _
  // Predicated region
  $region6: #{dqn_forward.6} parent=0 // pred_check
    _
  $region7: #{dqn_forward.6} parent=0 // pred_check_branch
    %13 = sbr.rel (0) target = $region9
  $region8: #{dqn_forward.6} parent=0 // pred_region
    _
  $region9: #{dqn_forward.6} parent=0 // pred_fallthru
    _
  // Predicated region
  $region10: #{dqn_forward.6} parent=0 // pred_check
    _
  $region11: #{dqn_forward.6} parent=0 // pred_check_branch
    %15 = sbr.rel (0) target = $region13
  $region12: #{dqn_forward.6} parent=0 // pred_region
    _
  $region13: #{dqn_forward.6} parent=0 // pred_fallthru
    _
  // Predicated region
  $region14: #{dqn_forward.6} parent=0 // pred_check
    _
  $region15: #{dqn_forward.6} parent=0 // pred_check_branch
    %17 = sbr.rel (0) target = $region17
  $region16: #{dqn_forward.6} parent=0 // pred_region
    _
  $region17: #{dqn_forward.6} parent=0 // pred_fallthru
    _
  // Predicated region
  $region18: #{dqn_forward.6} parent=0 // pred_check
    _
  $region19: #{dqn_forward.6} parent=0 // pred_check_branch
    %19 = sbr.rel (0) target = $region21
  $region20: #{dqn_forward.6} parent=0 // pred_region
    _
  $region21: #{dqn_forward.6} parent=0 // pred_fallthru
    _
  %v21 = vld [vmem:[%s0] sm:$0xff]
  %v22 = vld [vmem:[%s0 + $0x8] sm:$0xff]
  %v23 = vld [vmem:[%s0 + $0x10] sm:$0xf]
  %v24 = vld [vmem:[%s0 + $0x14] sm:$0xff]
  %v25 = vld [vmem:[%s0 + $0x1c] sm:$0xff]
  %v26 = vld [vmem:[%s0 + $0x24] sm:$0xf]
  %v27 = vld [vmem:[%s0 + $0x28] sm:$0xff]
  %v28 = vld [vmem:[%s0 + $0x30] sm:$0xff]
  %v29 = vld [vmem:[%s0 + $0x38] sm:$0xf]
  %v30 = vld [vmem:[%s0 + $0x3c] sm:$0xff]
  %v31 = vld [vmem:[%s0 + $0x44] sm:$0xff]
  %v32 = vld [vmem:[%s0 + $0x4c] sm:$0xf]
  %v33 = vld [vmem:[%s0 + $0x50] sm:$0xff]
  %v34 = vld [vmem:[%s0 + $0x58] sm:$0xff]
  %v35 = vld [vmem:[%s0 + $0x60] sm:$0xf]
  %v36 = vld [vmem:[%s0 + $0x64] sm:$0xff]
  %v37 = vld [vmem:[%s0 + $0x6c] sm:$0xff]
  %v38 = vld [vmem:[%s0 + $0x74] sm:$0xf]
  %v39 = vld [vmem:[%s0 + $0x78] sm:$0x11]
  %v40 = vld [vmem:[%s0 + $0x80] sm:$0x11]
  %v41 = vld [vmem:[%s0 + $0x88] sm:$0x1]
  %v42 = vld [vmem:[%s1] sm:$0xf]
  %v43 = vld [vmem:[%s1 + $0x4] sm:$0xf]
  %v44 = vld [vmem:[%s1 + $0x8] sm:$0xf]
  %v45 = vld [vmem:[%s1 + $0xc] sm:$0xf]
  %v46 = vld [vmem:[%s1 + $0x10] sm:$0xf]
  %v47 = vld [vmem:[%s1 + $0x14] sm:$0xf]
  %v48 = vld [vmem:[%s1 + $0x18] sm:$0xf]
  %v49 = vld [vmem:[%s1 + $0x1c] sm:$0xf]
  %v50 = vld [vmem:[%s1 + $0x20] sm:$0xf]
  %v51 = vld [vmem:[%s1 + $0x24] sm:$0xf]
  %v52 = vld [vmem:[%s1 + $0x28] sm:$0xf]
  %v53 = vld [vmem:[%s1 + $0x2c] sm:$0xf]
  %v54 = vld [vmem:[%s1 + $0x30] sm:$0xf]
  %v55 = vld [vmem:[%s1 + $0x34] sm:$0xf]
  %v56 = vld [vmem:[%s1 + $0x38] sm:$0xf]
  %v57 = vld [vmem:[%s1 + $0x3c] sm:$0xf]
  %v58 = vld [vmem:[%s1 + $0x40] sm:$0xf]
  %v59 = vld [vmem:[%s1 + $0x44] sm:$0xf]
  %v60 = vld [vmem:[%s1 + $0x48] sm:$0xf]
  %v61 = vld [vmem:[%s1 + $0x4c] sm:$0xf]
  %v62 = vld [vmem:[%s1 + $0x50] sm:$0xf]
  %v63 = vld [vmem:[%s1 + $0x54] sm:$0xf]
  %v64 = vld [vmem:[%s1 + $0x58] sm:$0xf]
  %v65 = vld [vmem:[%s1 + $0x5c] sm:$0xf]
  %v66 = vld [vmem:[%s1 + $0x60] sm:$0xf]
  %v67 = vld [vmem:[%s1 + $0x64] sm:$0xf]
  %v68 = vld [vmem:[%s1 + $0x68] sm:$0xf]
  %v69 = vld [vmem:[%s1 + $0x6c] sm:$0xf]
  %v70 = vld [vmem:[%s1 + $0x70] sm:$0xf]
  %v71 = vld [vmem:[%s1 + $0x74] sm:$0xf]
  %v72 = vld [vmem:[%s1 + $0x78] sm:$0xf]
  %v73 = vld [vmem:[%s1 + $0x7c] sm:$0xf]
  %v74 = vld [vmem:[%s1 + $0x80] sm:$0xf]
  %v75 = vld [vmem:[%s1 + $0x84] sm:$0xf]
  %v76 = vld [vmem:[%s1 + $0x88] sm:$0xf]
  %v77 = vld [vmem:[%s1 + $0x8c] sm:$0xf]
  %v78 = vld [vmem:[%s1 + $0x90] sm:$0xf]
  %v79 = vld [vmem:[%s1 + $0x94] sm:$0xf]
  %v80 = vld [vmem:[%s1 + $0x98] sm:$0xf]
  %v81 = vld [vmem:[%s1 + $0x9c] sm:$0xf]
  %v82 = vld [vmem:[%s1 + $0xa0] sm:$0xf]
  %v83 = vld [vmem:[%s1 + $0xa4] sm:$0xf]
  %v84 = vld [vmem:[%s1 + $0xa8] sm:$0xf]
  %v85 = vld [vmem:[%s1 + $0xac] sm:$0xf]
  %v86 = vld [vmem:[%s1 + $0xb0] sm:$0xf]
  %v87 = vld [vmem:[%s1 + $0xb4] sm:$0xf]
  %v88 = vld [vmem:[%s1 + $0xb8] sm:$0xf]
  %v89 = vld [vmem:[%s1 + $0xbc] sm:$0xf]
  %v90 = vld [vmem:[%s1 + $0xc0] sm:$0xf]
  %v91 = vld [vmem:[%s1 + $0xc4] sm:$0xf]
  %v92 = vld [vmem:[%s1 + $0xc8] sm:$0xf]
  %v93 = vld [vmem:[%s1 + $0xcc] sm:$0xf]
  %v94 = vld [vmem:[%s1 + $0xd0] sm:$0xf]
  %v95 = vld [vmem:[%s1 + $0xd4] sm:$0xf]
  %v96 = vld [vmem:[%s1 + $0xd8] sm:$0xf]
  %v97 = vld [vmem:[%s1 + $0xdc] sm:$0xf]
  %v98 = vld [vmem:[%s1 + $0xe0] sm:$0xf]
  %v99 = vld [vmem:[%s1 + $0xe4] sm:$0xf]
  %v100 = vld [vmem:[%s1 + $0xe8] sm:$0xf]
  %v101 = vld [vmem:[%s1 + $0xec] sm:$0xf]
  %v102 = vld [vmem:[%s1 + $0xf0] sm:$0xf]
  %v103 = vld [vmem:[%s1 + $0xf4] sm:$0xf]
  %v104 = vld [vmem:[%s1 + $0xf8] sm:$0xf]
  %v105 = vld [vmem:[%s1 + $0xfc] sm:$0xf]
  %v106 = vld [vmem:[%s1 + $0x100] sm:$0xf]
  %v107 = vld [vmem:[%s1 + $0x104] sm:$0xf]
  %v108 = vld [vmem:[%s1 + $0x108] sm:$0xf]
  %v109 = vld [vmem:[%s1 + $0x10c] sm:$0xf]
  %v110 = vld [vmem:[%s1 + $0x110] sm:$0xf]
  %v111 = vld [vmem:[%s1 + $0x114] sm:$0xf]
  %v112 = vld [vmem:[%s1 + $0x118] sm:$0xf]
  %v113 = vld [vmem:[%s1 + $0x11c] sm:$0xf]
  %v114 = vld [vmem:[%s2] sm:$0x1]
  %v116 = vlaneseq
  %v117 = vshrl.u32 %v116, 7
  %v118 = vsub.s32 0, %v117
  %v119 = vrot.slane %v114, %v118
  %v142 = vunpack.c.l.b16 %v21
  %v143 = vunpack.c.h.b16 %v21
  %v144 = vunpack.c.l.b16 %v22
  %v145 = vunpack.c.h.b16 %v22
  %v146 = vunpack.c.l.b16 %v23
  %v147 = vunpack.c.l.b16 %v24
  %v148 = vunpack.c.h.b16 %v24
  %v149 = vunpack.c.l.b16 %v25
  %v150 = vunpack.c.h.b16 %v25
  %v151 = vunpack.c.l.b16 %v26
  %v152 = vunpack.c.l.b16 %v27
  %v153 = vunpack.c.h.b16 %v27
  %v154 = vunpack.c.l.b16 %v28
  %v155 = vunpack.c.h.b16 %v28
  %v156 = vunpack.c.l.b16 %v29
  %v157 = vunpack.c.l.b16 %v30
  %v158 = vunpack.c.h.b16 %v30
  %v159 = vunpack.c.l.b16 %v31
  %v160 = vunpack.c.h.b16 %v31
  %v161 = vunpack.c.l.b16 %v32
  %v162 = vunpack.c.l.b16 %v33
  %v163 = vunpack.c.h.b16 %v33
  %v164 = vunpack.c.l.b16 %v34
  %v165 = vunpack.c.h.b16 %v34
  %v166 = vunpack.c.l.b16 %v35
  %v167 = vunpack.c.l.b16 %v36
  %v168 = vunpack.c.h.b16 %v36
  %v169 = vunpack.c.l.b16 %v37
  %v170 = vunpack.c.h.b16 %v37
  %v171 = vunpack.c.l.b16 %v38
  %v172 = vunpack.c.l.b16 %v39
  %v173 = vunpack.c.h.b16 %v39
  %v174 = vunpack.c.l.b16 %v40
  %v175 = vunpack.c.h.b16 %v40
  %v176 = vunpack.c.l.b16 %v41
  %v177 = vpack.c.b16 %v147, %v142
  %v178 = vpack.c.b16 %v148, %v143
  %v179 = vpack.c.b16 %v149, %v144
  %v180 = vpack.c.b16 %v150, %v145
  %v181 = vpack.c.b16 %v151, %v146
  %v182 = vpack.c.b16 %v157, %v152
  %v183 = vpack.c.b16 %v158, %v153
  %v184 = vpack.c.b16 %v159, %v154
  %v185 = vpack.c.b16 %v160, %v155
  %v186 = vpack.c.b16 %v161, %v156
  %v187 = vpack.c.b16 %v167, %v162
  %v188 = vpack.c.b16 %v168, %v163
  %v189 = vpack.c.b16 %v169, %v164
  %v190 = vpack.c.b16 %v170, %v165
  %v191 = vpack.c.b16 %v171, %v166
  %v192 = vpack.c.b16 %v172, %v172
  %v193 = vpack.c.b16 %v173, %v173
  %v194 = vpack.c.b16 %v174, %v174
  %v195 = vpack.c.b16 %v175, %v175
  %v196 = vpack.c.b16 %v176, %v176
  %v285 = vunpack.c.l.b16 %v42
  %v286 = vunpack.c.l.b16 %v43
  %v287 = vunpack.c.l.b16 %v44
  %v288 = vunpack.c.l.b16 %v45
  %v289 = vunpack.c.l.b16 %v46
  %v290 = vunpack.c.l.b16 %v47
  %v291 = vunpack.c.l.b16 %v48
  %v292 = vunpack.c.l.b16 %v49
  %v293 = vunpack.c.l.b16 %v50
  %v294 = vunpack.c.l.b16 %v51
  %v295 = vunpack.c.l.b16 %v52
  %v296 = vunpack.c.l.b16 %v53
  %v297 = vunpack.c.l.b16 %v54
  %v298 = vunpack.c.l.b16 %v55
  %v299 = vunpack.c.l.b16 %v56
  %v300 = vunpack.c.l.b16 %v57
  %v301 = vunpack.c.l.b16 %v58
  %v302 = vunpack.c.l.b16 %v59
  %v303 = vunpack.c.l.b16 %v60
  %v304 = vunpack.c.l.b16 %v61
  %v305 = vunpack.c.l.b16 %v62
  %v306 = vunpack.c.l.b16 %v63
  %v307 = vunpack.c.l.b16 %v64
  %v308 = vunpack.c.l.b16 %v65
  %v309 = vunpack.c.l.b16 %v66
  %v310 = vunpack.c.l.b16 %v67
  %v311 = vunpack.c.l.b16 %v68
  %v312 = vunpack.c.l.b16 %v69
  %v313 = vunpack.c.l.b16 %v70
  %v314 = vunpack.c.l.b16 %v71
  %v315 = vunpack.c.l.b16 %v72
  %v316 = vunpack.c.l.b16 %v73
  %v317 = vunpack.c.l.b16 %v74
  %v318 = vunpack.c.l.b16 %v75
  %v319 = vunpack.c.l.b16 %v76
  %v320 = vunpack.c.l.b16 %v77
  %v321 = vunpack.c.l.b16 %v78
  %v322 = vunpack.c.l.b16 %v79
  %v323 = vunpack.c.l.b16 %v80
  %v324 = vunpack.c.l.b16 %v81
  %v325 = vunpack.c.l.b16 %v82
  %v326 = vunpack.c.l.b16 %v83
  %v327 = vunpack.c.l.b16 %v84
  %v328 = vunpack.c.l.b16 %v85
  %v329 = vunpack.c.l.b16 %v86
  %v330 = vunpack.c.l.b16 %v87
  %v331 = vunpack.c.l.b16 %v88
  %v332 = vunpack.c.l.b16 %v89
  %v333 = vunpack.c.l.b16 %v90
  %v334 = vunpack.c.l.b16 %v91
  %v335 = vunpack.c.l.b16 %v92
  %v336 = vunpack.c.l.b16 %v93
  %v337 = vunpack.c.l.b16 %v94
  %v338 = vunpack.c.l.b16 %v95
  %v339 = vunpack.c.l.b16 %v96
  %v340 = vunpack.c.l.b16 %v97
  %v341 = vunpack.c.l.b16 %v98
  %v342 = vunpack.c.l.b16 %v99
  %v343 = vunpack.c.l.b16 %v100
  %v344 = vunpack.c.l.b16 %v101
  %v345 = vunpack.c.l.b16 %v102
  %v346 = vunpack.c.l.b16 %v103
  %v347 = vunpack.c.l.b16 %v104
  %v348 = vunpack.c.l.b16 %v105
  %v349 = vunpack.c.l.b16 %v106
  %v350 = vunpack.c.l.b16 %v107
  %v351 = vunpack.c.l.b16 %v108
  %v352 = vunpack.c.l.b16 %v109
  %v353 = vunpack.c.l.b16 %v110
  %v354 = vunpack.c.l.b16 %v111
  %v355 = vunpack.c.l.b16 %v112
  %v356 = vunpack.c.l.b16 %v113
  %v357 = vpack.c.b16 %v286, %v285
  %v358 = vpack.c.b16 %v288, %v287
  %v359 = vpack.c.b16 %v290, %v289
  %v360 = vpack.c.b16 %v292, %v291
  %v361 = vpack.c.b16 %v294, %v293
  %v362 = vpack.c.b16 %v296, %v295
  %v363 = vpack.c.b16 %v298, %v297
  %v364 = vpack.c.b16 %v300, %v299
  %v365 = vpack.c.b16 %v302, %v301
  %v366 = vpack.c.b16 %v304, %v303
  %v367 = vpack.c.b16 %v306, %v305
  %v368 = vpack.c.b16 %v308, %v307
  %v369 = vpack.c.b16 %v310, %v309
  %v370 = vpack.c.b16 %v312, %v311
  %v371 = vpack.c.b16 %v314, %v313
  %v372 = vpack.c.b16 %v316, %v315
  %v373 = vpack.c.b16 %v318, %v317
  %v374 = vpack.c.b16 %v320, %v319
  %v375 = vpack.c.b16 %v322, %v321
  %v376 = vpack.c.b16 %v324, %v323
  %v377 = vpack.c.b16 %v326, %v325
  %v378 = vpack.c.b16 %v328, %v327
  %v379 = vpack.c.b16 %v330, %v329
  %v380 = vpack.c.b16 %v332, %v331
  %v381 = vpack.c.b16 %v334, %v333
  %v382 = vpack.c.b16 %v336, %v335
  %v383 = vpack.c.b16 %v338, %v337
  %v384 = vpack.c.b16 %v340, %v339
  %v385 = vpack.c.b16 %v342, %v341
  %v386 = vpack.c.b16 %v344, %v343
  %v387 = vpack.c.b16 %v346, %v345
  %v388 = vpack.c.b16 %v348, %v347
  %v389 = vpack.c.b16 %v350, %v349
  %v390 = vpack.c.b16 %v352, %v351
  %v391 = vpack.c.b16 %v354, %v353
  %v392 = vpack.c.b16 %v356, %v355
  %vm429 = vcmask 523264
  %v431 = vsel %vm429, %v181, 0
  %v434 = vsel %vm429, %v186, 0
  %v437 = vsel %vm429, %v191, 0
  %v440 = vsel %vm429, %v196, 0
  %442 = vmatprep.subr.bf16.mxu0 0
  %443 = vmatpush1.bf16.msra.mxu0 %v357
  %444 = vmatprep.subr.bf16.mxu0 0
  %445 = vmatpush1.bf16.msra.mxu0 %v358
  %446 = vmatprep.subr.bf16.mxu0 0
  %447 = vmatpush1.bf16.msra.mxu0 %v359
  %448 = vmatprep.subr.bf16.mxu0 0
  %449 = vmatpush1.bf16.msra.mxu0 %v360
  %450 = vmatprep.subr.bf16.mxu0 0
  %451 = vmatpush1.bf16.msra.mxu0 %v361
  %452 = vmatprep.subr.bf16.mxu0 0
  %453 = vmatpush1.bf16.msra.mxu0 %v362
  %454 = vmatprep.subr.bf16.mxu0 0
  %455 = vmatpush1.bf16.msra.mxu0 %v363
  %456 = vmatprep.subr.bf16.mxu0 0
  %457 = vmatpush1.bf16.msra.mxu0 %v364
  %458 = vmatprep.subr.bf16.mxu0 0
  %459 = vmatpush1.bf16.msra.mxu0 %v365
  %460 = vmatprep.subr.bf16.mxu0 0
  %461 = vmatpush1.bf16.msra.mxu0 %v366
  %462 = vmatprep.subr.bf16.mxu0 0
  %463 = vmatpush1.bf16.msra.mxu0 %v367
  %464 = vmatprep.subr.bf16.mxu0 0
  %465 = vmatpush1.bf16.msra.mxu0 %v368
  %466 = vmatprep.subr.bf16.mxu0 0
  %467 = vmatpush1.bf16.msra.mxu0 %v369
  %468 = vmatprep.subr.bf16.mxu0 0
  %469 = vmatpush1.bf16.msra.mxu0 %v370
  %470 = vmatprep.subr.bf16.mxu0 0
  %471 = vmatpush1.bf16.msra.mxu0 %v371
  %472 = vmatprep.subr.bf16.mxu0 0
  %473 = vmatpush1.bf16.msra.mxu0 %v372
  %474 = vmatprep.mubr.bf16.mxu0 %v178
  %475 = vmatmul.mubr.bf16.gmra.mrb[0].mxu0 %v177
  %v476 = vpop.f32.mrb[0].mxu0
  %v477 = vadd.f32 %v119, %v476
  %v478 = vpop.f32.mrb[0].mxu0
  %v479 = vpop.f32.mrb[0].mxu0
  %v480 = vadd.f32 %v119, %v479
  %v481 = vpop.f32.mrb[0].mxu0
  %482 = vmatprep.mubr.bf16.mxu0 %v183
  %483 = vmatmul.mubr.bf16.gmra.mrb[0].mxu0 %v182
  %v484 = vpop.f32.mrb[0].mxu0
  %v485 = vadd.f32 %v119, %v484
  %v486 = vpop.f32.mrb[0].mxu0
  %v487 = vpop.f32.mrb[0].mxu0
  %v488 = vadd.f32 %v119, %v487
  %v489 = vpop.f32.mrb[0].mxu0
  %490 = vmatprep.mubr.bf16.mxu0 %v188
  %491 = vmatmul.mubr.bf16.gmra.mrb[0].mxu0 %v187
  %v492 = vpop.f32.mrb[0].mxu0
  %v493 = vadd.f32 %v119, %v492
  %v494 = vpop.f32.mrb[0].mxu0
  %v495 = vpop.f32.mrb[0].mxu0
  %v496 = vadd.f32 %v119, %v495
  %v497 = vpop.f32.mrb[0].mxu0
  %498 = vmatprep.mubr.bf16.mxu0 %v193
  %499 = vmatmul.mubr.bf16.gmra.mrb[0].mxu0 %v192
  %v500 = vpop.f32.mrb[0].mxu0
  %v501 = vadd.f32 %v119, %v500
  %v502 = vpop.f32.mrb[0].mxu0
  %v503 = vpop.f32.mrb[0].mxu0
  %v504 = vpop.f32.mrb[0].mxu0
  %505 = vdwg.mxu0
  %506 = vmatprep.subr.bf16.mxu0 0
  %507 = vmatpush1.bf16.msra.mxu0 %v373
  %508 = vmatprep.subr.bf16.mxu0 0
  %509 = vmatpush1.bf16.msra.mxu0 %v374
  %510 = vmatprep.subr.bf16.mxu0 0
  %511 = vmatpush1.bf16.msra.mxu0 %v375
  %512 = vmatprep.subr.bf16.mxu0 0
  %513 = vmatpush1.bf16.msra.mxu0 %v376
  %514 = vmatprep.subr.bf16.mxu0 0
  %515 = vmatpush1.bf16.msra.mxu0 %v377
  %516 = vmatprep.subr.bf16.mxu0 0
  %517 = vmatpush1.bf16.msra.mxu0 %v378
  %518 = vmatprep.subr.bf16.mxu0 0
  %519 = vmatpush1.bf16.msra.mxu0 %v379
  %520 = vmatprep.subr.bf16.mxu0 0
  %521 = vmatpush1.bf16.msra.mxu0 %v380
  %522 = vmatprep.subr.bf16.mxu0 0
  %523 = vmatpush1.bf16.msra.mxu0 %v381
  %524 = vmatprep.subr.bf16.mxu0 0
  %525 = vmatpush1.bf16.msra.mxu0 %v382
  %526 = vmatprep.subr.bf16.mxu0 0
  %527 = vmatpush1.bf16.msra.mxu0 %v383
  %528 = vmatprep.subr.bf16.mxu0 0
  %529 = vmatpush1.bf16.msra.mxu0 %v384
  %530 = vmatprep.subr.bf16.mxu0 0
  %531 = vmatpush1.bf16.msra.mxu0 %v385
  %532 = vmatprep.subr.bf16.mxu0 0
  %533 = vmatpush1.bf16.msra.mxu0 %v386
  %534 = vmatprep.subr.bf16.mxu0 0
  %535 = vmatpush1.bf16.msra.mxu0 %v387
  %536 = vmatprep.subr.bf16.mxu0 0
  %537 = vmatpush1.bf16.msra.mxu0 %v388
  %538 = vmatprep.mubr.bf16.mxu0 %v180
  %539 = vmatmul.mubr.bf16.gmra.mrb[0].mxu0 %v179
  %v540 = vpop.f32.mrb[0].mxu0
  %v541 = vadd.f32 %v477, %v540
  %v542 = vpop.f32.mrb[0].mxu0
  %v543 = vpop.f32.mrb[0].mxu0
  %v544 = vadd.f32 %v480, %v543
  %v545 = vpop.f32.mrb[0].mxu0
  %546 = vmatprep.mubr.bf16.mxu0 %v185
  %547 = vmatmul.mubr.bf16.gmra.mrb[0].mxu0 %v184
  %v548 = vpop.f32.mrb[0].mxu0
  %v549 = vadd.f32 %v485, %v548
  %v550 = vpop.f32.mrb[0].mxu0
  %v551 = vpop.f32.mrb[0].mxu0
  %v552 = vadd.f32 %v488, %v551
  %v553 = vpop.f32.mrb[0].mxu0
  %554 = vmatprep.mubr.bf16.mxu0 %v190
  %555 = vmatmul.mubr.bf16.gmra.mrb[0].mxu0 %v189
  %v556 = vpop.f32.mrb[0].mxu0
  %v557 = vadd.f32 %v493, %v556
  %v558 = vpop.f32.mrb[0].mxu0
  %v559 = vpop.f32.mrb[0].mxu0
  %v560 = vadd.f32 %v496, %v559
  %v561 = vpop.f32.mrb[0].mxu0
  %562 = vmatprep.mubr.bf16.mxu0 %v195
  %563 = vmatmul.mubr.bf16.gmra.mrb[0].mxu0 %v194
  %v564 = vpop.f32.mrb[0].mxu0
  %v565 = vadd.f32 %v501, %v564
  %v566 = vpop.f32.mrb[0].mxu0
  %v567 = vpop.f32.mrb[0].mxu0
  %v568 = vpop.f32.mrb[0].mxu0
  %569 = vdwg.mxu0
  %570 = vmatprep.subr.bf16.mxu0 0
  %571 = vmatpush1.bf16.msra.mxu0 %v389
  %572 = vmatprep.subr.bf16.mxu0 0
  %573 = vmatpush1.bf16.msra.mxu0 %v390
  %574 = vmatprep.subr.bf16.mxu0 0
  %575 = vmatpush1.bf16.msra.mxu0 %v391
  %576 = vmatprep.subr.bf16.mxu0 0
  %577 = vmatpush1.bf16.msra.mxu0 %v392
  %578 = vmatprep.subr.bf16.mxu0 0
  %579 = vmatpush1.bf16.msra.mxu0 0
  %580 = vmatprep.subr.bf16.mxu0 0
  %581 = vmatpush1.bf16.msra.mxu0 0
  %582 = vmatprep.subr.bf16.mxu0 0
  %583 = vmatpush1.bf16.msra.mxu0 0
  %584 = vmatprep.subr.bf16.mxu0 0
  %585 = vmatpush1.bf16.msra.mxu0 0
  %586 = vmatprep.subr.bf16.mxu0 0
  %587 = vmatpush1.bf16.msra.mxu0 0
  %588 = vmatprep.subr.bf16.mxu0 0
  %589 = vmatpush1.bf16.msra.mxu0 0
  %590 = vmatprep.subr.bf16.mxu0 0
  %591 = vmatpush1.bf16.msra.mxu0 0
  %592 = vmatprep.subr.bf16.mxu0 0
  %593 = vmatpush1.bf16.msra.mxu0 0
  %594 = vmatprep.subr.bf16.mxu0 0
  %595 = vmatpush1.bf16.msra.mxu0 0
  %596 = vmatprep.subr.bf16.mxu0 0
  %597 = vmatpush1.bf16.msra.mxu0 0
  %598 = vmatprep.subr.bf16.mxu0 0
  %599 = vmatpush1.bf16.msra.mxu0 0
  %600 = vmatprep.subr.bf16.mxu0 0
  %601 = vmatpush1.bf16.msra.mxu0 0
  %602 = vmatprep.mubr.bf16.mxu0 0
  %603 = vmatmul.mubr.bf16.gmra.mrb[0].mxu0 %v431
  %v604 = vpop.f32.mrb[0].mxu0
  %v605 = vadd.f32 %v541, %v604
  %v606 = vpop.f32.mrb[0].mxu0
  %v607 = vpop.f32.mrb[0].mxu0
  %v608 = vadd.f32 %v544, %v607
  %v609 = vpop.f32.mrb[0].mxu0
  %610 = vmatprep.mubr.bf16.mxu0 0
  %611 = vmatmul.mubr.bf16.gmra.mrb[0].mxu0 %v434
  %v612 = vpop.f32.mrb[0].mxu0
  %v613 = vadd.f32 %v549, %v612
  %v614 = vpop.f32.mrb[0].mxu0
  %v615 = vpop.f32.mrb[0].mxu0
  %v616 = vadd.f32 %v552, %v615
  %v617 = vpop.f32.mrb[0].mxu0
  %618 = vmatprep.mubr.bf16.mxu0 0
  %619 = vmatmul.mubr.bf16.gmra.mrb[0].mxu0 %v437
  %v620 = vpop.f32.mrb[0].mxu0
  %v621 = vadd.f32 %v557, %v620
  %v622 = vpop.f32.mrb[0].mxu0
  %v623 = vpop.f32.mrb[0].mxu0
  %v624 = vadd.f32 %v560, %v623
  %v625 = vpop.f32.mrb[0].mxu0
  %626 = vmatprep.mubr.bf16.mxu0 0
  %627 = vmatmul.mubr.bf16.gmra.mrb[0].mxu0 %v440
  %v628 = vpop.f32.mrb[0].mxu0
  %v629 = vadd.f32 %v565, %v628
  %v630 = vpop.f32.mrb[0].mxu0
  %v631 = vpop.f32.mrb[0].mxu0
  %v632 = vpop.f32.mrb[0].mxu0
  %633 = vdwg.mxu0
  %v634 = vmax.f32 %v605, 0.0
  %v635 = vmax.f32 %v608, 0.0
  %v636 = vmax.f32 %v613, 0.0
  %v637 = vmax.f32 %v616, 0.0
  %v638 = vmax.f32 %v621, 0.0
  %v639 = vmax.f32 %v624, 0.0
  %v640 = vmax.f32 %v629, 0.0
  %v641 = vld [vmem:[%s3] sm:$0x1]
  %v643 = vlaneseq
  %v644 = vshrl.u32 %v643, 7
  %v645 = vsub.s32 0, %v644
  %v646 = vrot.slane %v641, %v645
  %v648 = vmul.f32 %v634, %v646
  %v649 = vmul.f32 %v635, %v646
  %v650 = vmul.f32 %v636, %v646
  %v651 = vmul.f32 %v637, %v646
  %v652 = vmul.f32 %v638, %v646
  %v653 = vmul.f32 %v639, %v646
  %v654 = vmul.f32 %v640, %v646
  %v655 = vld [vmem:[%s4] sm:$0x1]
  %v657 = vlaneseq
  %v658 = vshrl.u32 %v657, 7
  %v659 = vsub.s32 0, %v658
  %v660 = vrot.slane %v655, %v659
  %v662 = vadd.f32 %v648, %v660
  %v663 = vadd.f32 %v649, %v660
  %v664 = vadd.f32 %v650, %v660
  %v665 = vadd.f32 %v651, %v660
  %v666 = vadd.f32 %v652, %v660
  %v667 = vadd.f32 %v653, %v660
  %v668 = vadd.f32 %v654, %v660
  %v669 = vpack.c.bf16 %v663, %v662
  %v670 = vpack.c.bf16 %v665, %v664
  %v671 = vpack.c.bf16 %v667, %v666
  %v672 = vpack.c.bf16 %v668, %v668
  %v677 = vunpack.c.l.b16 %v669
  %v678 = vunpack.c.h.b16 %v669
  %v679 = vunpack.c.l.b16 %v670
  %v680 = vunpack.c.h.b16 %v670
  %v681 = vunpack.c.l.b16 %v671
  %v682 = vunpack.c.h.b16 %v671
  %v683 = vunpack.c.l.b16 %v672
  %v684 = vpack.c.b16 %v677, %v677
  %v685 = vpack.c.b16 %v678, %v678
  %v686 = vpack.c.b16 %v679, %v679
  %v687 = vpack.c.b16 %v680, %v680
  %v688 = vpack.c.b16 %v681, %v681
  %v689 = vpack.c.b16 %v682, %v682
  %v690 = vpack.c.b16 %v683, %v683
  %vm698 = vcmask 519168
  %699 = vst.msk [vmem:[%s5] sm:$0xf] %vm698, %v684
  %700 = vst.msk [vmem:[%s5 + $0x4] sm:$0xf] %vm698, %v685
  %701 = vst.msk [vmem:[%s5 + $0x8] sm:$0xf] %vm698, %v686
  %702 = vst.msk [vmem:[%s5 + $0xc] sm:$0xf] %vm698, %v687
  %703 = vst.msk [vmem:[%s5 + $0x10] sm:$0xf] %vm698, %v688
  %704 = vst.msk [vmem:[%s5 + $0x14] sm:$0xf] %vm698, %v689
  %vm705 = vcmask 516096
  %706 = vst.msk [vmem:[%s5 + $0x18] sm:$0x1] %vm705, %v690
  // Predicated region
  $region22: #{dqn_forward.6} parent=0 // pred_check
    _
  $region23: #{dqn_forward.6} parent=0 // pred_check_branch
    %708 = sbr.rel (0) target = $region25
  $region24: #{dqn_forward.6} parent=0 // pred_region
    _
  $region25: #{dqn_forward.6} parent=0 // pred_fallthru
    _
  // Predicated region
  $region26: #{dqn_forward.6} parent=0 // pred_check
    _
  $region27: #{dqn_forward.6} parent=0 // pred_check_branch
    %710 = sbr.rel (0) target = $region29
  $region28: #{dqn_forward.6} parent=0 // pred_region
    _
  $region29: #{dqn_forward.6} parent=0 // pred_fallthru
    _

// kernel: dqn_forward.7
$region0: #{dqn_forward.7}
  #allocation0 [shape = 'u32[]', space=smem, size = 0x4, offset = 0x4, fixed_abs, tag = 'smem constant byte address 0x4 - core index']
  #allocation1 [shape = 'u32[144,128]{1,0:T(1,128)}', space=vmem, size = 0x12000, scoped, tag = 'internal scratch']
  %s0 = inlined_call_operand.vmem [shape: bf16[2,1600], index: 0, kind: input, shape index: {}]
  %s1 = inlined_call_operand.vmem [shape: bf16[1600,512], index: 1, kind: input, shape index: {}]
  %s2 = inlined_call_operand.vmem [shape: f32[1,512], index: 2, kind: input, shape index: {}]
  %s3 = inlined_call_operand.vmem [shape: bf16[512,2], index: 3, kind: input, shape index: {}]
  %s4 = inlined_call_operand.vmem [shape: f32[1,2], index: 4, kind: input, shape index: {}]
  %s5 = inlined_call_operand.hbm [shape: f32[2,2], index: 5, kind: output, shape index: {}]
  %s6 = sld [smem:[#allocation0]]
  $region30: #{dqn_forward.7} parent=0
    _
  %s8 = ssub.s32 1, %s6
  %s9 = scalar_select 0, %s8, %s6
  $region1: #{dqn_forward.7} parent=0
    #allocation2 [shape = 'u8[1024]{0}', space=vmem, size = 0x400, scoped, tag = 'output window, operand 0, single buffered']
    #allocation3 [shape = 's32[1]{0}', space=sflag, size = 0x4, scoped, tag = 'scoped memory for dqn_forward.7']
    %10 = vsyncpa [#allocation3], 0
    // Predicated region
    $region2: #{dqn_forward.7} parent=1 // pred_check
      _
    $region3: #{dqn_forward.7} parent=1 // pred_check_branch
      %12 = sbr.rel (0) target = $region5
    $region4: #{dqn_forward.7} parent=1 // pred_region
      _
    $region5: #{dqn_forward.7} parent=1 // pred_fallthru
      _
    // Predicated region
    $region6: #{dqn_forward.7} parent=1 // pred_check
      _
    $region7: #{dqn_forward.7} parent=1 // pred_check_branch
      %14 = sbr.rel (0) target = $region9
    $region8: #{dqn_forward.7} parent=1 // pred_region
      _
    $region9: #{dqn_forward.7} parent=1 // pred_fallthru
      _
    // Predicated region
    $region10: #{dqn_forward.7} parent=1 // pred_check
      _
    $region11: #{dqn_forward.7} parent=1 // pred_check_branch
      %16 = sbr.rel (0) target = $region13
    $region12: #{dqn_forward.7} parent=1 // pred_region
      _
    $region13: #{dqn_forward.7} parent=1 // pred_fallthru
      _
    // Predicated region
    $region14: #{dqn_forward.7} parent=1 // pred_check
      _
    $region15: #{dqn_forward.7} parent=1 // pred_check_branch
      %18 = sbr.rel (0) target = $region17
    $region16: #{dqn_forward.7} parent=1 // pred_region
      _
    $region17: #{dqn_forward.7} parent=1 // pred_fallthru
      _
    // Predicated region
    $region18: #{dqn_forward.7} parent=1 // pred_check
      _
    $region19: #{dqn_forward.7} parent=1 // pred_check_branch
      %20 = sbr.rel (0) target = $region21
    $region20: #{dqn_forward.7} parent=1 // pred_region
      _
    $region21: #{dqn_forward.7} parent=1 // pred_fallthru
      _
    %v22 = vld [vmem:[%s0] sm:$0xff]
    %v23 = vld [vmem:[%s0 + $0x8] sm:$0x1f]
    %v24 = vld [vmem:[%s1] sm:$0xff]
    %v25 = vld [vmem:[%s1 + $0x8] sm:$0xff]
    %v26 = vld [vmem:[%s1 + $0x10] sm:$0xff]
    %v27 = vld [vmem:[%s1 + $0x18] sm:$0xff]
    %v28 = vld [vmem:[%s1 + $0x20] sm:$0xff]
    %v29 = vld [vmem:[%s1 + $0x28] sm:$0xff]
    %v30 = vld [vmem:[%s1 + $0x30] sm:$0xff]
    %v31 = vld [vmem:[%s1 + $0x38] sm:$0xff]
    %v32 = vld [vmem:[%s1 + $0x40] sm:$0xff]
    %v33 = vld [vmem:[%s1 + $0x48] sm:$0xff]
    %v34 = vld [vmem:[%s1 + $0x50] sm:$0xff]
    %v35 = vld [vmem:[%s1 + $0x58] sm:$0xff]
    %v36 = vld [vmem:[%s1 + $0x60] sm:$0xff]
    %v37 = vld [vmem:[%s1 + $0x68] sm:$0xff]
    %v38 = vld [vmem:[%s1 + $0x70] sm:$0xff]
    %v39 = vld [vmem:[%s1 + $0x78] sm:$0xff]
    %v40 = vld [vmem:[%s1 + $0x80] sm:$0xff]
    %v41 = vld [vmem:[%s1 + $0x88] sm:$0xff]
    %v42 = vld [vmem:[%s1 + $0x90] sm:$0xff]
    %v43 = vld [vmem:[%s1 + $0x98] sm:$0xff]
    %v44 = vld [vmem:[%s1 + $0xa0] sm:$0xff]
    %v45 = vld [vmem:[%s1 + $0xa8] sm:$0xff]
    %v46 = vld [vmem:[%s1 + $0xb0] sm:$0xff]
    %v47 = vld [vmem:[%s1 + $0xb8] sm:$0xff]
    %v48 = vld [vmem:[%s1 + $0xc0] sm:$0xff]
    %v49 = vld [vmem:[%s1 + $0xc8] sm:$0xff]
    %v50 = vld [vmem:[%s1 + $0xd0] sm:$0xff]
    %v51 = vld [vmem:[%s1 + $0xd8] sm:$0xff]
    %v52 = vld [vmem:[%s1 + $0xe0] sm:$0xff]
    %v53 = vld [vmem:[%s1 + $0xe8] sm:$0xff]
    %v54 = vld [vmem:[%s1 + $0xf0] sm:$0xff]
    %v55 = vld [vmem:[%s1 + $0xf8] sm:$0xff]
    %v56 = vld [vmem:[%s1 + $0x100] sm:$0xff]
    %v57 = vld [vmem:[%s1 + $0x108] sm:$0xff]
    %v58 = vld [vmem:[%s1 + $0x110] sm:$0xff]
    %v59 = vld [vmem:[%s1 + $0x118] sm:$0xff]
    %v60 = vld [vmem:[%s1 + $0x120] sm:$0xff]
    %v61 = vld [vmem:[%s1 + $0x128] sm:$0xff]
    %v62 = vld [vmem:[%s1 + $0x130] sm:$0xff]
    %v63 = vld [vmem:[%s1 + $0x138] sm:$0xff]
    %v64 = vld [vmem:[%s1 + $0x140] sm:$0xff]
    %v65 = vld [vmem:[%s1 + $0x148] sm:$0xff]
    %v66 = vld [vmem:[%s1 + $0x150] sm:$0xff]
    %v67 = vld [vmem:[%s1 + $0x158] sm:$0xff]
    %v68 = vld [vmem:[%s1 + $0x160] sm:$0xff]
    %v69 = vld [vmem:[%s1 + $0x168] sm:$0xff]
    %v70 = vld [vmem:[%s1 + $0x170] sm:$0xff]
    %v71 = vld [vmem:[%s1 + $0x178] sm:$0xff]
    %v72 = vld [vmem:[%s1 + $0x180] sm:$0xff]
    %v73 = vld [vmem:[%s1 + $0x188] sm:$0xff]
    %v74 = vld [vmem:[%s1 + $0x190] sm:$0xff]
    %v75 = vld [vmem:[%s1 + $0x198] sm:$0xff]
    %v76 = vld [vmem:[%s1 + $0x1a0] sm:$0xff]
    %v77 = vld [vmem:[%s1 + $0x1a8] sm:$0xff]
    %v78 = vld [vmem:[%s1 + $0x1b0] sm:$0xff]
    %v79 = vld [vmem:[%s1 + $0x1b8] sm:$0xff]
    %v80 = vld [vmem:[%s1 + $0x1c0] sm:$0xff]
    %v81 = vld [vmem:[%s1 + $0x1c8] sm:$0xff]
    %v82 = vld [vmem:[%s1 + $0x1d0] sm:$0xff]
    %v83 = vld [vmem:[%s1 + $0x1d8] sm:$0xff]
    %v84 = vld [vmem:[%s1 + $0x1e0] sm:$0xff]
    %v85 = vld [vmem:[%s1 + $0x1e8] sm:$0xff]
    %v86 = vld [vmem:[%s1 + $0x1f0] sm:$0xff]
    %v87 = vld [vmem:[%s1 + $0x1f8] sm:$0xff]
    %v88 = vld [vmem:[%s1 + $0x200] sm:$0xff]
    %v89 = vld [vmem:[%s1 + $0x208] sm:$0xff]
    %v90 = vld [vmem:[%s1 + $0x210] sm:$0xff]
    %v91 = vld [vmem:[%s1 + $0x218] sm:$0xff]
    %v92 = vld [vmem:[%s1 + $0x220] sm:$0xff]
    %v93 = vld [vmem:[%s1 + $0x228] sm:$0xff]
    %v94 = vld [vmem:[%s1 + $0x230] sm:$0xff]
    %v95 = vld [vmem:[%s1 + $0x238] sm:$0xff]
    %v96 = vld [vmem:[%s1 + $0x240] sm:$0xff]
    %v97 = vld [vmem:[%s1 + $0x248] sm:$0xff]
    %v98 = vld [vmem:[%s1 + $0x250] sm:$0xff]
    %v99 = vld [vmem:[%s1 + $0x258] sm:$0xff]
    %v100 = vld [vmem:[%s1 + $0x260] sm:$0xff]
    %v101 = vld [vmem:[%s1 + $0x268] sm:$0xff]
    %v102 = vld [vmem:[%s1 + $0x270] sm:$0xff]
    %v103 = vld [vmem:[%s1 + $0x278] sm:$0xff]
    %v104 = vld [vmem:[%s1 + $0x280] sm:$0xff]
    %v105 = vld [vmem:[%s1 + $0x288] sm:$0xff]
    %v106 = vld [vmem:[%s1 + $0x290] sm:$0xff]
    %v107 = vld [vmem:[%s1 + $0x298] sm:$0xff]
    %v108 = vld [vmem:[%s1 + $0x2a0] sm:$0xff]
    %v109 = vld [vmem:[%s1 + $0x2a8] sm:$0xff]
    %v110 = vld [vmem:[%s1 + $0x2b0] sm:$0xff]
    %v111 = vld [vmem:[%s1 + $0x2b8] sm:$0xff]
    %v112 = vld [vmem:[%s1 + $0x2c0] sm:$0xff]
    %v113 = vld [vmem:[%s1 + $0x2c8] sm:$0xff]
    %v114 = vld [vmem:[%s1 + $0x2d0] sm:$0xff]
    %v115 = vld [vmem:[%s1 + $0x2d8] sm:$0xff]
    %v116 = vld [vmem:[%s1 + $0x2e0] sm:$0xff]
    %v117 = vld [vmem:[%s1 + $0x2e8] sm:$0xff]
    %v118 = vld [vmem:[%s1 + $0x2f0] sm:$0xff]
    %v119 = vld [vmem:[%s1 + $0x2f8] sm:$0xff]
    %v120 = vld [vmem:[%s1 + $0x300] sm:$0xff]
    %v121 = vld [vmem:[%s1 + $0x308] sm:$0xff]
    %v122 = vld [vmem:[%s1 + $0x310] sm:$0xff]
    %v123 = vld [vmem:[%s1 + $0x318] sm:$0xff]
    %v124 = vld [vmem:[%s1 + $0x320] sm:$0xff]
    %v125 = vld [vmem:[%s1 + $0x328] sm:$0xff]
    %v126 = vld [vmem:[%s1 + $0x330] sm:$0xff]
    %v127 = vld [vmem:[%s1 + $0x338] sm:$0xff]
    %v128 = vld [vmem:[%s1 + $0x340] sm:$0xff]
    %v129 = vld [vmem:[%s1 + $0x348] sm:$0xff]
    %v130 = vld [vmem:[%s1 + $0x350] sm:$0xff]
    %v131 = vld [vmem:[%s1 + $0x358] sm:$0xff]
    %v132 = vld [vmem:[%s1 + $0x360] sm:$0xff]
    %v133 = vld [vmem:[%s1 + $0x368] sm:$0xff]
    %v134 = vld [vmem:[%s1 + $0x370] sm:$0xff]
    %v135 = vld [vmem:[%s1 + $0x378] sm:$0xff]
    %v136 = vld [vmem:[%s1 + $0x380] sm:$0xff]
    %v137 = vld [vmem:[%s1 + $0x388] sm:$0xff]
    %v138 = vld [vmem:[%s1 + $0x390] sm:$0xff]
    %v139 = vld [vmem:[%s1 + $0x398] sm:$0xff]
    %v140 = vld [vmem:[%s1 + $0x3a0] sm:$0xff]
    %v141 = vld [vmem:[%s1 + $0x3a8] sm:$0xff]
    %v142 = vld [vmem:[%s1 + $0x3b0] sm:$0xff]
    %v143 = vld [vmem:[%s1 + $0x3b8] sm:$0xff]
    %v144 = vld [vmem:[%s1 + $0x3c0] sm:$0xff]
    %v145 = vld [vmem:[%s1 + $0x3c8] sm:$0xff]
    %v146 = vld [vmem:[%s1 + $0x3d0] sm:$0xff]
    %v147 = vld [vmem:[%s1 + $0x3d8] sm:$0xff]
    %v148 = vld [vmem:[%s1 + $0x3e0] sm:$0xff]
    %v149 = vld [vmem:[%s1 + $0x3e8] sm:$0xff]
    %v150 = vld [vmem:[%s1 + $0x3f0] sm:$0xff]
    %v151 = vld [vmem:[%s1 + $0x3f8] sm:$0xff]
    %v152 = vld [vmem:[%s1 + $0x400] sm:$0xff]
    %v153 = vld [vmem:[%s1 + $0x408] sm:$0xff]
    %v154 = vld [vmem:[%s1 + $0x410] sm:$0xff]
    %v155 = vld [vmem:[%s1 + $0x418] sm:$0xff]
    %v156 = vld [vmem:[%s1 + $0x420] sm:$0xff]
    %v157 = vld [vmem:[%s1 + $0x428] sm:$0xff]
    %v158 = vld [vmem:[%s1 + $0x430] sm:$0xff]
    %v159 = vld [vmem:[%s1 + $0x438] sm:$0xff]
    %v160 = vld [vmem:[%s1 + $0x440] sm:$0xff]
    %v161 = vld [vmem:[%s1 + $0x448] sm:$0xff]
    %v162 = vld [vmem:[%s1 + $0x450] sm:$0xff]
    %v163 = vld [vmem:[%s1 + $0x458] sm:$0xff]
    %v164 = vld [vmem:[%s1 + $0x460] sm:$0xff]
    %v165 = vld [vmem:[%s1 + $0x468] sm:$0xff]
    %v166 = vld [vmem:[%s1 + $0x470] sm:$0xff]
    %v167 = vld [vmem:[%s1 + $0x478] sm:$0xff]
    %v168 = vld [vmem:[%s1 + $0x480] sm:$0xff]
    %v169 = vld [vmem:[%s1 + $0x488] sm:$0xff]
    %v170 = vld [vmem:[%s1 + $0x490] sm:$0xff]
    %v171 = vld [vmem:[%s1 + $0x498] sm:$0xff]
    %v172 = vld [vmem:[%s1 + $0x4a0] sm:$0xff]
    %v173 = vld [vmem:[%s1 + $0x4a8] sm:$0xff]
    %v174 = vld [vmem:[%s1 + $0x4b0] sm:$0xff]
    %v175 = vld [vmem:[%s1 + $0x4b8] sm:$0xff]
    %v176 = vld [vmem:[%s1 + $0x4c0] sm:$0xff]
    %v177 = vld [vmem:[%s1 + $0x4c8] sm:$0xff]
    %v178 = vld [vmem:[%s1 + $0x4d0] sm:$0xff]
    %v179 = vld [vmem:[%s1 + $0x4d8] sm:$0xff]
    %v180 = vld [vmem:[%s1 + $0x4e0] sm:$0xff]
    %v181 = vld [vmem:[%s1 + $0x4e8] sm:$0xff]
    %v182 = vld [vmem:[%s1 + $0x4f0] sm:$0xff]
    %v183 = vld [vmem:[%s1 + $0x4f8] sm:$0xff]
    %v184 = vld [vmem:[%s1 + $0x500] sm:$0xff]
    %v185 = vld [vmem:[%s1 + $0x508] sm:$0xff]
    %v186 = vld [vmem:[%s1 + $0x510] sm:$0xff]
    %v187 = vld [vmem:[%s1 + $0x518] sm:$0xff]
    %v188 = vld [vmem:[%s1 + $0x520] sm:$0xff]
    %v189 = vld [vmem:[%s1 + $0x528] sm:$0xff]
    %v190 = vld [vmem:[%s1 + $0x530] sm:$0xff]
    %v191 = vld [vmem:[%s1 + $0x538] sm:$0xff]
    %v192 = vld [vmem:[%s1 + $0x540] sm:$0xff]
    %v193 = vld [vmem:[%s1 + $0x548] sm:$0xff]
    %v194 = vld [vmem:[%s1 + $0x550] sm:$0xff]
    %v195 = vld [vmem:[%s1 + $0x558] sm:$0xff]
    %v196 = vld [vmem:[%s1 + $0x560] sm:$0xff]
    %v197 = vld [vmem:[%s1 + $0x568] sm:$0xff]
    %v198 = vld [vmem:[%s1 + $0x570] sm:$0xff]
    %v199 = vld [vmem:[%s1 + $0x578] sm:$0xff]
    %v200 = vld [vmem:[%s1 + $0x580] sm:$0xff]
    %v201 = vld [vmem:[%s1 + $0x588] sm:$0xff]
    %v202 = vld [vmem:[%s1 + $0x590] sm:$0xff]
    %v203 = vld [vmem:[%s1 + $0x598] sm:$0xff]
    %v204 = vld [vmem:[%s1 + $0x5a0] sm:$0xff]
    %v205 = vld [vmem:[%s1 + $0x5a8] sm:$0xff]
    %v206 = vld [vmem:[%s1 + $0x5b0] sm:$0xff]
    %v207 = vld [vmem:[%s1 + $0x5b8] sm:$0xff]
    %v208 = vld [vmem:[%s1 + $0x5c0] sm:$0xff]
    %v209 = vld [vmem:[%s1 + $0x5c8] sm:$0xff]
    %v210 = vld [vmem:[%s1 + $0x5d0] sm:$0xff]
    %v211 = vld [vmem:[%s1 + $0x5d8] sm:$0xff]
    %v212 = vld [vmem:[%s1 + $0x5e0] sm:$0xff]
    %v213 = vld [vmem:[%s1 + $0x5e8] sm:$0xff]
    %v214 = vld [vmem:[%s1 + $0x5f0] sm:$0xff]
    %v215 = vld [vmem:[%s1 + $0x5f8] sm:$0xff]
    %v216 = vld [vmem:[%s1 + $0x600] sm:$0xff]
    %v217 = vld [vmem:[%s1 + $0x608] sm:$0xff]
    %v218 = vld [vmem:[%s1 + $0x610] sm:$0xff]
    %v219 = vld [vmem:[%s1 + $0x618] sm:$0xff]
    %v220 = vld [vmem:[%s1 + $0x620] sm:$0xff]
    %v221 = vld [vmem:[%s1 + $0x628] sm:$0xff]
    %v222 = vld [vmem:[%s1 + $0x630] sm:$0xff]
    %v223 = vld [vmem:[%s1 + $0x638] sm:$0xff]
    %v224 = vld [vmem:[%s1 + $0x640] sm:$0xff]
    %v225 = vld [vmem:[%s1 + $0x648] sm:$0xff]
    %v226 = vld [vmem:[%s1 + $0x650] sm:$0xff]
    %v227 = vld [vmem:[%s1 + $0x658] sm:$0xff]
    %v228 = vld [vmem:[%s1 + $0x660] sm:$0xff]
    %v229 = vld [vmem:[%s1 + $0x668] sm:$0xff]
    %v230 = vld [vmem:[%s1 + $0x670] sm:$0xff]
    %v231 = vld [vmem:[%s1 + $0x678] sm:$0xff]
    %v232 = vld [vmem:[%s1 + $0x680] sm:$0xff]
    %v233 = vld [vmem:[%s1 + $0x688] sm:$0xff]
    %v234 = vld [vmem:[%s1 + $0x690] sm:$0xff]
    %v235 = vld [vmem:[%s1 + $0x698] sm:$0xff]
    %v236 = vld [vmem:[%s1 + $0x6a0] sm:$0xff]
    %v237 = vld [vmem:[%s1 + $0x6a8] sm:$0xff]
    %v238 = vld [vmem:[%s1 + $0x6b0] sm:$0xff]
    %v239 = vld [vmem:[%s1 + $0x6b8] sm:$0xff]
    %v240 = vld [vmem:[%s1 + $0x6c0] sm:$0xff]
    %v241 = vld [vmem:[%s1 + $0x6c8] sm:$0xff]
    %v242 = vld [vmem:[%s1 + $0x6d0] sm:$0xff]
    %v243 = vld [vmem:[%s1 + $0x6d8] sm:$0xff]
    %v244 = vld [vmem:[%s1 + $0x6e0] sm:$0xff]
    %v245 = vld [vmem:[%s1 + $0x6e8] sm:$0xff]
    %v246 = vld [vmem:[%s1 + $0x6f0] sm:$0xff]
    %v247 = vld [vmem:[%s1 + $0x6f8] sm:$0xff]
    %v248 = vld [vmem:[%s1 + $0x700] sm:$0xff]
    %v249 = vld [vmem:[%s1 + $0x708] sm:$0xff]
    %v250 = vld [vmem:[%s1 + $0x710] sm:$0xff]
    %v251 = vld [vmem:[%s1 + $0x718] sm:$0xff]
    %v252 = vld [vmem:[%s1 + $0x720] sm:$0xff]
    %v253 = vld [vmem:[%s1 + $0x728] sm:$0xff]
    %v254 = vld [vmem:[%s1 + $0x730] sm:$0xff]
    %v255 = vld [vmem:[%s1 + $0x738] sm:$0xff]
    %v256 = vld [vmem:[%s1 + $0x740] sm:$0xff]
    %v257 = vld [vmem:[%s1 + $0x748] sm:$0xff]
    %v258 = vld [vmem:[%s1 + $0x750] sm:$0xff]
    %v259 = vld [vmem:[%s1 + $0x758] sm:$0xff]
    %v260 = vld [vmem:[%s1 + $0x760] sm:$0xff]
    %v261 = vld [vmem:[%s1 + $0x768] sm:$0xff]
    %v262 = vld [vmem:[%s1 + $0x770] sm:$0xff]
    %v263 = vld [vmem:[%s1 + $0x778] sm:$0xff]
    %v264 = vld [vmem:[%s1 + $0x780] sm:$0xff]
    %v265 = vld [vmem:[%s1 + $0x788] sm:$0xff]
    %v266 = vld [vmem:[%s1 + $0x790] sm:$0xff]
    %v267 = vld [vmem:[%s1 + $0x798] sm:$0xff]
    %v268 = vld [vmem:[%s1 + $0x7a0] sm:$0xff]
    %v269 = vld [vmem:[%s1 + $0x7a8] sm:$0xff]
    %v270 = vld [vmem:[%s1 + $0x7b0] sm:$0xff]
    %v271 = vld [vmem:[%s1 + $0x7b8] sm:$0xff]
    %v272 = vld [vmem:[%s1 + $0x7c0] sm:$0xff]
    %v273 = vld [vmem:[%s1 + $0x7c8] sm:$0xff]
    %v274 = vld [vmem:[%s1 + $0x7d0] sm:$0xff]
    %v275 = vld [vmem:[%s1 + $0x7d8] sm:$0xff]
    %v276 = vld [vmem:[%s1 + $0x7e0] sm:$0xff]
    %v277 = vld [vmem:[%s1 + $0x7e8] sm:$0xff]
    %v278 = vld [vmem:[%s1 + $0x7f0] sm:$0xff]
    %v279 = vld [vmem:[%s1 + $0x7f8] sm:$0xff]
    %v280 = vld [vmem:[%s1 + $0x800] sm:$0xff]
    %v281 = vld [vmem:[%s1 + $0x808] sm:$0xff]
    %v282 = vld [vmem:[%s1 + $0x810] sm:$0xff]
    %v283 = vld [vmem:[%s1 + $0x818] sm:$0xff]
    %v284 = vld [vmem:[%s1 + $0x820] sm:$0xff]
    %v285 = vld [vmem:[%s1 + $0x828] sm:$0xff]
    %v286 = vld [vmem:[%s1 + $0x830] sm:$0xff]
    %v287 = vld [vmem:[%s1 + $0x838] sm:$0xff]
    %v288 = vld [vmem:[%s1 + $0x840] sm:$0xff]
    %v289 = vld [vmem:[%s1 + $0x848] sm:$0xff]
    %v290 = vld [vmem:[%s1 + $0x850] sm:$0xff]
    %v291 = vld [vmem:[%s1 + $0x858] sm:$0xff]
    %v292 = vld [vmem:[%s1 + $0x860] sm:$0xff]
    %v293 = vld [vmem:[%s1 + $0x868] sm:$0xff]
    %v294 = vld [vmem:[%s1 + $0x870] sm:$0xff]
    %v295 = vld [vmem:[%s1 + $0x878] sm:$0xff]
    %v296 = vld [vmem:[%s1 + $0x880] sm:$0xff]
    %v297 = vld [vmem:[%s1 + $0x888] sm:$0xff]
    %v298 = vld [vmem:[%s1 + $0x890] sm:$0xff]
    %v299 = vld [vmem:[%s1 + $0x898] sm:$0xff]
    %v300 = vld [vmem:[%s1 + $0x8a0] sm:$0xff]
    %v301 = vld [vmem:[%s1 + $0x8a8] sm:$0xff]
    %v302 = vld [vmem:[%s1 + $0x8b0] sm:$0xff]
    %v303 = vld [vmem:[%s1 + $0x8b8] sm:$0xff]
    %v304 = vld [vmem:[%s1 + $0x8c0] sm:$0xff]
    %v305 = vld [vmem:[%s1 + $0x8c8] sm:$0xff]
    %v306 = vld [vmem:[%s1 + $0x8d0] sm:$0xff]
    %v307 = vld [vmem:[%s1 + $0x8d8] sm:$0xff]
    %v308 = vld [vmem:[%s1 + $0x8e0] sm:$0xff]
    %v309 = vld [vmem:[%s1 + $0x8e8] sm:$0xff]
    %v310 = vld [vmem:[%s1 + $0x8f0] sm:$0xff]
    %v311 = vld [vmem:[%s1 + $0x8f8] sm:$0xff]
    %v312 = vld [vmem:[%s1 + $0x900] sm:$0xff]
    %v313 = vld [vmem:[%s1 + $0x908] sm:$0xff]
    %v314 = vld [vmem:[%s1 + $0x910] sm:$0xff]
    %v315 = vld [vmem:[%s1 + $0x918] sm:$0xff]
    %v316 = vld [vmem:[%s1 + $0x920] sm:$0xff]
    %v317 = vld [vmem:[%s1 + $0x928] sm:$0xff]
    %v318 = vld [vmem:[%s1 + $0x930] sm:$0xff]
    %v319 = vld [vmem:[%s1 + $0x938] sm:$0xff]
    %v320 = vld [vmem:[%s1 + $0x940] sm:$0xff]
    %v321 = vld [vmem:[%s1 + $0x948] sm:$0xff]
    %v322 = vld [vmem:[%s1 + $0x950] sm:$0xff]
    %v323 = vld [vmem:[%s1 + $0x958] sm:$0xff]
    %v324 = vld [vmem:[%s1 + $0x960] sm:$0xff]
    %v325 = vld [vmem:[%s1 + $0x968] sm:$0xff]
    %v326 = vld [vmem:[%s1 + $0x970] sm:$0xff]
    %v327 = vld [vmem:[%s1 + $0x978] sm:$0xff]
    %v328 = vld [vmem:[%s1 + $0x980] sm:$0xff]
    %v329 = vld [vmem:[%s1 + $0x988] sm:$0xff]
    %v330 = vld [vmem:[%s1 + $0x990] sm:$0xff]
    %v331 = vld [vmem:[%s1 + $0x998] sm:$0xff]
    %v332 = vld [vmem:[%s1 + $0x9a0] sm:$0xff]
    %v333 = vld [vmem:[%s1 + $0x9a8] sm:$0xff]
    %v334 = vld [vmem:[%s1 + $0x9b0] sm:$0xff]
    %v335 = vld [vmem:[%s1 + $0x9b8] sm:$0xff]
    %v336 = vld [vmem:[%s1 + $0x9c0] sm:$0xff]
    %v337 = vld [vmem:[%s1 + $0x9c8] sm:$0xff]
    %v338 = vld [vmem:[%s1 + $0x9d0] sm:$0xff]
    %v339 = vld [vmem:[%s1 + $0x9d8] sm:$0xff]
    %v340 = vld [vmem:[%s1 + $0x9e0] sm:$0xff]
    %v341 = vld [vmem:[%s1 + $0x9e8] sm:$0xff]
    %v342 = vld [vmem:[%s1 + $0x9f0] sm:$0xff]
    %v343 = vld [vmem:[%s1 + $0x9f8] sm:$0xff]
    %v344 = vld [vmem:[%s1 + $0xa00] sm:$0xff]
    %v345 = vld [vmem:[%s1 + $0xa08] sm:$0xff]
    %v346 = vld [vmem:[%s1 + $0xa10] sm:$0xff]
    %v347 = vld [vmem:[%s1 + $0xa18] sm:$0xff]
    %v348 = vld [vmem:[%s1 + $0xa20] sm:$0xff]
    %v349 = vld [vmem:[%s1 + $0xa28] sm:$0xff]
    %v350 = vld [vmem:[%s1 + $0xa30] sm:$0xff]
    %v351 = vld [vmem:[%s1 + $0xa38] sm:$0xff]
    %v352 = vld [vmem:[%s1 + $0xa40] sm:$0xff]
    %v353 = vld [vmem:[%s1 + $0xa48] sm:$0xff]
    %v354 = vld [vmem:[%s1 + $0xa50] sm:$0xff]
    %v355 = vld [vmem:[%s1 + $0xa58] sm:$0xff]
    %v356 = vld [vmem:[%s1 + $0xa60] sm:$0xff]
    %v357 = vld [vmem:[%s1 + $0xa68] sm:$0xff]
    %v358 = vld [vmem:[%s1 + $0xa70] sm:$0xff]
    %v359 = vld [vmem:[%s1 + $0xa78] sm:$0xff]
    %v360 = vld [vmem:[%s1 + $0xa80] sm:$0xff]
    %v361 = vld [vmem:[%s1 + $0xa88] sm:$0xff]
    %v362 = vld [vmem:[%s1 + $0xa90] sm:$0xff]
    %v363 = vld [vmem:[%s1 + $0xa98] sm:$0xff]
    %v364 = vld [vmem:[%s1 + $0xaa0] sm:$0xff]
    %v365 = vld [vmem:[%s1 + $0xaa8] sm:$0xff]
    %v366 = vld [vmem:[%s1 + $0xab0] sm:$0xff]
    %v367 = vld [vmem:[%s1 + $0xab8] sm:$0xff]
    %v368 = vld [vmem:[%s1 + $0xac0] sm:$0xff]
    %v369 = vld [vmem:[%s1 + $0xac8] sm:$0xff]
    %v370 = vld [vmem:[%s1 + $0xad0] sm:$0xff]
    %v371 = vld [vmem:[%s1 + $0xad8] sm:$0xff]
    %v372 = vld [vmem:[%s1 + $0xae0] sm:$0xff]
    %v373 = vld [vmem:[%s1 + $0xae8] sm:$0xff]
    %v374 = vld [vmem:[%s1 + $0xaf0] sm:$0xff]
    %v375 = vld [vmem:[%s1 + $0xaf8] sm:$0xff]
    %v376 = vld [vmem:[%s1 + $0xb00] sm:$0xff]
    %v377 = vld [vmem:[%s1 + $0xb08] sm:$0xff]
    %v378 = vld [vmem:[%s1 + $0xb10] sm:$0xff]
    %v379 = vld [vmem:[%s1 + $0xb18] sm:$0xff]
    %v380 = vld [vmem:[%s1 + $0xb20] sm:$0xff]
    %v381 = vld [vmem:[%s1 + $0xb28] sm:$0xff]
    %v382 = vld [vmem:[%s1 + $0xb30] sm:$0xff]
    %v383 = vld [vmem:[%s1 + $0xb38] sm:$0xff]
    %v384 = vld [vmem:[%s1 + $0xb40] sm:$0xff]
    %v385 = vld [vmem:[%s1 + $0xb48] sm:$0xff]
    %v386 = vld [vmem:[%s1 + $0xb50] sm:$0xff]
    %v387 = vld [vmem:[%s1 + $0xb58] sm:$0xff]
    %v388 = vld [vmem:[%s1 + $0xb60] sm:$0xff]
    %v389 = vld [vmem:[%s1 + $0xb68] sm:$0xff]
    %v390 = vld [vmem:[%s1 + $0xb70] sm:$0xff]
    %v391 = vld [vmem:[%s1 + $0xb78] sm:$0xff]
    %v392 = vld [vmem:[%s1 + $0xb80] sm:$0xff]
    %v393 = vld [vmem:[%s1 + $0xb88] sm:$0xff]
    %v394 = vld [vmem:[%s1 + $0xb90] sm:$0xff]
    %v395 = vld [vmem:[%s1 + $0xb98] sm:$0xff]
    %v396 = vld [vmem:[%s1 + $0xba0] sm:$0xff]
    %v397 = vld [vmem:[%s1 + $0xba8] sm:$0xff]
    %v398 = vld [vmem:[%s1 + $0xbb0] sm:$0xff]
    %v399 = vld [vmem:[%s1 + $0xbb8] sm:$0xff]
    %v400 = vld [vmem:[%s1 + $0xbc0] sm:$0xff]
    %v401 = vld [vmem:[%s1 + $0xbc8] sm:$0xff]
    %v402 = vld [vmem:[%s1 + $0xbd0] sm:$0xff]
    %v403 = vld [vmem:[%s1 + $0xbd8] sm:$0xff]
    %v404 = vld [vmem:[%s1 + $0xbe0] sm:$0xff]
    %v405 = vld [vmem:[%s1 + $0xbe8] sm:$0xff]
    %v406 = vld [vmem:[%s1 + $0xbf0] sm:$0xff]
    %v407 = vld [vmem:[%s1 + $0xbf8] sm:$0xff]
    %v408 = vld [vmem:[%s1 + $0xc00] sm:$0xff]
    %v409 = vld [vmem:[%s1 + $0xc08] sm:$0xff]
    %v410 = vld [vmem:[%s1 + $0xc10] sm:$0xff]
    %v411 = vld [vmem:[%s1 + $0xc18] sm:$0xff]
    %v412 = vld [vmem:[%s1 + $0xc20] sm:$0xff]
    %v413 = vld [vmem:[%s1 + $0xc28] sm:$0xff]
    %v414 = vld [vmem:[%s1 + $0xc30] sm:$0xff]
    %v415 = vld [vmem:[%s1 + $0xc38] sm:$0xff]
    %v416 = vld [vmem:[%s1 + $0xc40] sm:$0xff]
    %v417 = vld [vmem:[%s1 + $0xc48] sm:$0xff]
    %v418 = vld [vmem:[%s1 + $0xc50] sm:$0xff]
    %v419 = vld [vmem:[%s1 + $0xc58] sm:$0xff]
    %v420 = vld [vmem:[%s1 + $0xc60] sm:$0xff]
    %v421 = vld [vmem:[%s1 + $0xc68] sm:$0xff]
    %v422 = vld [vmem:[%s1 + $0xc70] sm:$0xff]
    %v423 = vld [vmem:[%s1 + $0xc78] sm:$0xff]
    %v424 = vld [vmem:[%s2] sm:$0xf]
    %v426 = vlaneseq
    %v427 = vshrl.u32 %v426, 7
    %v428 = vsub.s32 0, %v427
    %v429 = vrot.slane %v424, %v428
    %v430 = vlaneseq
    %v431 = vshrl.u32 %v430, 7
    %v432 = vsub.s32 1, %v431
    %v433 = vrot.slane %v424, %v432
    %v434 = vlaneseq
    %v435 = vshrl.u32 %v434, 7
    %v436 = vsub.s32 2, %v435
    %v437 = vrot.slane %v424, %v436
    %v438 = vlaneseq
    %v439 = vshrl.u32 %v438, 7
    %v440 = vsub.s32 3, %v439
    %v441 = vrot.slane %v424, %v440
    %v448 = vcombine.high %v22, %v22
    %v450 = vunpack.c.l.s4 1966171168
    %v451 = vunpack.c.0.s8 %v450
    %v452 = vlaneseq
    %v453 = vshrl.u32 %v452, 7
    %v454 = vsub.s32 %v451, %v453
    %v455 = vrot.slane %v22, %v454
    %v457 = vunpack.c.l.s4 1966171168
    %v458 = vunpack.c.0.s8 %v457
    %v459 = vlaneseq
    %v460 = vshrl.u32 %v459, 7
    %v461 = vsub.s32 %v458, %v460
    %v462 = vrot.slane %v448, %v461
    %v463 = vcombine.high %v455, %v455
    %v464 = vcombine.high %v462, %v462
    %v466 = vunpack.c.l.s4 1966171168
    %v467 = vunpack.c.0.s8 %v466
    %v468 = vlaneseq
    %v469 = vshrl.u32 %v468, 7
    %v470 = vsub.s32 %v467, %v469
    %v471 = vrot.slane %v455, %v470
    %v473 = vunpack.c.l.s4 1966171168
    %v474 = vunpack.c.0.s8 %v473
    %v475 = vlaneseq
    %v476 = vshrl.u32 %v475, 7
    %v477 = vsub.s32 %v474, %v476
    %v478 = vrot.slane %v462, %v477
    %v480 = vunpack.c.l.s4 1966171168
    %v481 = vunpack.c.0.s8 %v480
    %v482 = vlaneseq
    %v483 = vshrl.u32 %v482, 7
    %v484 = vsub.s32 %v481, %v483
    %v485 = vrot.slane %v463, %v484
    %v487 = vunpack.c.l.s4 1966171168
    %v488 = vunpack.c.0.s8 %v487
    %v489 = vlaneseq
    %v490 = vshrl.u32 %v489, 7
    %v491 = vsub.s32 %v488, %v490
    %v492 = vrot.slane %v464, %v491
    %v493 = vcombine.high %v471, %v471
    %v494 = vcombine.high %v478, %v478
    %v495 = vcombine.high %v485, %v485
    %v496 = vcombine.high %v492, %v492
    %v497 = vcombine.high %v23, %v23
    %v499 = vunpack.c.l.s4 1966171168
    %v500 = vunpack.c.0.s8 %v499
    %v501 = vlaneseq
    %v502 = vshrl.u32 %v501, 7
    %v503 = vsub.s32 %v500, %v502
    %v504 = vrot.slane %v23, %v503
    %v506 = vunpack.c.l.s4 1966171168
    %v507 = vunpack.c.0.s8 %v506
    %v508 = vlaneseq
    %v509 = vshrl.u32 %v508, 7
    %v510 = vsub.s32 %v507, %v509
    %v511 = vrot.slane %v497, %v510
    %v512 = vcombine.high %v504, %v504
    %v514 = vunpack.c.l.s4 1966171168
    %v515 = vunpack.c.0.s8 %v514
    %v516 = vlaneseq
    %v517 = vshrl.u32 %v516, 7
    %v518 = vsub.s32 %v515, %v517
    %v519 = vrot.slane %v504, %v518
    %v521 = vunpack.c.l.s4 1966171168
    %v522 = vunpack.c.0.s8 %v521
    %v523 = vlaneseq
    %v524 = vshrl.u32 %v523, 7
    %v525 = vsub.s32 %v522, %v524
    %v526 = vrot.slane %v511, %v525
    %v528 = vunpack.c.l.s4 1966171168
    %v529 = vunpack.c.0.s8 %v528
    %v530 = vlaneseq
    %v531 = vshrl.u32 %v530, 7
    %v532 = vsub.s32 %v529, %v531
    %v533 = vrot.slane %v512, %v532
    %v534 = vcombine.high %v519, %v519
    %v535 = vcombine.high %v533, %v533
    %v948 = vunpack.c.l.b16 %v24
    %v949 = vunpack.c.h.b16 %v24
    %v950 = vunpack.c.l.b16 %v25
    %v951 = vunpack.c.h.b16 %v25
    %v952 = vunpack.c.l.b16 %v26
    %v953 = vunpack.c.h.b16 %v26
    %v954 = vunpack.c.l.b16 %v27
    %v955 = vunpack.c.h.b16 %v27
    %v956 = vunpack.c.l.b16 %v28
    %v957 = vunpack.c.h.b16 %v28
    %v958 = vunpack.c.l.b16 %v29
    %v959 = vunpack.c.h.b16 %v29
    %v960 = vunpack.c.l.b16 %v30
    %v961 = vunpack.c.h.b16 %v30
    %v962 = vunpack.c.l.b16 %v31
    %v963 = vunpack.c.h.b16 %v31
    %v964 = vunpack.c.l.b16 %v32
    %v965 = vunpack.c.h.b16 %v32
    %v966 = vunpack.c.l.b16 %v33
    %v967 = vunpack.c.h.b16 %v33
    %v968 = vunpack.c.l.b16 %v34
    %v969 = vunpack.c.h.b16 %v34
    %v970 = vunpack.c.l.b16 %v35
    %v971 = vunpack.c.h.b16 %v35
    %v972 = vunpack.c.l.b16 %v36
    %v973 = vunpack.c.h.b16 %v36
    %v974 = vunpack.c.l.b16 %v37
    %v975 = vunpack.c.h.b16 %v37
    %v976 = vunpack.c.l.b16 %v38
    %v977 = vunpack.c.h.b16 %v38
    %v978 = vunpack.c.l.b16 %v39
    %v979 = vunpack.c.h.b16 %v39
    %v980 = vunpack.c.l.b16 %v40
    %v981 = vunpack.c.h.b16 %v40
    %v982 = vunpack.c.l.b16 %v41
    %v983 = vunpack.c.h.b16 %v41
    %v984 = vunpack.c.l.b16 %v42
    %v985 = vunpack.c.h.b16 %v42
    %v986 = vunpack.c.l.b16 %v43
    %v987 = vunpack.c.h.b16 %v43
    %v988 = vunpack.c.l.b16 %v44
    %v989 = vunpack.c.h.b16 %v44
    %v990 = vunpack.c.l.b16 %v45
    %v991 = vunpack.c.h.b16 %v45
    %v992 = vunpack.c.l.b16 %v46
    %v993 = vunpack.c.h.b16 %v46
    %v994 = vunpack.c.l.b16 %v47
    %v995 = vunpack.c.h.b16 %v47
    %v996 = vunpack.c.l.b16 %v48
    %v997 = vunpack.c.h.b16 %v48
    %v998 = vunpack.c.l.b16 %v49
    %v999 = vunpack.c.h.b16 %v49
    %v1000 = vunpack.c.l.b16 %v50
    %v1001 = vunpack.c.h.b16 %v50
    %v1002 = vunpack.c.l.b16 %v51
    %v1003 = vunpack.c.h.b16 %v51
    %v1004 = vunpack.c.l.b16 %v52
    %v1005 = vunpack.c.h.b16 %v52
    %v1006 = vunpack.c.l.b16 %v53
    %v1007 = vunpack.c.h.b16 %v53
    %v1008 = vunpack.c.l.b16 %v54
    %v1009 = vunpack.c.h.b16 %v54
    %v1010 = vunpack.c.l.b16 %v55
    %v1011 = vunpack.c.h.b16 %v55
    %v1012 = vunpack.c.l.b16 %v56
    %v1013 = vunpack.c.h.b16 %v56
    %v1014 = vunpack.c.l.b16 %v57
    %v1015 = vunpack.c.h.b16 %v57
    %v1016 = vunpack.c.l.b16 %v58
    %v1017 = vunpack.c.h.b16 %v58
    %v1018 = vunpack.c.l.b16 %v59
    %v1019 = vunpack.c.h.b16 %v59
    %v1020 = vunpack.c.l.b16 %v60
    %v1021 = vunpack.c.h.b16 %v60
    %v1022 = vunpack.c.l.b16 %v61
    %v1023 = vunpack.c.h.b16 %v61
    %v1024 = vunpack.c.l.b16 %v62
    %v1025 = vunpack.c.h.b16 %v62
    %v1026 = vunpack.c.l.b16 %v63
    %v1027 = vunpack.c.h.b16 %v63
    %v1028 = vunpack.c.l.b16 %v64
    %v1029 = vunpack.c.h.b16 %v64
    %v1030 = vunpack.c.l.b16 %v65
    %v1031 = vunpack.c.h.b16 %v65
    %v1032 = vunpack.c.l.b16 %v66
    %v1033 = vunpack.c.h.b16 %v66
    %v1034 = vunpack.c.l.b16 %v67
    %v1035 = vunpack.c.h.b16 %v67
    %v1036 = vunpack.c.l.b16 %v68
    %v1037 = vunpack.c.h.b16 %v68
    %v1038 = vunpack.c.l.b16 %v69
    %v1039 = vunpack.c.h.b16 %v69
    %v1040 = vunpack.c.l.b16 %v70
    %v1041 = vunpack.c.h.b16 %v70
    %v1042 = vunpack.c.l.b16 %v71
    %v1043 = vunpack.c.h.b16 %v71
    %v1044 = vunpack.c.l.b16 %v72
    %v1045 = vunpack.c.h.b16 %v72
    %v1046 = vunpack.c.l.b16 %v73
    %v1047 = vunpack.c.h.b16 %v73
    %v1048 = vunpack.c.l.b16 %v74
    %v1049 = vunpack.c.h.b16 %v74
    %v1050 = vunpack.c.l.b16 %v75
    %v1051 = vunpack.c.h.b16 %v75
    %v1052 = vunpack.c.l.b16 %v76
    %v1053 = vunpack.c.h.b16 %v76
    %v1054 = vunpack.c.l.b16 %v77
    %v1055 = vunpack.c.h.b16 %v77
    %v1056 = vunpack.c.l.b16 %v78
    %v1057 = vunpack.c.h.b16 %v78
    %v1058 = vunpack.c.l.b16 %v79
    %v1059 = vunpack.c.h.b16 %v79
    %v1060 = vunpack.c.l.b16 %v80
    %v1061 = vunpack.c.h.b16 %v80
    %v1062 = vunpack.c.l.b16 %v81
    %v1063 = vunpack.c.h.b16 %v81
    %v1064 = vunpack.c.l.b16 %v82
    %v1065 = vunpack.c.h.b16 %v82
    %v1066 = vunpack.c.l.b16 %v83
    %v1067 = vunpack.c.h.b16 %v83
    %v1068 = vunpack.c.l.b16 %v84
    %v1069 = vunpack.c.h.b16 %v84
    %v1070 = vunpack.c.l.b16 %v85
    %v1071 = vunpack.c.h.b16 %v85
    %v1072 = vunpack.c.l.b16 %v86
    %v1073 = vunpack.c.h.b16 %v86
    %v1074 = vunpack.c.l.b16 %v87
    %v1075 = vunpack.c.h.b16 %v87
    %v1076 = vunpack.c.l.b16 %v88
    %v1077 = vunpack.c.h.b16 %v88
    %v1078 = vunpack.c.l.b16 %v89
    %v1079 = vunpack.c.h.b16 %v89
    %v1080 = vunpack.c.l.b16 %v90
    %v1081 = vunpack.c.h.b16 %v90
    %v1082 = vunpack.c.l.b16 %v91
    %v1083 = vunpack.c.h.b16 %v91
    %v1084 = vunpack.c.l.b16 %v92
    %v1085 = vunpack.c.h.b16 %v92
    %v1086 = vunpack.c.l.b16 %v93
    %v1087 = vunpack.c.h.b16 %v93
    %v1088 = vunpack.c.l.b16 %v94
    %v1089 = vunpack.c.h.b16 %v94
    %v1090 = vunpack.c.l.b16 %v95
    %v1091 = vunpack.c.h.b16 %v95
    %v1092 = vunpack.c.l.b16 %v96
    %v1093 = vunpack.c.h.b16 %v96
    %v1094 = vunpack.c.l.b16 %v97
    %v1095 = vunpack.c.h.b16 %v97
    %v1096 = vunpack.c.l.b16 %v98
    %v1097 = vunpack.c.h.b16 %v98
    %v1098 = vunpack.c.l.b16 %v99
    %v1099 = vunpack.c.h.b16 %v99
    %v1100 = vunpack.c.l.b16 %v100
    %v1101 = vunpack.c.h.b16 %v100
    %v1102 = vunpack.c.l.b16 %v101
    %v1103 = vunpack.c.h.b16 %v101
    %v1104 = vunpack.c.l.b16 %v102
    %v1105 = vunpack.c.h.b16 %v102
    %v1106 = vunpack.c.l.b16 %v103
    %v1107 = vunpack.c.h.b16 %v103
    %v1108 = vunpack.c.l.b16 %v104
    %v1109 = vunpack.c.h.b16 %v104
    %v1110 = vunpack.c.l.b16 %v105
    %v1111 = vunpack.c.h.b16 %v105
    %v1112 = vunpack.c.l.b16 %v106
    %v1113 = vunpack.c.h.b16 %v106
    %v1114 = vunpack.c.l.b16 %v107
    %v1115 = vunpack.c.h.b16 %v107
    %v1116 = vunpack.c.l.b16 %v108
    %v1117 = vunpack.c.h.b16 %v108
    %v1118 = vunpack.c.l.b16 %v109
    %v1119 = vunpack.c.h.b16 %v109
    %v1120 = vunpack.c.l.b16 %v110
    %v1121 = vunpack.c.h.b16 %v110
    %v1122 = vunpack.c.l.b16 %v111
    %v1123 = vunpack.c.h.b16 %v111
    %v1124 = vunpack.c.l.b16 %v112
    %v1125 = vunpack.c.h.b16 %v112
    %v1126 = vunpack.c.l.b16 %v113
    %v1127 = vunpack.c.h.b16 %v113
    %v1128 = vunpack.c.l.b16 %v114
    %v1129 = vunpack.c.h.b16 %v114
    %v1130 = vunpack.c.l.b16 %v115
    %v1131 = vunpack.c.h.b16 %v115
    %v1132 = vunpack.c.l.b16 %v116
    %v1133 = vunpack.c.h.b16 %v116
    %v1134 = vunpack.c.l.b16 %v117
    %v1135 = vunpack.c.h.b16 %v117
    %v1136 = vunpack.c.l.b16 %v118
    %v1137 = vunpack.c.h.b16 %v118
    %v1138 = vunpack.c.l.b16 %v119
    %v1139 = vunpack.c.h.b16 %v119
    %v1140 = vunpack.c.l.b16 %v120
    %v1141 = vunpack.c.h.b16 %v120
    %v1142 = vunpack.c.l.b16 %v121
    %v1143 = vunpack.c.h.b16 %v121
    %v1144 = vunpack.c.l.b16 %v122
    %v1145 = vunpack.c.h.b16 %v122
    %v1146 = vunpack.c.l.b16 %v123
    %v1147 = vunpack.c.h.b16 %v123
    %v1148 = vunpack.c.l.b16 %v124
    %v1149 = vunpack.c.h.b16 %v124
    %v1150 = vunpack.c.l.b16 %v125
    %v1151 = vunpack.c.h.b16 %v125
    %v1152 = vunpack.c.l.b16 %v126
    %v1153 = vunpack.c.h.b16 %v126
    %v1154 = vunpack.c.l.b16 %v127
    %v1155 = vunpack.c.h.b16 %v127
    %v1156 = vunpack.c.l.b16 %v128
    %v1157 = vunpack.c.h.b16 %v128
    %v1158 = vunpack.c.l.b16 %v129
    %v1159 = vunpack.c.h.b16 %v129
    %v1160 = vunpack.c.l.b16 %v130
    %v1161 = vunpack.c.h.b16 %v130
    %v1162 = vunpack.c.l.b16 %v131
    %v1163 = vunpack.c.h.b16 %v131
    %v1164 = vunpack.c.l.b16 %v132
    %v1165 = vunpack.c.h.b16 %v132
    %v1166 = vunpack.c.l.b16 %v133
    %v1167 = vunpack.c.h.b16 %v133
    %v1168 = vunpack.c.l.b16 %v134
    %v1169 = vunpack.c.h.b16 %v134
    %v1170 = vunpack.c.l.b16 %v135
    %v1171 = vunpack.c.h.b16 %v135
    %v1172 = vunpack.c.l.b16 %v136
    %v1173 = vunpack.c.h.b16 %v136
    %v1174 = vunpack.c.l.b16 %v137
    %v1175 = vunpack.c.h.b16 %v137
    %v1176 = vunpack.c.l.b16 %v138
    %v1177 = vunpack.c.h.b16 %v138
    %v1178 = vunpack.c.l.b16 %v139
    %v1179 = vunpack.c.h.b16 %v139
    %v1180 = vunpack.c.l.b16 %v140
    %v1181 = vunpack.c.h.b16 %v140
    %v1182 = vunpack.c.l.b16 %v141
    %v1183 = vunpack.c.h.b16 %v141
    %v1184 = vunpack.c.l.b16 %v142
    %v1185 = vunpack.c.h.b16 %v142
    %v1186 = vunpack.c.l.b16 %v143
    %v1187 = vunpack.c.h.b16 %v143
    %v1188 = vunpack.c.l.b16 %v144
    %v1189 = vunpack.c.h.b16 %v144
    %v1190 = vunpack.c.l.b16 %v145
    %v1191 = vunpack.c.h.b16 %v145
    %v1192 = vunpack.c.l.b16 %v146
    %v1193 = vunpack.c.h.b16 %v146
    %v1194 = vunpack.c.l.b16 %v147
    %v1195 = vunpack.c.h.b16 %v147
    %v1196 = vunpack.c.l.b16 %v148
    %v1197 = vunpack.c.h.b16 %v148
    %v1198 = vunpack.c.l.b16 %v149
    %v1199 = vunpack.c.h.b16 %v149
    %v1200 = vunpack.c.l.b16 %v150
    %v1201 = vunpack.c.h.b16 %v150
    %v1202 = vunpack.c.l.b16 %v151
    %v1203 = vunpack.c.h.b16 %v151
    %v1204 = vunpack.c.l.b16 %v152
    %v1205 = vunpack.c.h.b16 %v152
    %v1206 = vunpack.c.l.b16 %v153
    %v1207 = vunpack.c.h.b16 %v153
    %v1208 = vunpack.c.l.b16 %v154
    %v1209 = vunpack.c.h.b16 %v154
    %v1210 = vunpack.c.l.b16 %v155
    %v1211 = vunpack.c.h.b16 %v155
    %v1212 = vunpack.c.l.b16 %v156
    %v1213 = vunpack.c.h.b16 %v156
    %v1214 = vunpack.c.l.b16 %v157
    %v1215 = vunpack.c.h.b16 %v157
    %v1216 = vunpack.c.l.b16 %v158
    %v1217 = vunpack.c.h.b16 %v158
    %v1218 = vunpack.c.l.b16 %v159
    %v1219 = vunpack.c.h.b16 %v159
    %v1220 = vunpack.c.l.b16 %v160
    %v1221 = vunpack.c.h.b16 %v160
    %v1222 = vunpack.c.l.b16 %v161
    %v1223 = vunpack.c.h.b16 %v161
    %v1224 = vunpack.c.l.b16 %v162
    %v1225 = vunpack.c.h.b16 %v162
    %v1226 = vunpack.c.l.b16 %v163
    %v1227 = vunpack.c.h.b16 %v163
    %v1228 = vunpack.c.l.b16 %v164
    %v1229 = vunpack.c.h.b16 %v164
    %v1230 = vunpack.c.l.b16 %v165
    %v1231 = vunpack.c.h.b16 %v165
    %v1232 = vunpack.c.l.b16 %v166
    %v1233 = vunpack.c.h.b16 %v166
    %v1234 = vunpack.c.l.b16 %v167
    %v1235 = vunpack.c.h.b16 %v167
    %v1236 = vunpack.c.l.b16 %v168
    %v1237 = vunpack.c.h.b16 %v168
    %v1238 = vunpack.c.l.b16 %v169
    %v1239 = vunpack.c.h.b16 %v169
    %v1240 = vunpack.c.l.b16 %v170
    %v1241 = vunpack.c.h.b16 %v170
    %v1242 = vunpack.c.l.b16 %v171
    %v1243 = vunpack.c.h.b16 %v171
    %v1244 = vunpack.c.l.b16 %v172
    %v1245 = vunpack.c.h.b16 %v172
    %v1246 = vunpack.c.l.b16 %v173
    %v1247 = vunpack.c.h.b16 %v173
    %v1248 = vunpack.c.l.b16 %v174
    %v1249 = vunpack.c.h.b16 %v174
    %v1250 = vunpack.c.l.b16 %v175
    %v1251 = vunpack.c.h.b16 %v175
    %v1252 = vunpack.c.l.b16 %v176
    %v1253 = vunpack.c.h.b16 %v176
    %v1254 = vunpack.c.l.b16 %v177
    %v1255 = vunpack.c.h.b16 %v177
    %v1256 = vunpack.c.l.b16 %v178
    %v1257 = vunpack.c.h.b16 %v178
    %v1258 = vunpack.c.l.b16 %v179
    %v1259 = vunpack.c.h.b16 %v179
    %v1260 = vunpack.c.l.b16 %v180
    %v1261 = vunpack.c.h.b16 %v180
    %v1262 = vunpack.c.l.b16 %v181
    %v1263 = vunpack.c.h.b16 %v181
    %v1264 = vunpack.c.l.b16 %v182
    %v1265 = vunpack.c.h.b16 %v182
    %v1266 = vunpack.c.l.b16 %v183
    %v1267 = vunpack.c.h.b16 %v183
    %v1268 = vunpack.c.l.b16 %v184
    %v1269 = vunpack.c.h.b16 %v184
    %v1270 = vunpack.c.l.b16 %v185
    %v1271 = vunpack.c.h.b16 %v185
    %v1272 = vunpack.c.l.b16 %v186
    %v1273 = vunpack.c.h.b16 %v186
    %v1274 = vunpack.c.l.b16 %v187
    %v1275 = vunpack.c.h.b16 %v187
    %v1276 = vunpack.c.l.b16 %v188
    %v1277 = vunpack.c.h.b16 %v188
    %v1278 = vunpack.c.l.b16 %v189
    %v1279 = vunpack.c.h.b16 %v189
    %v1280 = vunpack.c.l.b16 %v190
    %v1281 = vunpack.c.h.b16 %v190
    %v1282 = vunpack.c.l.b16 %v191
    %v1283 = vunpack.c.h.b16 %v191
    %v1284 = vunpack.c.l.b16 %v192
    %v1285 = vunpack.c.h.b16 %v192
    %v1286 = vunpack.c.l.b16 %v193
    %v1287 = vunpack.c.h.b16 %v193
    %v1288 = vunpack.c.l.b16 %v194
    %v1289 = vunpack.c.h.b16 %v194
    %v1290 = vunpack.c.l.b16 %v195
    %v1291 = vunpack.c.h.b16 %v195
    %v1292 = vunpack.c.l.b16 %v196
    %v1293 = vunpack.c.h.b16 %v196
    %v1294 = vunpack.c.l.b16 %v197
    %v1295 = vunpack.c.h.b16 %v197
    %v1296 = vunpack.c.l.b16 %v198
    %v1297 = vunpack.c.h.b16 %v198
    %v1298 = vunpack.c.l.b16 %v199
    %v1299 = vunpack.c.h.b16 %v199
    %v1300 = vunpack.c.l.b16 %v200
    %v1301 = vunpack.c.h.b16 %v200
    %v1302 = vunpack.c.l.b16 %v201
    %v1303 = vunpack.c.h.b16 %v201
    %v1304 = vunpack.c.l.b16 %v202
    %v1305 = vunpack.c.h.b16 %v202
    %v1306 = vunpack.c.l.b16 %v203
    %v1307 = vunpack.c.h.b16 %v203
    %v1308 = vunpack.c.l.b16 %v204
    %v1309 = vunpack.c.h.b16 %v204
    %v1310 = vunpack.c.l.b16 %v205
    %v1311 = vunpack.c.h.b16 %v205
    %v1312 = vunpack.c.l.b16 %v206
    %v1313 = vunpack.c.h.b16 %v206
    %v1314 = vunpack.c.l.b16 %v207
    %v1315 = vunpack.c.h.b16 %v207
    %v1316 = vunpack.c.l.b16 %v208
    %v1317 = vunpack.c.h.b16 %v208
    %v1318 = vunpack.c.l.b16 %v209
    %v1319 = vunpack.c.h.b16 %v209
    %v1320 = vunpack.c.l.b16 %v210
    %v1321 = vunpack.c.h.b16 %v210
    %v1322 = vunpack.c.l.b16 %v211
    %v1323 = vunpack.c.h.b16 %v211
    %v1324 = vunpack.c.l.b16 %v212
    %v1325 = vunpack.c.h.b16 %v212
    %v1326 = vunpack.c.l.b16 %v213
    %v1327 = vunpack.c.h.b16 %v213
    %v1328 = vunpack.c.l.b16 %v214
    %v1329 = vunpack.c.h.b16 %v214
    %v1330 = vunpack.c.l.b16 %v215
    %v1331 = vunpack.c.h.b16 %v215
    %v1332 = vunpack.c.l.b16 %v216
    %v1333 = vunpack.c.h.b16 %v216
    %v1334 = vunpack.c.l.b16 %v217
    %v1335 = vunpack.c.h.b16 %v217
    %v1336 = vunpack.c.l.b16 %v218
    %v1337 = vunpack.c.h.b16 %v218
    %v1338 = vunpack.c.l.b16 %v219
    %v1339 = vunpack.c.h.b16 %v219
    %v1340 = vunpack.c.l.b16 %v220
    %v1341 = vunpack.c.h.b16 %v220
    %v1342 = vunpack.c.l.b16 %v221
    %v1343 = vunpack.c.h.b16 %v221
    %v1344 = vunpack.c.l.b16 %v222
    %v1345 = vunpack.c.h.b16 %v222
    %v1346 = vunpack.c.l.b16 %v223
    %v1347 = vunpack.c.h.b16 %v223
    %v1348 = vunpack.c.l.b16 %v224
    %v1349 = vunpack.c.h.b16 %v224
    %v1350 = vunpack.c.l.b16 %v225
    %v1351 = vunpack.c.h.b16 %v225
    %v1352 = vunpack.c.l.b16 %v226
    %v1353 = vunpack.c.h.b16 %v226
    %v1354 = vunpack.c.l.b16 %v227
    %v1355 = vunpack.c.h.b16 %v227
    %v1356 = vunpack.c.l.b16 %v228
    %v1357 = vunpack.c.h.b16 %v228
    %v1358 = vunpack.c.l.b16 %v229
    %v1359 = vunpack.c.h.b16 %v229
    %v1360 = vunpack.c.l.b16 %v230
    %v1361 = vunpack.c.h.b16 %v230
    %v1362 = vunpack.c.l.b16 %v231
    %v1363 = vunpack.c.h.b16 %v231
    %v1364 = vunpack.c.l.b16 %v232
    %v1365 = vunpack.c.h.b16 %v232
    %v1366 = vunpack.c.l.b16 %v233
    %v1367 = vunpack.c.h.b16 %v233
    %v1368 = vunpack.c.l.b16 %v234
    %v1369 = vunpack.c.h.b16 %v234
    %v1370 = vunpack.c.l.b16 %v235
    %v1371 = vunpack.c.h.b16 %v235
    %v1372 = vunpack.c.l.b16 %v236
    %v1373 = vunpack.c.h.b16 %v236
    %v1374 = vunpack.c.l.b16 %v237
    %v1375 = vunpack.c.h.b16 %v237
    %v1376 = vunpack.c.l.b16 %v238
    %v1377 = vunpack.c.h.b16 %v238
    %v1378 = vunpack.c.l.b16 %v239
    %v1379 = vunpack.c.h.b16 %v239
    %v1380 = vunpack.c.l.b16 %v240
    %v1381 = vunpack.c.h.b16 %v240
    %v1382 = vunpack.c.l.b16 %v241
    %v1383 = vunpack.c.h.b16 %v241
    %v1384 = vunpack.c.l.b16 %v242
    %v1385 = vunpack.c.h.b16 %v242
    %v1386 = vunpack.c.l.b16 %v243
    %v1387 = vunpack.c.h.b16 %v243
    %v1388 = vunpack.c.l.b16 %v244
    %v1389 = vunpack.c.h.b16 %v244
    %v1390 = vunpack.c.l.b16 %v245
    %v1391 = vunpack.c.h.b16 %v245
    %v1392 = vunpack.c.l.b16 %v246
    %v1393 = vunpack.c.h.b16 %v246
    %v1394 = vunpack.c.l.b16 %v247
    %v1395 = vunpack.c.h.b16 %v247
    %v1396 = vunpack.c.l.b16 %v248
    %v1397 = vunpack.c.h.b16 %v248
    %v1398 = vunpack.c.l.b16 %v249
    %v1399 = vunpack.c.h.b16 %v249
    %v1400 = vunpack.c.l.b16 %v250
    %v1401 = vunpack.c.h.b16 %v250
    %v1402 = vunpack.c.l.b16 %v251
    %v1403 = vunpack.c.h.b16 %v251
    %v1404 = vunpack.c.l.b16 %v252
    %v1405 = vunpack.c.h.b16 %v252
    %v1406 = vunpack.c.l.b16 %v253
    %v1407 = vunpack.c.h.b16 %v253
    %v1408 = vunpack.c.l.b16 %v254
    %v1409 = vunpack.c.h.b16 %v254
    %v1410 = vunpack.c.l.b16 %v255
    %v1411 = vunpack.c.h.b16 %v255
    %v1412 = vunpack.c.l.b16 %v256
    %v1413 = vunpack.c.h.b16 %v256
    %v1414 = vunpack.c.l.b16 %v257
    %v1415 = vunpack.c.h.b16 %v257
    %v1416 = vunpack.c.l.b16 %v258
    %v1417 = vunpack.c.h.b16 %v258
    %v1418 = vunpack.c.l.b16 %v259
    %v1419 = vunpack.c.h.b16 %v259
    %v1420 = vunpack.c.l.b16 %v260
    %v1421 = vunpack.c.h.b16 %v260
    %v1422 = vunpack.c.l.b16 %v261
    %v1423 = vunpack.c.h.b16 %v261
    %v1424 = vunpack.c.l.b16 %v262
    %v1425 = vunpack.c.h.b16 %v262
    %v1426 = vunpack.c.l.b16 %v263
    %v1427 = vunpack.c.h.b16 %v263
    %v1428 = vunpack.c.l.b16 %v264
    %v1429 = vunpack.c.h.b16 %v264
    %v1430 = vunpack.c.l.b16 %v265
    %v1431 = vunpack.c.h.b16 %v265
    %v1432 = vunpack.c.l.b16 %v266
    %v1433 = vunpack.c.h.b16 %v266
    %v1434 = vunpack.c.l.b16 %v267
    %v1435 = vunpack.c.h.b16 %v267
    %v1436 = vunpack.c.l.b16 %v268
    %v1437 = vunpack.c.h.b16 %v268
    %v1438 = vunpack.c.l.b16 %v269
    %v1439 = vunpack.c.h.b16 %v269
    %v1440 = vunpack.c.l.b16 %v270
    %v1441 = vunpack.c.h.b16 %v270
    %v1442 = vunpack.c.l.b16 %v271
    %v1443 = vunpack.c.h.b16 %v271
    %v1444 = vunpack.c.l.b16 %v272
    %v1445 = vunpack.c.h.b16 %v272
    %v1446 = vunpack.c.l.b16 %v273
    %v1447 = vunpack.c.h.b16 %v273
    %v1448 = vunpack.c.l.b16 %v274
    %v1449 = vunpack.c.h.b16 %v274
    %v1450 = vunpack.c.l.b16 %v275
    %v1451 = vunpack.c.h.b16 %v275
    %v1452 = vunpack.c.l.b16 %v276
    %v1453 = vunpack.c.h.b16 %v276
    %v1454 = vunpack.c.l.b16 %v277
    %v1455 = vunpack.c.h.b16 %v277
    %v1456 = vunpack.c.l.b16 %v278
    %v1457 = vunpack.c.h.b16 %v278
    %v1458 = vunpack.c.l.b16 %v279
    %v1459 = vunpack.c.h.b16 %v279
    %v1460 = vunpack.c.l.b16 %v280
    %v1461 = vunpack.c.h.b16 %v280
    %v1462 = vunpack.c.l.b16 %v281
    %v1463 = vunpack.c.h.b16 %v281
    %v1464 = vunpack.c.l.b16 %v282
    %v1465 = vunpack.c.h.b16 %v282
    %v1466 = vunpack.c.l.b16 %v283
    %v1467 = vunpack.c.h.b16 %v283
    %v1468 = vunpack.c.l.b16 %v284
    %v1469 = vunpack.c.h.b16 %v284
    %v1470 = vunpack.c.l.b16 %v285
    %v1471 = vunpack.c.h.b16 %v285
    %v1472 = vunpack.c.l.b16 %v286
    %v1473 = vunpack.c.h.b16 %v286
    %v1474 = vunpack.c.l.b16 %v287
    %v1475 = vunpack.c.h.b16 %v287
    %v1476 = vunpack.c.l.b16 %v288
    %v1477 = vunpack.c.h.b16 %v288
    %v1478 = vunpack.c.l.b16 %v289
    %v1479 = vunpack.c.h.b16 %v289
    %v1480 = vunpack.c.l.b16 %v290
    %v1481 = vunpack.c.h.b16 %v290
    %v1482 = vunpack.c.l.b16 %v291
    %v1483 = vunpack.c.h.b16 %v291
    %v1484 = vunpack.c.l.b16 %v292
    %v1485 = vunpack.c.h.b16 %v292
    %v1486 = vunpack.c.l.b16 %v293
    %v1487 = vunpack.c.h.b16 %v293
    %v1488 = vunpack.c.l.b16 %v294
    %v1489 = vunpack.c.h.b16 %v294
    %v1490 = vunpack.c.l.b16 %v295
    %v1491 = vunpack.c.h.b16 %v295
    %v1492 = vunpack.c.l.b16 %v296
    %v1493 = vunpack.c.h.b16 %v296
    %v1494 = vunpack.c.l.b16 %v297
    %v1495 = vunpack.c.h.b16 %v297
    %v1496 = vunpack.c.l.b16 %v298
    %v1497 = vunpack.c.h.b16 %v298
    %v1498 = vunpack.c.l.b16 %v299
    %v1499 = vunpack.c.h.b16 %v299
    %v1500 = vunpack.c.l.b16 %v300
    %v1501 = vunpack.c.h.b16 %v300
    %v1502 = vunpack.c.l.b16 %v301
    %v1503 = vunpack.c.h.b16 %v301
    %v1504 = vunpack.c.l.b16 %v302
    %v1505 = vunpack.c.h.b16 %v302
    %v1506 = vunpack.c.l.b16 %v303
    %v1507 = vunpack.c.h.b16 %v303
    %v1508 = vunpack.c.l.b16 %v304
    %v1509 = vunpack.c.h.b16 %v304
    %v1510 = vunpack.c.l.b16 %v305
    %v1511 = vunpack.c.h.b16 %v305
    %v1512 = vunpack.c.l.b16 %v306
    %v1513 = vunpack.c.h.b16 %v306
    %v1514 = vunpack.c.l.b16 %v307
    %v1515 = vunpack.c.h.b16 %v307
    %v1516 = vunpack.c.l.b16 %v308
    %v1517 = vunpack.c.h.b16 %v308
    %v1518 = vunpack.c.l.b16 %v309
    %v1519 = vunpack.c.h.b16 %v309
    %v1520 = vunpack.c.l.b16 %v310
    %v1521 = vunpack.c.h.b16 %v310
    %v1522 = vunpack.c.l.b16 %v311
    %v1523 = vunpack.c.h.b16 %v311
    %v1524 = vunpack.c.l.b16 %v312
    %v1525 = vunpack.c.h.b16 %v312
    %v1526 = vunpack.c.l.b16 %v313
    %v1527 = vunpack.c.h.b16 %v313
    %v1528 = vunpack.c.l.b16 %v314
    %v1529 = vunpack.c.h.b16 %v314
    %v1530 = vunpack.c.l.b16 %v315
    %v1531 = vunpack.c.h.b16 %v315
    %v1532 = vunpack.c.l.b16 %v316
    %v1533 = vunpack.c.h.b16 %v316
    %v1534 = vunpack.c.l.b16 %v317
    %v1535 = vunpack.c.h.b16 %v317
    %v1536 = vunpack.c.l.b16 %v318
    %v1537 = vunpack.c.h.b16 %v318
    %v1538 = vunpack.c.l.b16 %v319
    %v1539 = vunpack.c.h.b16 %v319
    %v1540 = vunpack.c.l.b16 %v320
    %v1541 = vunpack.c.h.b16 %v320
    %v1542 = vunpack.c.l.b16 %v321
    %v1543 = vunpack.c.h.b16 %v321
    %v1544 = vunpack.c.l.b16 %v322
    %v1545 = vunpack.c.h.b16 %v322
    %v1546 = vunpack.c.l.b16 %v323
    %v1547 = vunpack.c.h.b16 %v323
    %v1548 = vunpack.c.l.b16 %v324
    %v1549 = vunpack.c.h.b16 %v324
    %v1550 = vunpack.c.l.b16 %v325
    %v1551 = vunpack.c.h.b16 %v325
    %v1552 = vunpack.c.l.b16 %v326
    %v1553 = vunpack.c.h.b16 %v326
    %v1554 = vunpack.c.l.b16 %v327
    %v1555 = vunpack.c.h.b16 %v327
    %v1556 = vunpack.c.l.b16 %v328
    %v1557 = vunpack.c.h.b16 %v328
    %v1558 = vunpack.c.l.b16 %v329
    %v1559 = vunpack.c.h.b16 %v329
    %v1560 = vunpack.c.l.b16 %v330
    %v1561 = vunpack.c.h.b16 %v330
    %v1562 = vunpack.c.l.b16 %v331
    %v1563 = vunpack.c.h.b16 %v331
    %v1564 = vunpack.c.l.b16 %v332
    %v1565 = vunpack.c.h.b16 %v332
    %v1566 = vunpack.c.l.b16 %v333
    %v1567 = vunpack.c.h.b16 %v333
    %v1568 = vunpack.c.l.b16 %v334
    %v1569 = vunpack.c.h.b16 %v334
    %v1570 = vunpack.c.l.b16 %v335
    %v1571 = vunpack.c.h.b16 %v335
    %v1572 = vunpack.c.l.b16 %v336
    %v1573 = vunpack.c.h.b16 %v336
    %v1574 = vunpack.c.l.b16 %v337
    %v1575 = vunpack.c.h.b16 %v337
    %v1576 = vunpack.c.l.b16 %v338
    %v1577 = vunpack.c.h.b16 %v338
    %v1578 = vunpack.c.l.b16 %v339
    %v1579 = vunpack.c.h.b16 %v339
    %v1580 = vunpack.c.l.b16 %v340
    %v1581 = vunpack.c.h.b16 %v340
    %v1582 = vunpack.c.l.b16 %v341
    %v1583 = vunpack.c.h.b16 %v341
    %v1584 = vunpack.c.l.b16 %v342
    %v1585 = vunpack.c.h.b16 %v342
    %v1586 = vunpack.c.l.b16 %v343
    %v1587 = vunpack.c.h.b16 %v343
    %v1588 = vunpack.c.l.b16 %v344
    %v1589 = vunpack.c.h.b16 %v344
    %v1590 = vunpack.c.l.b16 %v345
    %v1591 = vunpack.c.h.b16 %v345
    %v1592 = vunpack.c.l.b16 %v346
    %v1593 = vunpack.c.h.b16 %v346
    %v1594 = vunpack.c.l.b16 %v347
    %v1595 = vunpack.c.h.b16 %v347
    %v1596 = vunpack.c.l.b16 %v348
    %v1597 = vunpack.c.h.b16 %v348
    %v1598 = vunpack.c.l.b16 %v349
    %v1599 = vunpack.c.h.b16 %v349
    %v1600 = vunpack.c.l.b16 %v350
    %v1601 = vunpack.c.h.b16 %v350
    %v1602 = vunpack.c.l.b16 %v351
    %v1603 = vunpack.c.h.b16 %v351
    %v1604 = vunpack.c.l.b16 %v352
    %v1605 = vunpack.c.h.b16 %v352
    %v1606 = vunpack.c.l.b16 %v353
    %v1607 = vunpack.c.h.b16 %v353
    %v1608 = vunpack.c.l.b16 %v354
    %v1609 = vunpack.c.h.b16 %v354
    %v1610 = vunpack.c.l.b16 %v355
    %v1611 = vunpack.c.h.b16 %v355
    %v1612 = vunpack.c.l.b16 %v356
    %v1613 = vunpack.c.h.b16 %v356
    %v1614 = vunpack.c.l.b16 %v357
    %v1615 = vunpack.c.h.b16 %v357
    %v1616 = vunpack.c.l.b16 %v358
    %v1617 = vunpack.c.h.b16 %v358
    %v1618 = vunpack.c.l.b16 %v359
    %v1619 = vunpack.c.h.b16 %v359
    %v1620 = vunpack.c.l.b16 %v360
    %v1621 = vunpack.c.h.b16 %v360
    %v1622 = vunpack.c.l.b16 %v361
    %v1623 = vunpack.c.h.b16 %v361
    %v1624 = vunpack.c.l.b16 %v362
    %v1625 = vunpack.c.h.b16 %v362
    %v1626 = vunpack.c.l.b16 %v363
    %v1627 = vunpack.c.h.b16 %v363
    %v1628 = vunpack.c.l.b16 %v364
    %v1629 = vunpack.c.h.b16 %v364
    %v1630 = vunpack.c.l.b16 %v365
    %v1631 = vunpack.c.h.b16 %v365
    %v1632 = vunpack.c.l.b16 %v366
    %v1633 = vunpack.c.h.b16 %v366
    %v1634 = vunpack.c.l.b16 %v367
    %v1635 = vunpack.c.h.b16 %v367
    %v1636 = vunpack.c.l.b16 %v368
    %v1637 = vunpack.c.h.b16 %v368
    %v1638 = vunpack.c.l.b16 %v369
    %v1639 = vunpack.c.h.b16 %v369
    %v1640 = vunpack.c.l.b16 %v370
    %v1641 = vunpack.c.h.b16 %v370
    %v1642 = vunpack.c.l.b16 %v371
    %v1643 = vunpack.c.h.b16 %v371
    %v1644 = vunpack.c.l.b16 %v372
    %v1645 = vunpack.c.h.b16 %v372
    %v1646 = vunpack.c.l.b16 %v373
    %v1647 = vunpack.c.h.b16 %v373
    %v1648 = vunpack.c.l.b16 %v374
    %v1649 = vunpack.c.h.b16 %v374
    %v1650 = vunpack.c.l.b16 %v375
    %v1651 = vunpack.c.h.b16 %v375
    %v1652 = vunpack.c.l.b16 %v376
    %v1653 = vunpack.c.h.b16 %v376
    %v1654 = vunpack.c.l.b16 %v377
    %v1655 = vunpack.c.h.b16 %v377
    %v1656 = vunpack.c.l.b16 %v378
    %v1657 = vunpack.c.h.b16 %v378
    %v1658 = vunpack.c.l.b16 %v379
    %v1659 = vunpack.c.h.b16 %v379
    %v1660 = vunpack.c.l.b16 %v380
    %v1661 = vunpack.c.h.b16 %v380
    %v1662 = vunpack.c.l.b16 %v381
    %v1663 = vunpack.c.h.b16 %v381
    %v1664 = vunpack.c.l.b16 %v382
    %v1665 = vunpack.c.h.b16 %v382
    %v1666 = vunpack.c.l.b16 %v383
    %v1667 = vunpack.c.h.b16 %v383
    %v1668 = vunpack.c.l.b16 %v384
    %v1669 = vunpack.c.h.b16 %v384
    %v1670 = vunpack.c.l.b16 %v385
    %v1671 = vunpack.c.h.b16 %v385
    %v1672 = vunpack.c.l.b16 %v386
    %v1673 = vunpack.c.h.b16 %v386
    %v1674 = vunpack.c.l.b16 %v387
    %v1675 = vunpack.c.h.b16 %v387
    %v1676 = vunpack.c.l.b16 %v388
    %v1677 = vunpack.c.h.b16 %v388
    %v1678 = vunpack.c.l.b16 %v389
    %v1679 = vunpack.c.h.b16 %v389
    %v1680 = vunpack.c.l.b16 %v390
    %v1681 = vunpack.c.h.b16 %v390
    %v1682 = vunpack.c.l.b16 %v391
    %v1683 = vunpack.c.h.b16 %v391
    %v1684 = vunpack.c.l.b16 %v392
    %v1685 = vunpack.c.h.b16 %v392
    %v1686 = vunpack.c.l.b16 %v393
    %v1687 = vunpack.c.h.b16 %v393
    %v1688 = vunpack.c.l.b16 %v394
    %v1689 = vunpack.c.h.b16 %v394
    %v1690 = vunpack.c.l.b16 %v395
    %v1691 = vunpack.c.h.b16 %v395
    %v1692 = vunpack.c.l.b16 %v396
    %v1693 = vunpack.c.h.b16 %v396
    %v1694 = vunpack.c.l.b16 %v397
    %v1695 = vunpack.c.h.b16 %v397
    %v1696 = vunpack.c.l.b16 %v398
    %v1697 = vunpack.c.h.b16 %v398
    %v1698 = vunpack.c.l.b16 %v399
    %v1699 = vunpack.c.h.b16 %v399
    %v1700 = vunpack.c.l.b16 %v400
    %v1701 = vunpack.c.h.b16 %v400
    %v1702 = vunpack.c.l.b16 %v401
    %v1703 = vunpack.c.h.b16 %v401
    %v1704 = vunpack.c.l.b16 %v402
    %v1705 = vunpack.c.h.b16 %v402
    %v1706 = vunpack.c.l.b16 %v403
    %v1707 = vunpack.c.h.b16 %v403
    %v1708 = vunpack.c.l.b16 %v404
    %v1709 = vunpack.c.h.b16 %v404
    %v1710 = vunpack.c.l.b16 %v405
    %v1711 = vunpack.c.h.b16 %v405
    %v1712 = vunpack.c.l.b16 %v406
    %v1713 = vunpack.c.h.b16 %v406
    %v1714 = vunpack.c.l.b16 %v407
    %v1715 = vunpack.c.h.b16 %v407
    %v1716 = vunpack.c.l.b16 %v408
    %v1717 = vunpack.c.h.b16 %v408
    %v1718 = vunpack.c.l.b16 %v409
    %v1719 = vunpack.c.h.b16 %v409
    %v1720 = vunpack.c.l.b16 %v410
    %v1721 = vunpack.c.h.b16 %v410
    %v1722 = vunpack.c.l.b16 %v411
    %v1723 = vunpack.c.h.b16 %v411
    %v1724 = vunpack.c.l.b16 %v412
    %v1725 = vunpack.c.h.b16 %v412
    %v1726 = vunpack.c.l.b16 %v413
    %v1727 = vunpack.c.h.b16 %v413
    %v1728 = vunpack.c.l.b16 %v414
    %v1729 = vunpack.c.h.b16 %v414
    %v1730 = vunpack.c.l.b16 %v415
    %v1731 = vunpack.c.h.b16 %v415
    %v1732 = vunpack.c.l.b16 %v416
    %v1733 = vunpack.c.h.b16 %v416
    %v1734 = vunpack.c.l.b16 %v417
    %v1735 = vunpack.c.h.b16 %v417
    %v1736 = vunpack.c.l.b16 %v418
    %v1737 = vunpack.c.h.b16 %v418
    %v1738 = vunpack.c.l.b16 %v419
    %v1739 = vunpack.c.h.b16 %v419
    %v1740 = vunpack.c.l.b16 %v420
    %v1741 = vunpack.c.h.b16 %v420
    %v1742 = vunpack.c.l.b16 %v421
    %v1743 = vunpack.c.h.b16 %v421
    %v1744 = vunpack.c.l.b16 %v422
    %v1745 = vunpack.c.h.b16 %v422
    %v1746 = vunpack.c.l.b16 %v423
    %v1747 = vunpack.c.h.b16 %v423
    %v1748 = vpack.c.b16 %v952, %v948
    %v1749 = vpack.c.b16 %v953, %v949
    %v1750 = vpack.c.b16 %v954, %v950
    %v1751 = vpack.c.b16 %v955, %v951
    %v1752 = vpack.c.b16 %v960, %v956
    %v1753 = vpack.c.b16 %v961, %v957
    %v1754 = vpack.c.b16 %v962, %v958
    %v1755 = vpack.c.b16 %v963, %v959
    %v1756 = vpack.c.b16 %v968, %v964
    %v1757 = vpack.c.b16 %v969, %v965
    %v1758 = vpack.c.b16 %v970, %v966
    %v1759 = vpack.c.b16 %v971, %v967
    %v1760 = vpack.c.b16 %v976, %v972
    %v1761 = vpack.c.b16 %v977, %v973
    %v1762 = vpack.c.b16 %v978, %v974
    %v1763 = vpack.c.b16 %v979, %v975
    %v1764 = vpack.c.b16 %v984, %v980
    %v1765 = vpack.c.b16 %v985, %v981
    %v1766 = vpack.c.b16 %v986, %v982
    %v1767 = vpack.c.b16 %v987, %v983
    %v1768 = vpack.c.b16 %v992, %v988
    %v1769 = vpack.c.b16 %v993, %v989
    %v1770 = vpack.c.b16 %v994, %v990
    %v1771 = vpack.c.b16 %v995, %v991
    %v1772 = vpack.c.b16 %v1000, %v996
    %v1773 = vpack.c.b16 %v1001, %v997
    %v1774 = vpack.c.b16 %v1002, %v998
    %v1775 = vpack.c.b16 %v1003, %v999
    %v1776 = vpack.c.b16 %v1008, %v1004
    %v1777 = vpack.c.b16 %v1009, %v1005
    %v1778 = vpack.c.b16 %v1010, %v1006
    %v1779 = vpack.c.b16 %v1011, %v1007
    %v1780 = vpack.c.b16 %v1016, %v1012
    %v1781 = vpack.c.b16 %v1017, %v1013
    %v1782 = vpack.c.b16 %v1018, %v1014
    %v1783 = vpack.c.b16 %v1019, %v1015
    %v1784 = vpack.c.b16 %v1024, %v1020
    %v1785 = vpack.c.b16 %v1025, %v1021
    %v1786 = vpack.c.b16 %v1026, %v1022
    %v1787 = vpack.c.b16 %v1027, %v1023
    %v1788 = vpack.c.b16 %v1032, %v1028
    %v1789 = vpack.c.b16 %v1033, %v1029
    %v1790 = vpack.c.b16 %v1034, %v1030
    %v1791 = vpack.c.b16 %v1035, %v1031
    %v1792 = vpack.c.b16 %v1040, %v1036
    %v1793 = vpack.c.b16 %v1041, %v1037
    %v1794 = vpack.c.b16 %v1042, %v1038
    %v1795 = vpack.c.b16 %v1043, %v1039
    %v1796 = vpack.c.b16 %v1048, %v1044
    %v1797 = vpack.c.b16 %v1049, %v1045
    %v1798 = vpack.c.b16 %v1050, %v1046
    %v1799 = vpack.c.b16 %v1051, %v1047
    %v1800 = vpack.c.b16 %v1056, %v1052
    %v1801 = vpack.c.b16 %v1057, %v1053
    %v1802 = vpack.c.b16 %v1058, %v1054
    %v1803 = vpack.c.b16 %v1059, %v1055
    %v1804 = vpack.c.b16 %v1064, %v1060
    %v1805 = vpack.c.b16 %v1065, %v1061
    %v1806 = vpack.c.b16 %v1066, %v1062
    %v1807 = vpack.c.b16 %v1067, %v1063
    %v1808 = vpack.c.b16 %v1072, %v1068
    %v1809 = vpack.c.b16 %v1073, %v1069
    %v1810 = vpack.c.b16 %v1074, %v1070
    %v1811 = vpack.c.b16 %v1075, %v1071
    %v1812 = vpack.c.b16 %v1080, %v1076
    %v1813 = vpack.c.b16 %v1081, %v1077
    %v1814 = vpack.c.b16 %v1082, %v1078
    %v1815 = vpack.c.b16 %v1083, %v1079
    %v1816 = vpack.c.b16 %v1088, %v1084
    %v1817 = vpack.c.b16 %v1089, %v1085
    %v1818 = vpack.c.b16 %v1090, %v1086
    %v1819 = vpack.c.b16 %v1091, %v1087
    %v1820 = vpack.c.b16 %v1096, %v1092
    %v1821 = vpack.c.b16 %v1097, %v1093
    %v1822 = vpack.c.b16 %v1098, %v1094
    %v1823 = vpack.c.b16 %v1099, %v1095
    %v1824 = vpack.c.b16 %v1104, %v1100
    %v1825 = vpack.c.b16 %v1105, %v1101
    %v1826 = vpack.c.b16 %v1106, %v1102
    %v1827 = vpack.c.b16 %v1107, %v1103
    %v1828 = vpack.c.b16 %v1112, %v1108
    %v1829 = vpack.c.b16 %v1113, %v1109
    %v1830 = vpack.c.b16 %v1114, %v1110
    %v1831 = vpack.c.b16 %v1115, %v1111
    %v1832 = vpack.c.b16 %v1120, %v1116
    %v1833 = vpack.c.b16 %v1121, %v1117
    %v1834 = vpack.c.b16 %v1122, %v1118
    %v1835 = vpack.c.b16 %v1123, %v1119
    %v1836 = vpack.c.b16 %v1128, %v1124
    %v1837 = vpack.c.b16 %v1129, %v1125
    %v1838 = vpack.c.b16 %v1130, %v1126
    %v1839 = vpack.c.b16 %v1131, %v1127
    %v1840 = vpack.c.b16 %v1136, %v1132
    %v1841 = vpack.c.b16 %v1137, %v1133
    %v1842 = vpack.c.b16 %v1138, %v1134
    %v1843 = vpack.c.b16 %v1139, %v1135
    %v1844 = vpack.c.b16 %v1144, %v1140
    %v1845 = vpack.c.b16 %v1145, %v1141
    %v1846 = vpack.c.b16 %v1146, %v1142
    %v1847 = vpack.c.b16 %v1147, %v1143
    %v1848 = vpack.c.b16 %v1152, %v1148
    %v1849 = vpack.c.b16 %v1153, %v1149
    %v1850 = vpack.c.b16 %v1154, %v1150
    %v1851 = vpack.c.b16 %v1155, %v1151
    %v1852 = vpack.c.b16 %v1160, %v1156
    %v1853 = vpack.c.b16 %v1161, %v1157
    %v1854 = vpack.c.b16 %v1162, %v1158
    %v1855 = vpack.c.b16 %v1163, %v1159
    %v1856 = vpack.c.b16 %v1168, %v1164
    %v1857 = vpack.c.b16 %v1169, %v1165
    %v1858 = vpack.c.b16 %v1170, %v1166
    %v1859 = vpack.c.b16 %v1171, %v1167
    %v1860 = vpack.c.b16 %v1176, %v1172
    %v1861 = vpack.c.b16 %v1177, %v1173
    %v1862 = vpack.c.b16 %v1178, %v1174
    %v1863 = vpack.c.b16 %v1179, %v1175
    %v1864 = vpack.c.b16 %v1184, %v1180
    %v1865 = vpack.c.b16 %v1185, %v1181
    %v1866 = vpack.c.b16 %v1186, %v1182
    %v1867 = vpack.c.b16 %v1187, %v1183
    %v1868 = vpack.c.b16 %v1192, %v1188
    %v1869 = vpack.c.b16 %v1193, %v1189
    %v1870 = vpack.c.b16 %v1194, %v1190
    %v1871 = vpack.c.b16 %v1195, %v1191
    %v1872 = vpack.c.b16 %v1200, %v1196
    %v1873 = vpack.c.b16 %v1201, %v1197
    %v1874 = vpack.c.b16 %v1202, %v1198
    %v1875 = vpack.c.b16 %v1203, %v1199
    %v1876 = vpack.c.b16 %v1208, %v1204
    %v1877 = vpack.c.b16 %v1209, %v1205
    %v1878 = vpack.c.b16 %v1210, %v1206
    %v1879 = vpack.c.b16 %v1211, %v1207
    %v1880 = vpack.c.b16 %v1216, %v1212
    %v1881 = vpack.c.b16 %v1217, %v1213
    %v1882 = vpack.c.b16 %v1218, %v1214
    %v1883 = vpack.c.b16 %v1219, %v1215
    %v1884 = vpack.c.b16 %v1224, %v1220
    %v1885 = vpack.c.b16 %v1225, %v1221
    %v1886 = vpack.c.b16 %v1226, %v1222
    %v1887 = vpack.c.b16 %v1227, %v1223
    %v1888 = vpack.c.b16 %v1232, %v1228
    %v1889 = vpack.c.b16 %v1233, %v1229
    %v1890 = vpack.c.b16 %v1234, %v1230
    %v1891 = vpack.c.b16 %v1235, %v1231
    %v1892 = vpack.c.b16 %v1240, %v1236
    %v1893 = vpack.c.b16 %v1241, %v1237
    %v1894 = vpack.c.b16 %v1242, %v1238
    %v1895 = vpack.c.b16 %v1243, %v1239
    %v1896 = vpack.c.b16 %v1248, %v1244
    %v1897 = vpack.c.b16 %v1249, %v1245
    %v1898 = vpack.c.b16 %v1250, %v1246
    %v1899 = vpack.c.b16 %v1251, %v1247
    %v1900 = vpack.c.b16 %v1256, %v1252
    %v1901 = vpack.c.b16 %v1257, %v1253
    %v1902 = vpack.c.b16 %v1258, %v1254
    %v1903 = vpack.c.b16 %v1259, %v1255
    %v1904 = vpack.c.b16 %v1264, %v1260
    %v1905 = vpack.c.b16 %v1265, %v1261
    %v1906 = vpack.c.b16 %v1266, %v1262
    %v1907 = vpack.c.b16 %v1267, %v1263
    %v1908 = vpack.c.b16 %v1272, %v1268
    %v1909 = vpack.c.b16 %v1273, %v1269
    %v1910 = vpack.c.b16 %v1274, %v1270
    %v1911 = vpack.c.b16 %v1275, %v1271
    %v1912 = vpack.c.b16 %v1280, %v1276
    %v1913 = vpack.c.b16 %v1281, %v1277
    %v1914 = vpack.c.b16 %v1282, %v1278
    %v1915 = vpack.c.b16 %v1283, %v1279
    %v1916 = vpack.c.b16 %v1288, %v1284
    %v1917 = vpack.c.b16 %v1289, %v1285
    %v1918 = vpack.c.b16 %v1290, %v1286
    %v1919 = vpack.c.b16 %v1291, %v1287
    %v1920 = vpack.c.b16 %v1296, %v1292
    %v1921 = vpack.c.b16 %v1297, %v1293
    %v1922 = vpack.c.b16 %v1298, %v1294
    %v1923 = vpack.c.b16 %v1299, %v1295
    %v1924 = vpack.c.b16 %v1304, %v1300
    %v1925 = vpack.c.b16 %v1305, %v1301
    %v1926 = vpack.c.b16 %v1306, %v1302
    %v1927 = vpack.c.b16 %v1307, %v1303
    %v1928 = vpack.c.b16 %v1312, %v1308
    %v1929 = vpack.c.b16 %v1313, %v1309
    %v1930 = vpack.c.b16 %v1314, %v1310
    %v1931 = vpack.c.b16 %v1315, %v1311
    %v1932 = vpack.c.b16 %v1320, %v1316
    %v1933 = vpack.c.b16 %v1321, %v1317
    %v1934 = vpack.c.b16 %v1322, %v1318
    %v1935 = vpack.c.b16 %v1323, %v1319
    %v1936 = vpack.c.b16 %v1328, %v1324
    %v1937 = vpack.c.b16 %v1329, %v1325
    %v1938 = vpack.c.b16 %v1330, %v1326
    %v1939 = vpack.c.b16 %v1331, %v1327
    %v1940 = vpack.c.b16 %v1336, %v1332
    %v1941 = vpack.c.b16 %v1337, %v1333
    %v1942 = vpack.c.b16 %v1338, %v1334
    %v1943 = vpack.c.b16 %v1339, %v1335
    %v1944 = vpack.c.b16 %v1344, %v1340
    %v1945 = vpack.c.b16 %v1345, %v1341
    %v1946 = vpack.c.b16 %v1346, %v1342
    %v1947 = vpack.c.b16 %v1347, %v1343
    %v1948 = vpack.c.b16 %v1352, %v1348
    %v1949 = vpack.c.b16 %v1353, %v1349
    %v1950 = vpack.c.b16 %v1354, %v1350
    %v1951 = vpack.c.b16 %v1355, %v1351
    %v1952 = vpack.c.b16 %v1360, %v1356
    %v1953 = vpack.c.b16 %v1361, %v1357
    %v1954 = vpack.c.b16 %v1362, %v1358
    %v1955 = vpack.c.b16 %v1363, %v1359
    %v1956 = vpack.c.b16 %v1368, %v1364
    %v1957 = vpack.c.b16 %v1369, %v1365
    %v1958 = vpack.c.b16 %v1370, %v1366
    %v1959 = vpack.c.b16 %v1371, %v1367
    %v1960 = vpack.c.b16 %v1376, %v1372
    %v1961 = vpack.c.b16 %v1377, %v1373
    %v1962 = vpack.c.b16 %v1378, %v1374
    %v1963 = vpack.c.b16 %v1379, %v1375
    %v1964 = vpack.c.b16 %v1384, %v1380
    %v1965 = vpack.c.b16 %v1385, %v1381
    %v1966 = vpack.c.b16 %v1386, %v1382
    %v1967 = vpack.c.b16 %v1387, %v1383
    %v1968 = vpack.c.b16 %v1392, %v1388
    %v1969 = vpack.c.b16 %v1393, %v1389
    %v1970 = vpack.c.b16 %v1394, %v1390
    %v1971 = vpack.c.b16 %v1395, %v1391
    %v1972 = vpack.c.b16 %v1400, %v1396
    %v1973 = vpack.c.b16 %v1401, %v1397
    %v1974 = vpack.c.b16 %v1402, %v1398
    %v1975 = vpack.c.b16 %v1403, %v1399
    %v1976 = vpack.c.b16 %v1408, %v1404
    %v1977 = vpack.c.b16 %v1409, %v1405
    %v1978 = vpack.c.b16 %v1410, %v1406
    %v1979 = vpack.c.b16 %v1411, %v1407
    %v1980 = vpack.c.b16 %v1416, %v1412
    %v1981 = vpack.c.b16 %v1417, %v1413
    %v1982 = vpack.c.b16 %v1418, %v1414
    %v1983 = vpack.c.b16 %v1419, %v1415
    %v1984 = vpack.c.b16 %v1424, %v1420
    %v1985 = vpack.c.b16 %v1425, %v1421
    %v1986 = vpack.c.b16 %v1426, %v1422
    %v1987 = vpack.c.b16 %v1427, %v1423
    %v1988 = vpack.c.b16 %v1432, %v1428
    %v1989 = vpack.c.b16 %v1433, %v1429
    %v1990 = vpack.c.b16 %v1434, %v1430
    %v1991 = vpack.c.b16 %v1435, %v1431
    %v1992 = vpack.c.b16 %v1440, %v1436
    %v1993 = vpack.c.b16 %v1441, %v1437
    %v1994 = vpack.c.b16 %v1442, %v1438
    %v1995 = vpack.c.b16 %v1443, %v1439
    %v1996 = vpack.c.b16 %v1448, %v1444
    %v1997 = vpack.c.b16 %v1449, %v1445
    %v1998 = vpack.c.b16 %v1450, %v1446
    %v1999 = vpack.c.b16 %v1451, %v1447
    %v2000 = vpack.c.b16 %v1456, %v1452
    %v2001 = vpack.c.b16 %v1457, %v1453
    %v2002 = vpack.c.b16 %v1458, %v1454
    %v2003 = vpack.c.b16 %v1459, %v1455
    %v2004 = vpack.c.b16 %v1464, %v1460
    %v2005 = vpack.c.b16 %v1465, %v1461
    %v2006 = vpack.c.b16 %v1466, %v1462
    %v2007 = vpack.c.b16 %v1467, %v1463
    %v2008 = vpack.c.b16 %v1472, %v1468
    %v2009 = vpack.c.b16 %v1473, %v1469
    %v2010 = vpack.c.b16 %v1474, %v1470
    %v2011 = vpack.c.b16 %v1475, %v1471
    %v2012 = vpack.c.b16 %v1480, %v1476
    %v2013 = vpack.c.b16 %v1481, %v1477
    %v2014 = vpack.c.b16 %v1482, %v1478
    %v2015 = vpack.c.b16 %v1483, %v1479
    %v2016 = vpack.c.b16 %v1488, %v1484
    %v2017 = vpack.c.b16 %v1489, %v1485
    %v2018 = vpack.c.b16 %v1490, %v1486
    %v2019 = vpack.c.b16 %v1491, %v1487
    %v2020 = vpack.c.b16 %v1496, %v1492
    %v2021 = vpack.c.b16 %v1497, %v1493
    %v2022 = vpack.c.b16 %v1498, %v1494
    %v2023 = vpack.c.b16 %v1499, %v1495
    %v2024 = vpack.c.b16 %v1504, %v1500
    %v2025 = vpack.c.b16 %v1505, %v1501
    %v2026 = vpack.c.b16 %v1506, %v1502
    %v2027 = vpack.c.b16 %v1507, %v1503
    %v2028 = vpack.c.b16 %v1512, %v1508
    %v2029 = vpack.c.b16 %v1513, %v1509
    %v2030 = vpack.c.b16 %v1514, %v1510
    %v2031 = vpack.c.b16 %v1515, %v1511
    %v2032 = vpack.c.b16 %v1520, %v1516
    %v2033 = vpack.c.b16 %v1521, %v1517
    %v2034 = vpack.c.b16 %v1522, %v1518
    %v2035 = vpack.c.b16 %v1523, %v1519
    %v2036 = vpack.c.b16 %v1528, %v1524
    %v2037 = vpack.c.b16 %v1529, %v1525
    %v2038 = vpack.c.b16 %v1530, %v1526
    %v2039 = vpack.c.b16 %v1531, %v1527
    %v2040 = vpack.c.b16 %v1536, %v1532
    %v2041 = vpack.c.b16 %v1537, %v1533
    %v2042 = vpack.c.b16 %v1538, %v1534
    %v2043 = vpack.c.b16 %v1539, %v1535
    %v2044 = vpack.c.b16 %v1544, %v1540
    %v2045 = vpack.c.b16 %v1545, %v1541
    %v2046 = vpack.c.b16 %v1546, %v1542
    %v2047 = vpack.c.b16 %v1547, %v1543
    %v2048 = vpack.c.b16 %v1552, %v1548
    %v2049 = vpack.c.b16 %v1553, %v1549
    %v2050 = vpack.c.b16 %v1554, %v1550
    %v2051 = vpack.c.b16 %v1555, %v1551
    %v2052 = vpack.c.b16 %v1560, %v1556
    %v2053 = vpack.c.b16 %v1561, %v1557
    %v2054 = vpack.c.b16 %v1562, %v1558
    %v2055 = vpack.c.b16 %v1563, %v1559
    %v2056 = vpack.c.b16 %v1568, %v1564
    %v2057 = vpack.c.b16 %v1569, %v1565
    %v2058 = vpack.c.b16 %v1570, %v1566
    %v2059 = vpack.c.b16 %v1571, %v1567
    %v2060 = vpack.c.b16 %v1576, %v1572
    %v2061 = vpack.c.b16 %v1577, %v1573
    %v2062 = vpack.c.b16 %v1578, %v1574
    %v2063 = vpack.c.b16 %v1579, %v1575
    %v2064 = vpack.c.b16 %v1584, %v1580
    %v2065 = vpack.c.b16 %v1585, %v1581
    %v2066 = vpack.c.b16 %v1586, %v1582
    %v2067 = vpack.c.b16 %v1587, %v1583
    %v2068 = vpack.c.b16 %v1592, %v1588
    %v2069 = vpack.c.b16 %v1593, %v1589
    %v2070 = vpack.c.b16 %v1594, %v1590
    %v2071 = vpack.c.b16 %v1595, %v1591
    %v2072 = vpack.c.b16 %v1600, %v1596
    %v2073 = vpack.c.b16 %v1601, %v1597
    %v2074 = vpack.c.b16 %v1602, %v1598
    %v2075 = vpack.c.b16 %v1603, %v1599
    %v2076 = vpack.c.b16 %v1608, %v1604
    %v2077 = vpack.c.b16 %v1609, %v1605
    %v2078 = vpack.c.b16 %v1610, %v1606
    %v2079 = vpack.c.b16 %v1611, %v1607
    %v2080 = vpack.c.b16 %v1616, %v1612
    %v2081 = vpack.c.b16 %v1617, %v1613
    %v2082 = vpack.c.b16 %v1618, %v1614
    %v2083 = vpack.c.b16 %v1619, %v1615
    %v2084 = vpack.c.b16 %v1624, %v1620
    %v2085 = vpack.c.b16 %v1625, %v1621
    %v2086 = vpack.c.b16 %v1626, %v1622
    %v2087 = vpack.c.b16 %v1627, %v1623
    %v2088 = vpack.c.b16 %v1632, %v1628
    %v2089 = vpack.c.b16 %v1633, %v1629
    %v2090 = vpack.c.b16 %v1634, %v1630
    %v2091 = vpack.c.b16 %v1635, %v1631
    %v2092 = vpack.c.b16 %v1640, %v1636
    %v2093 = vpack.c.b16 %v1641, %v1637
    %v2094 = vpack.c.b16 %v1642, %v1638
    %v2095 = vpack.c.b16 %v1643, %v1639
    %v2096 = vpack.c.b16 %v1648, %v1644
    %v2097 = vpack.c.b16 %v1649, %v1645
    %v2098 = vpack.c.b16 %v1650, %v1646
    %v2099 = vpack.c.b16 %v1651, %v1647
    %v2100 = vpack.c.b16 %v1656, %v1652
    %v2101 = vpack.c.b16 %v1657, %v1653
    %v2102 = vpack.c.b16 %v1658, %v1654
    %v2103 = vpack.c.b16 %v1659, %v1655
    %v2104 = vpack.c.b16 %v1664, %v1660
    %v2105 = vpack.c.b16 %v1665, %v1661
    %v2106 = vpack.c.b16 %v1666, %v1662
    %v2107 = vpack.c.b16 %v1667, %v1663
    %v2108 = vpack.c.b16 %v1672, %v1668
    %v2109 = vpack.c.b16 %v1673, %v1669
    %v2110 = vpack.c.b16 %v1674, %v1670
    %v2111 = vpack.c.b16 %v1675, %v1671
    %v2112 = vpack.c.b16 %v1680, %v1676
    %v2113 = vpack.c.b16 %v1681, %v1677
    %v2114 = vpack.c.b16 %v1682, %v1678
    %v2115 = vpack.c.b16 %v1683, %v1679
    %v2116 = vpack.c.b16 %v1688, %v1684
    %v2117 = vpack.c.b16 %v1689, %v1685
    %v2118 = vpack.c.b16 %v1690, %v1686
    %v2119 = vpack.c.b16 %v1691, %v1687
    %v2120 = vpack.c.b16 %v1696, %v1692
    %v2121 = vpack.c.b16 %v1697, %v1693
    %v2122 = vpack.c.b16 %v1698, %v1694
    %v2123 = vpack.c.b16 %v1699, %v1695
    %v2124 = vpack.c.b16 %v1704, %v1700
    %v2125 = vpack.c.b16 %v1705, %v1701
    %v2126 = vpack.c.b16 %v1706, %v1702
    %v2127 = vpack.c.b16 %v1707, %v1703
    %v2128 = vpack.c.b16 %v1712, %v1708
    %v2129 = vpack.c.b16 %v1713, %v1709
    %v2130 = vpack.c.b16 %v1714, %v1710
    %v2131 = vpack.c.b16 %v1715, %v1711
    %v2132 = vpack.c.b16 %v1720, %v1716
    %v2133 = vpack.c.b16 %v1721, %v1717
    %v2134 = vpack.c.b16 %v1722, %v1718
    %v2135 = vpack.c.b16 %v1723, %v1719
    %v2136 = vpack.c.b16 %v1728, %v1724
    %v2137 = vpack.c.b16 %v1729, %v1725
    %v2138 = vpack.c.b16 %v1730, %v1726
    %v2139 = vpack.c.b16 %v1731, %v1727
    %v2140 = vpack.c.b16 %v1736, %v1732
    %v2141 = vpack.c.b16 %v1737, %v1733
    %v2142 = vpack.c.b16 %v1738, %v1734
    %v2143 = vpack.c.b16 %v1739, %v1735
    %v2144 = vpack.c.b16 %v1744, %v1740
    %v2145 = vpack.c.b16 %v1745, %v1741
    %v2146 = vpack.c.b16 %v1746, %v1742
    %v2147 = vpack.c.b16 %v1747, %v1743
    %vm2548 = vcmask 523264
    %v2550 = vsel %vm2548, %v526, 0
    %2552 = vmatprep.subr.bf16.mxu0 %v1749
    %2553 = vmatpush1.bf16.msra.mxu0 %v1748
    %2554 = vmatprep.subr.bf16.mxu0 %v1753
    %2555 = vmatpush1.bf16.msra.mxu0 %v1752
    %2556 = vmatprep.subr.bf16.mxu0 %v1757
    %2557 = vmatpush1.bf16.msra.mxu0 %v1756
    %2558 = vmatprep.subr.bf16.mxu0 %v1761
    %2559 = vmatpush1.bf16.msra.mxu0 %v1760
    %2560 = vmatprep.subr.bf16.mxu0 %v1765
    %2561 = vmatpush1.bf16.msra.mxu0 %v1764
    %2562 = vmatprep.subr.bf16.mxu0 %v1769
    %2563 = vmatpush1.bf16.msra.mxu0 %v1768
    %2564 = vmatprep.subr.bf16.mxu0 %v1773
    %2565 = vmatpush1.bf16.msra.mxu0 %v1772
    %2566 = vmatprep.subr.bf16.mxu0 %v1777
    %2567 = vmatpush1.bf16.msra.mxu0 %v1776
    %2568 = vmatprep.subr.bf16.mxu0 %v1781
    %2569 = vmatpush1.bf16.msra.mxu0 %v1780
    %2570 = vmatprep.subr.bf16.mxu0 %v1785
    %2571 = vmatpush1.bf16.msra.mxu0 %v1784
    %2572 = vmatprep.subr.bf16.mxu0 %v1789
    %2573 = vmatpush1.bf16.msra.mxu0 %v1788
    %2574 = vmatprep.subr.bf16.mxu0 %v1793
    %2575 = vmatpush1.bf16.msra.mxu0 %v1792
    %2576 = vmatprep.subr.bf16.mxu0 %v1797
    %2577 = vmatpush1.bf16.msra.mxu0 %v1796
    %2578 = vmatprep.subr.bf16.mxu0 %v1801
    %2579 = vmatpush1.bf16.msra.mxu0 %v1800
    %2580 = vmatprep.subr.bf16.mxu0 %v1805
    %2581 = vmatpush1.bf16.msra.mxu0 %v1804
    %2582 = vmatprep.subr.bf16.mxu0 %v1809
    %2583 = vmatpush1.bf16.msra.mxu0 %v1808
    %2584 = vmatprep.mubr.bf16.mxu0 %v485
    %2585 = vmatmul.mubr.bf16.gmra.mrb[0].mxu0 %v471
    %v2586 = vpop.f32.mrb[0].mxu0
    %v2587 = vadd.f32 %v429, %v2586
    %v2588 = vpop.f32.mrb[0].mxu0
    %v2589 = vadd.f32 %v433, %v2588
    %v2590 = vpop.f32.mrb[0].mxu0
    %v2591 = vpop.f32.mrb[0].mxu0
    %2592 = vdwg.mxu0
    %2593 = vmatprep.subr.bf16.mxu0 %v1813
    %2594 = vmatpush1.bf16.msra.mxu0 %v1812
    %2595 = vmatprep.subr.bf16.mxu0 %v1817
    %2596 = vmatpush1.bf16.msra.mxu0 %v1816
    %2597 = vmatprep.subr.bf16.mxu0 %v1821
    %2598 = vmatpush1.bf16.msra.mxu0 %v1820
    %2599 = vmatprep.subr.bf16.mxu0 %v1825
    %2600 = vmatpush1.bf16.msra.mxu0 %v1824
    %2601 = vmatprep.subr.bf16.mxu0 %v1829
    %2602 = vmatpush1.bf16.msra.mxu0 %v1828
    %2603 = vmatprep.subr.bf16.mxu0 %v1833
    %2604 = vmatpush1.bf16.msra.mxu0 %v1832
    %2605 = vmatprep.subr.bf16.mxu0 %v1837
    %2606 = vmatpush1.bf16.msra.mxu0 %v1836
    %2607 = vmatprep.subr.bf16.mxu0 %v1841
    %2608 = vmatpush1.bf16.msra.mxu0 %v1840
    %2609 = vmatprep.subr.bf16.mxu0 %v1845
    %2610 = vmatpush1.bf16.msra.mxu0 %v1844
    %2611 = vmatprep.subr.bf16.mxu0 %v1849
    %2612 = vmatpush1.bf16.msra.mxu0 %v1848
    %2613 = vmatprep.subr.bf16.mxu0 %v1853
    %2614 = vmatpush1.bf16.msra.mxu0 %v1852
    %2615 = vmatprep.subr.bf16.mxu0 %v1857
    %2616 = vmatpush1.bf16.msra.mxu0 %v1856
    %2617 = vmatprep.subr.bf16.mxu0 %v1861
    %2618 = vmatpush1.bf16.msra.mxu0 %v1860
    %2619 = vmatprep.subr.bf16.mxu0 %v1865
    %2620 = vmatpush1.bf16.msra.mxu0 %v1864
    %2621 = vmatprep.subr.bf16.mxu0 %v1869
    %2622 = vmatpush1.bf16.msra.mxu0 %v1868
    %2623 = vmatprep.subr.bf16.mxu0 %v1873
    %2624 = vmatpush1.bf16.msra.mxu0 %v1872
    %2625 = vmatprep.mubr.bf16.mxu0 %v495
    %2626 = vmatmul.mubr.bf16.gmra.mrb[0].mxu0 %v493
    %v2627 = vpop.f32.mrb[0].mxu0
    %v2628 = vadd.f32 %v2587, %v2627
    %v2629 = vpop.f32.mrb[0].mxu0
    %v2630 = vadd.f32 %v2589, %v2629
    %v2631 = vpop.f32.mrb[0].mxu0
    %v2632 = vpop.f32.mrb[0].mxu0
    %2633 = vdwg.mxu0
    %2634 = vmatprep.subr.bf16.mxu0 %v1877
    %2635 = vmatpush1.bf16.msra.mxu0 %v1876
    %2636 = vmatprep.subr.bf16.mxu0 %v1881
    %2637 = vmatpush1.bf16.msra.mxu0 %v1880
    %2638 = vmatprep.subr.bf16.mxu0 %v1885
    %2639 = vmatpush1.bf16.msra.mxu0 %v1884
    %2640 = vmatprep.subr.bf16.mxu0 %v1889
    %2641 = vmatpush1.bf16.msra.mxu0 %v1888
    %2642 = vmatprep.subr.bf16.mxu0 %v1893
    %2643 = vmatpush1.bf16.msra.mxu0 %v1892
    %2644 = vmatprep.subr.bf16.mxu0 %v1897
    %2645 = vmatpush1.bf16.msra.mxu0 %v1896
    %2646 = vmatprep.subr.bf16.mxu0 %v1901
    %2647 = vmatpush1.bf16.msra.mxu0 %v1900
    %2648 = vmatprep.subr.bf16.mxu0 %v1905
    %2649 = vmatpush1.bf16.msra.mxu0 %v1904
    %2650 = vmatprep.subr.bf16.mxu0 %v1909
    %2651 = vmatpush1.bf16.msra.mxu0 %v1908
    %2652 = vmatprep.subr.bf16.mxu0 %v1913
    %2653 = vmatpush1.bf16.msra.mxu0 %v1912
    %2654 = vmatprep.subr.bf16.mxu0 %v1917
    %2655 = vmatpush1.bf16.msra.mxu0 %v1916
    %2656 = vmatprep.subr.bf16.mxu0 %v1921
    %2657 = vmatpush1.bf16.msra.mxu0 %v1920
    %2658 = vmatprep.subr.bf16.mxu0 %v1925
    %2659 = vmatpush1.bf16.msra.mxu0 %v1924
    %2660 = vmatprep.subr.bf16.mxu0 %v1929
    %2661 = vmatpush1.bf16.msra.mxu0 %v1928
    %2662 = vmatprep.subr.bf16.mxu0 %v1933
    %2663 = vmatpush1.bf16.msra.mxu0 %v1932
    %2664 = vmatprep.subr.bf16.mxu0 %v1937
    %2665 = vmatpush1.bf16.msra.mxu0 %v1936
    %2666 = vmatprep.mubr.bf16.mxu0 %v492
    %2667 = vmatmul.mubr.bf16.gmra.mrb[0].mxu0 %v478
    %v2668 = vpop.f32.mrb[0].mxu0
    %v2669 = vadd.f32 %v2628, %v2668
    %v2670 = vpop.f32.mrb[0].mxu0
    %v2671 = vadd.f32 %v2630, %v2670
    %v2672 = vpop.f32.mrb[0].mxu0
    %v2673 = vpop.f32.mrb[0].mxu0
    %2674 = vdwg.mxu0
    %2675 = vmatprep.subr.bf16.mxu0 %v1941
    %2676 = vmatpush1.bf16.msra.mxu0 %v1940
    %2677 = vmatprep.subr.bf16.mxu0 %v1945
    %2678 = vmatpush1.bf16.msra.mxu0 %v1944
    %2679 = vmatprep.subr.bf16.mxu0 %v1949
    %2680 = vmatpush1.bf16.msra.mxu0 %v1948
    %2681 = vmatprep.subr.bf16.mxu0 %v1953
    %2682 = vmatpush1.bf16.msra.mxu0 %v1952
    %2683 = vmatprep.subr.bf16.mxu0 %v1957
    %2684 = vmatpush1.bf16.msra.mxu0 %v1956
    %2685 = vmatprep.subr.bf16.mxu0 %v1961
    %2686 = vmatpush1.bf16.msra.mxu0 %v1960
    %2687 = vmatprep.subr.bf16.mxu0 %v1965
    %2688 = vmatpush1.bf16.msra.mxu0 %v1964
    %2689 = vmatprep.subr.bf16.mxu0 %v1969
    %2690 = vmatpush1.bf16.msra.mxu0 %v1968
    %2691 = vmatprep.subr.bf16.mxu0 %v1973
    %2692 = vmatpush1.bf16.msra.mxu0 %v1972
    %2693 = vmatprep.subr.bf16.mxu0 %v1977
    %2694 = vmatpush1.bf16.msra.mxu0 %v1976
    %2695 = vmatprep.subr.bf16.mxu0 %v1981
    %2696 = vmatpush1.bf16.msra.mxu0 %v1980
    %2697 = vmatprep.subr.bf16.mxu0 %v1985
    %2698 = vmatpush1.bf16.msra.mxu0 %v1984
    %2699 = vmatprep.subr.bf16.mxu0 %v1989
    %2700 = vmatpush1.bf16.msra.mxu0 %v1988
    %2701 = vmatprep.subr.bf16.mxu0 %v1993
    %2702 = vmatpush1.bf16.msra.mxu0 %v1992
    %2703 = vmatprep.subr.bf16.mxu0 %v1997
    %2704 = vmatpush1.bf16.msra.mxu0 %v1996
    %2705 = vmatprep.subr.bf16.mxu0 %v2001
    %2706 = vmatpush1.bf16.msra.mxu0 %v2000
    %2707 = vmatprep.mubr.bf16.mxu0 %v496
    %2708 = vmatmul.mubr.bf16.gmra.mrb[0].mxu0 %v494
    %v2709 = vpop.f32.mrb[0].mxu0
    %v2710 = vadd.f32 %v2669, %v2709
    %v2711 = vpop.f32.mrb[0].mxu0
    %v2712 = vadd.f32 %v2671, %v2711
    %v2713 = vpop.f32.mrb[0].mxu0
    %v2714 = vpop.f32.mrb[0].mxu0
    %2715 = vdwg.mxu0
    %2716 = vmatprep.subr.bf16.mxu0 %v2005
    %2717 = vmatpush1.bf16.msra.mxu0 %v2004
    %2718 = vmatprep.subr.bf16.mxu0 %v2009
    %2719 = vmatpush1.bf16.msra.mxu0 %v2008
    %2720 = vmatprep.subr.bf16.mxu0 %v2013
    %2721 = vmatpush1.bf16.msra.mxu0 %v2012
    %2722 = vmatprep.subr.bf16.mxu0 %v2017
    %2723 = vmatpush1.bf16.msra.mxu0 %v2016
    %2724 = vmatprep.subr.bf16.mxu0 %v2021
    %2725 = vmatpush1.bf16.msra.mxu0 %v2020
    %2726 = vmatprep.subr.bf16.mxu0 %v2025
    %2727 = vmatpush1.bf16.msra.mxu0 %v2024
    %2728 = vmatprep.subr.bf16.mxu0 %v2029
    %2729 = vmatpush1.bf16.msra.mxu0 %v2028
    %2730 = vmatprep.subr.bf16.mxu0 %v2033
    %2731 = vmatpush1.bf16.msra.mxu0 %v2032
    %2732 = vmatprep.subr.bf16.mxu0 %v2037
    %2733 = vmatpush1.bf16.msra.mxu0 %v2036
    %2734 = vmatprep.subr.bf16.mxu0 %v2041
    %2735 = vmatpush1.bf16.msra.mxu0 %v2040
    %2736 = vmatprep.subr.bf16.mxu0 %v2045
    %2737 = vmatpush1.bf16.msra.mxu0 %v2044
    %2738 = vmatprep.subr.bf16.mxu0 %v2049
    %2739 = vmatpush1.bf16.msra.mxu0 %v2048
    %2740 = vmatprep.subr.bf16.mxu0 %v2053
    %2741 = vmatpush1.bf16.msra.mxu0 %v2052
    %2742 = vmatprep.subr.bf16.mxu0 %v2057
    %2743 = vmatpush1.bf16.msra.mxu0 %v2056
    %2744 = vmatprep.subr.bf16.mxu0 %v2061
    %2745 = vmatpush1.bf16.msra.mxu0 %v2060
    %2746 = vmatprep.subr.bf16.mxu0 %v2065
    %2747 = vmatpush1.bf16.msra.mxu0 %v2064
    %2748 = vmatprep.mubr.bf16.mxu0 %v533
    %2749 = vmatmul.mubr.bf16.gmra.mrb[0].mxu0 %v519
    %v2750 = vpop.f32.mrb[0].mxu0
    %v2751 = vadd.f32 %v2710, %v2750
    %v2752 = vpop.f32.mrb[0].mxu0
    %v2753 = vadd.f32 %v2712, %v2752
    %v2754 = vpop.f32.mrb[0].mxu0
    %v2755 = vpop.f32.mrb[0].mxu0
    %2756 = vdwg.mxu0
    %2757 = vmatprep.subr.bf16.mxu0 %v2069
    %2758 = vmatpush1.bf16.msra.mxu0 %v2068
    %2759 = vmatprep.subr.bf16.mxu0 %v2073
    %2760 = vmatpush1.bf16.msra.mxu0 %v2072
    %2761 = vmatprep.subr.bf16.mxu0 %v2077
    %2762 = vmatpush1.bf16.msra.mxu0 %v2076
    %2763 = vmatprep.subr.bf16.mxu0 %v2081
    %2764 = vmatpush1.bf16.msra.mxu0 %v2080
    %2765 = vmatprep.subr.bf16.mxu0 %v2085
    %2766 = vmatpush1.bf16.msra.mxu0 %v2084
    %2767 = vmatprep.subr.bf16.mxu0 %v2089
    %2768 = vmatpush1.bf16.msra.mxu0 %v2088
    %2769 = vmatprep.subr.bf16.mxu0 %v2093
    %2770 = vmatpush1.bf16.msra.mxu0 %v2092
    %2771 = vmatprep.subr.bf16.mxu0 %v2097
    %2772 = vmatpush1.bf16.msra.mxu0 %v2096
    %2773 = vmatprep.subr.bf16.mxu0 %v2101
    %2774 = vmatpush1.bf16.msra.mxu0 %v2100
    %2775 = vmatprep.subr.bf16.mxu0 %v2105
    %2776 = vmatpush1.bf16.msra.mxu0 %v2104
    %2777 = vmatprep.subr.bf16.mxu0 %v2109
    %2778 = vmatpush1.bf16.msra.mxu0 %v2108
    %2779 = vmatprep.subr.bf16.mxu0 %v2113
    %2780 = vmatpush1.bf16.msra.mxu0 %v2112
    %2781 = vmatprep.subr.bf16.mxu0 %v2117
    %2782 = vmatpush1.bf16.msra.mxu0 %v2116
    %2783 = vmatprep.subr.bf16.mxu0 %v2121
    %2784 = vmatpush1.bf16.msra.mxu0 %v2120
    %2785 = vmatprep.subr.bf16.mxu0 %v2125
    %2786 = vmatpush1.bf16.msra.mxu0 %v2124
    %2787 = vmatprep.subr.bf16.mxu0 %v2129
    %2788 = vmatpush1.bf16.msra.mxu0 %v2128
    %2789 = vmatprep.mubr.bf16.mxu0 %v535
    %2790 = vmatmul.mubr.bf16.gmra.mrb[0].mxu0 %v534
    %v2791 = vpop.f32.mrb[0].mxu0
    %v2792 = vadd.f32 %v2751, %v2791
    %v2793 = vpop.f32.mrb[0].mxu0
    %v2794 = vadd.f32 %v2753, %v2793
    %v2795 = vpop.f32.mrb[0].mxu0
    %v2796 = vpop.f32.mrb[0].mxu0
    %2797 = vdwg.mxu0
    %2798 = vmatprep.subr.bf16.mxu0 %v2133
    %2799 = vmatpush1.bf16.msra.mxu0 %v2132
    %2800 = vmatprep.subr.bf16.mxu0 %v2137
    %2801 = vmatpush1.bf16.msra.mxu0 %v2136
    %2802 = vmatprep.subr.bf16.mxu0 %v2141
    %2803 = vmatpush1.bf16.msra.mxu0 %v2140
    %2804 = vmatprep.subr.bf16.mxu0 %v2145
    %2805 = vmatpush1.bf16.msra.mxu0 %v2144
    %2806 = vmatprep.subr.bf16.mxu0 0
    %2807 = vmatpush1.bf16.msra.mxu0 0
    %2808 = vmatprep.subr.bf16.mxu0 0
    %2809 = vmatpush1.bf16.msra.mxu0 0
    %2810 = vmatprep.subr.bf16.mxu0 0
    %2811 = vmatpush1.bf16.msra.mxu0 0
    %2812 = vmatprep.subr.bf16.mxu0 0
    %2813 = vmatpush1.bf16.msra.mxu0 0
    %2814 = vmatprep.subr.bf16.mxu0 0
    %2815 = vmatpush1.bf16.msra.mxu0 0
    %2816 = vmatprep.subr.bf16.mxu0 0
    %2817 = vmatpush1.bf16.msra.mxu0 0
    %2818 = vmatprep.subr.bf16.mxu0 0
    %2819 = vmatpush1.bf16.msra.mxu0 0
    %2820 = vmatprep.subr.bf16.mxu0 0
    %2821 = vmatpush1.bf16.msra.mxu0 0
    %2822 = vmatprep.subr.bf16.mxu0 0
    %2823 = vmatpush1.bf16.msra.mxu0 0
    %2824 = vmatprep.subr.bf16.mxu0 0
    %2825 = vmatpush1.bf16.msra.mxu0 0
    %2826 = vmatprep.subr.bf16.mxu0 0
    %2827 = vmatpush1.bf16.msra.mxu0 0
    %2828 = vmatprep.subr.bf16.mxu0 0
    %2829 = vmatpush1.bf16.msra.mxu0 0
    %2830 = vmatprep.mubr.bf16.mxu0 0
    %2831 = vmatmul.mubr.bf16.gmra.mrb[0].mxu0 %v2550
    %v2832 = vpop.f32.mrb[0].mxu0
    %v2833 = vadd.f32 %v2792, %v2832
    %v2834 = vpop.f32.mrb[0].mxu0
    %v2835 = vadd.f32 %v2794, %v2834
    %v2836 = vpop.f32.mrb[0].mxu0
    %v2837 = vpop.f32.mrb[0].mxu0
    %2838 = vdwg.mxu0
    %2839 = vmatprep.subr.bf16.mxu0 %v1751
    %2840 = vmatpush1.bf16.msra.mxu0 %v1750
    %2841 = vmatprep.subr.bf16.mxu0 %v1755
    %2842 = vmatpush1.bf16.msra.mxu0 %v1754
    %2843 = vmatprep.subr.bf16.mxu0 %v1759
    %2844 = vmatpush1.bf16.msra.mxu0 %v1758
    %2845 = vmatprep.subr.bf16.mxu0 %v1763
    %2846 = vmatpush1.bf16.msra.mxu0 %v1762
    %2847 = vmatprep.subr.bf16.mxu0 %v1767
    %2848 = vmatpush1.bf16.msra.mxu0 %v1766
    %2849 = vmatprep.subr.bf16.mxu0 %v1771
    %2850 = vmatpush1.bf16.msra.mxu0 %v1770
    %2851 = vmatprep.subr.bf16.mxu0 %v1775
    %2852 = vmatpush1.bf16.msra.mxu0 %v1774
    %2853 = vmatprep.subr.bf16.mxu0 %v1779
    %2854 = vmatpush1.bf16.msra.mxu0 %v1778
    %2855 = vmatprep.subr.bf16.mxu0 %v1783
    %2856 = vmatpush1.bf16.msra.mxu0 %v1782
    %2857 = vmatprep.subr.bf16.mxu0 %v1787
    %2858 = vmatpush1.bf16.msra.mxu0 %v1786
    %2859 = vmatprep.subr.bf16.mxu0 %v1791
    %2860 = vmatpush1.bf16.msra.mxu0 %v1790
    %2861 = vmatprep.subr.bf16.mxu0 %v1795
    %2862 = vmatpush1.bf16.msra.mxu0 %v1794
    %2863 = vmatprep.subr.bf16.mxu0 %v1799
    %2864 = vmatpush1.bf16.msra.mxu0 %v1798
    %2865 = vmatprep.subr.bf16.mxu0 %v1803
    %2866 = vmatpush1.bf16.msra.mxu0 %v1802
    %2867 = vmatprep.subr.bf16.mxu0 %v1807
    %2868 = vmatpush1.bf16.msra.mxu0 %v1806
    %2869 = vmatprep.subr.bf16.mxu0 %v1811
    %2870 = vmatpush1.bf16.msra.mxu0 %v1810
    %2871 = vmatprep.mubr.bf16.mxu0 %v485
    %2872 = vmatmul.mubr.bf16.gmra.mrb[0].mxu0 %v471
    %v2873 = vpop.f32.mrb[0].mxu0
    %v2874 = vadd.f32 %v437, %v2873
    %v2875 = vpop.f32.mrb[0].mxu0
    %v2876 = vadd.f32 %v441, %v2875
    %v2877 = vpop.f32.mrb[0].mxu0
    %v2878 = vpop.f32.mrb[0].mxu0
    %2879 = vdwg.mxu0
    %2880 = vmatprep.subr.bf16.mxu0 %v1815
    %2881 = vmatpush1.bf16.msra.mxu0 %v1814
    %2882 = vmatprep.subr.bf16.mxu0 %v1819
    %2883 = vmatpush1.bf16.msra.mxu0 %v1818
    %2884 = vmatprep.subr.bf16.mxu0 %v1823
    %2885 = vmatpush1.bf16.msra.mxu0 %v1822
    %2886 = vmatprep.subr.bf16.mxu0 %v1827
    %2887 = vmatpush1.bf16.msra.mxu0 %v1826
    %2888 = vmatprep.subr.bf16.mxu0 %v1831
    %2889 = vmatpush1.bf16.msra.mxu0 %v1830
    %2890 = vmatprep.subr.bf16.mxu0 %v1835
    %2891 = vmatpush1.bf16.msra.mxu0 %v1834
    %2892 = vmatprep.subr.bf16.mxu0 %v1839
    %2893 = vmatpush1.bf16.msra.mxu0 %v1838
    %2894 = vmatprep.subr.bf16.mxu0 %v1843
    %2895 = vmatpush1.bf16.msra.mxu0 %v1842
    %2896 = vmatprep.subr.bf16.mxu0 %v1847
    %2897 = vmatpush1.bf16.msra.mxu0 %v1846
    %2898 = vmatprep.subr.bf16.mxu0 %v1851
    %2899 = vmatpush1.bf16.msra.mxu0 %v1850
    %2900 = vmatprep.subr.bf16.mxu0 %v1855
    %2901 = vmatpush1.bf16.msra.mxu0 %v1854
    %2902 = vmatprep.subr.bf16.mxu0 %v1859
    %2903 = vmatpush1.bf16.msra.mxu0 %v1858
    %2904 = vmatprep.subr.bf16.mxu0 %v1863
    %2905 = vmatpush1.bf16.msra.mxu0 %v1862
    %2906 = vmatprep.subr.bf16.mxu0 %v1867
    %2907 = vmatpush1.bf16.msra.mxu0 %v1866
    %2908 = vmatprep.subr.bf16.mxu0 %v1871
    %2909 = vmatpush1.bf16.msra.mxu0 %v1870
    %2910 = vmatprep.subr.bf16.mxu0 %v1875
    %2911 = vmatpush1.bf16.msra.mxu0 %v1874
    %2912 = vmatprep.mubr.bf16.mxu0 %v495
    %2913 = vmatmul.mubr.bf16.gmra.mrb[0].mxu0 %v493
    %v2914 = vpop.f32.mrb[0].mxu0
    %v2915 = vadd.f32 %v2874, %v2914
    %v2916 = vpop.f32.mrb[0].mxu0
    %v2917 = vadd.f32 %v2876, %v2916
    %v2918 = vpop.f32.mrb[0].mxu0
    %v2919 = vpop.f32.mrb[0].mxu0
    %2920 = vdwg.mxu0
    %2921 = vmatprep.subr.bf16.mxu0 %v1879
    %2922 = vmatpush1.bf16.msra.mxu0 %v1878
    %2923 = vmatprep.subr.bf16.mxu0 %v1883
    %2924 = vmatpush1.bf16.msra.mxu0 %v1882
    %2925 = vmatprep.subr.bf16.mxu0 %v1887
    %2926 = vmatpush1.bf16.msra.mxu0 %v1886
    %2927 = vmatprep.subr.bf16.mxu0 %v1891
    %2928 = vmatpush1.bf16.msra.mxu0 %v1890
    %2929 = vmatprep.subr.bf16.mxu0 %v1895
    %2930 = vmatpush1.bf16.msra.mxu0 %v1894
    %2931 = vmatprep.subr.bf16.mxu0 %v1899
    %2932 = vmatpush1.bf16.msra.mxu0 %v1898
    %2933 = vmatprep.subr.bf16.mxu0 %v1903
    %2934 = vmatpush1.bf16.msra.mxu0 %v1902
    %2935 = vmatprep.subr.bf16.mxu0 %v1907
    %2936 = vmatpush1.bf16.msra.mxu0 %v1906
    %2937 = vmatprep.subr.bf16.mxu0 %v1911
    %2938 = vmatpush1.bf16.msra.mxu0 %v1910
    %2939 = vmatprep.subr.bf16.mxu0 %v1915
    %2940 = vmatpush1.bf16.msra.mxu0 %v1914
    %2941 = vmatprep.subr.bf16.mxu0 %v1919
    %2942 = vmatpush1.bf16.msra.mxu0 %v1918
    %2943 = vmatprep.subr.bf16.mxu0 %v1923
    %2944 = vmatpush1.bf16.msra.mxu0 %v1922
    %2945 = vmatprep.subr.bf16.mxu0 %v1927
    %2946 = vmatpush1.bf16.msra.mxu0 %v1926
    %2947 = vmatprep.subr.bf16.mxu0 %v1931
    %2948 = vmatpush1.bf16.msra.mxu0 %v1930
    %2949 = vmatprep.subr.bf16.mxu0 %v1935
    %2950 = vmatpush1.bf16.msra.mxu0 %v1934
    %2951 = vmatprep.subr.bf16.mxu0 %v1939
    %2952 = vmatpush1.bf16.msra.mxu0 %v1938
    %2953 = vmatprep.mubr.bf16.mxu0 %v492
    %2954 = vmatmul.mubr.bf16.gmra.mrb[0].mxu0 %v478
    %v2955 = vpop.f32.mrb[0].mxu0
    %v2956 = vadd.f32 %v2915, %v2955
    %v2957 = vpop.f32.mrb[0].mxu0
    %v2958 = vadd.f32 %v2917, %v2957
    %v2959 = vpop.f32.mrb[0].mxu0
    %v2960 = vpop.f32.mrb[0].mxu0
    %2961 = vdwg.mxu0
    %2962 = vmatprep.subr.bf16.mxu0 %v1943
    %2963 = vmatpush1.bf16.msra.mxu0 %v1942
    %2964 = vmatprep.subr.bf16.mxu0 %v1947
    %2965 = vmatpush1.bf16.msra.mxu0 %v1946
    %2966 = vmatprep.subr.bf16.mxu0 %v1951
    %2967 = vmatpush1.bf16.msra.mxu0 %v1950
    %2968 = vmatprep.subr.bf16.mxu0 %v1955
    %2969 = vmatpush1.bf16.msra.mxu0 %v1954
    %2970 = vmatprep.subr.bf16.mxu0 %v1959
    %2971 = vmatpush1.bf16.msra.mxu0 %v1958
    %2972 = vmatprep.subr.bf16.mxu0 %v1963
    %2973 = vmatpush1.bf16.msra.mxu0 %v1962
    %2974 = vmatprep.subr.bf16.mxu0 %v1967
    %2975 = vmatpush1.bf16.msra.mxu0 %v1966
    %2976 = vmatprep.subr.bf16.mxu0 %v1971
    %2977 = vmatpush1.bf16.msra.mxu0 %v1970
    %2978 = vmatprep.subr.bf16.mxu0 %v1975
    %2979 = vmatpush1.bf16.msra.mxu0 %v1974
    %2980 = vmatprep.subr.bf16.mxu0 %v1979
    %2981 = vmatpush1.bf16.msra.mxu0 %v1978
    %2982 = vmatprep.subr.bf16.mxu0 %v1983
    %2983 = vmatpush1.bf16.msra.mxu0 %v1982
    %2984 = vmatprep.subr.bf16.mxu0 %v1987
    %2985 = vmatpush1.bf16.msra.mxu0 %v1986
    %2986 = vmatprep.subr.bf16.mxu0 %v1991
    %2987 = vmatpush1.bf16.msra.mxu0 %v1990
    %2988 = vmatprep.subr.bf16.mxu0 %v1995
    %2989 = vmatpush1.bf16.msra.mxu0 %v1994
    %2990 = vmatprep.subr.bf16.mxu0 %v1999
    %2991 = vmatpush1.bf16.msra.mxu0 %v1998
    %2992 = vmatprep.subr.bf16.mxu0 %v2003
    %2993 = vmatpush1.bf16.msra.mxu0 %v2002
    %2994 = vmatprep.mubr.bf16.mxu0 %v496
    %2995 = vmatmul.mubr.bf16.gmra.mrb[0].mxu0 %v494
    %v2996 = vpop.f32.mrb[0].mxu0
    %v2997 = vadd.f32 %v2956, %v2996
    %v2998 = vpop.f32.mrb[0].mxu0
    %v2999 = vadd.f32 %v2958, %v2998
    %v3000 = vpop.f32.mrb[0].mxu0
    %v3001 = vpop.f32.mrb[0].mxu0
    %3002 = vdwg.mxu0
    %3003 = vmatprep.subr.bf16.mxu0 %v2007
    %3004 = vmatpush1.bf16.msra.mxu0 %v2006
    %3005 = vmatprep.subr.bf16.mxu0 %v2011
    %3006 = vmatpush1.bf16.msra.mxu0 %v2010
    %3007 = vmatprep.subr.bf16.mxu0 %v2015
    %3008 = vmatpush1.bf16.msra.mxu0 %v2014
    %3009 = vmatprep.subr.bf16.mxu0 %v2019
    %3010 = vmatpush1.bf16.msra.mxu0 %v2018
    %3011 = vmatprep.subr.bf16.mxu0 %v2023
    %3012 = vmatpush1.bf16.msra.mxu0 %v2022
    %3013 = vmatprep.subr.bf16.mxu0 %v2027
    %3014 = vmatpush1.bf16.msra.mxu0 %v2026
    %3015 = vmatprep.subr.bf16.mxu0 %v2031
    %3016 = vmatpush1.bf16.msra.mxu0 %v2030
    %3017 = vmatprep.subr.bf16.mxu0 %v2035
    %3018 = vmatpush1.bf16.msra.mxu0 %v2034
    %3019 = vmatprep.subr.bf16.mxu0 %v2039
    %3020 = vmatpush1.bf16.msra.mxu0 %v2038
    %3021 = vmatprep.subr.bf16.mxu0 %v2043
    %3022 = vmatpush1.bf16.msra.mxu0 %v2042
    %3023 = vmatprep.subr.bf16.mxu0 %v2047
    %3024 = vmatpush1.bf16.msra.mxu0 %v2046
    %3025 = vmatprep.subr.bf16.mxu0 %v2051
    %3026 = vmatpush1.bf16.msra.mxu0 %v2050
    %3027 = vmatprep.subr.bf16.mxu0 %v2055
    %3028 = vmatpush1.bf16.msra.mxu0 %v2054
    %3029 = vmatprep.subr.bf16.mxu0 %v2059
    %3030 = vmatpush1.bf16.msra.mxu0 %v2058
    %3031 = vmatprep.subr.bf16.mxu0 %v2063
    %3032 = vmatpush1.bf16.msra.mxu0 %v2062
    %3033 = vmatprep.subr.bf16.mxu0 %v2067
    %3034 = vmatpush1.bf16.msra.mxu0 %v2066
    %3035 = vmatprep.mubr.bf16.mxu0 %v533
    %3036 = vmatmul.mubr.bf16.gmra.mrb[0].mxu0 %v519
    %v3037 = vpop.f32.mrb[0].mxu0
    %v3038 = vadd.f32 %v2997, %v3037
    %v3039 = vpop.f32.mrb[0].mxu0
    %v3040 = vadd.f32 %v2999, %v3039
    %v3041 = vpop.f32.mrb[0].mxu0
    %v3042 = vpop.f32.mrb[0].mxu0
    %3043 = vdwg.mxu0
    %3044 = vmatprep.subr.bf16.mxu0 %v2071
    %3045 = vmatpush1.bf16.msra.mxu0 %v2070
    %3046 = vmatprep.subr.bf16.mxu0 %v2075
    %3047 = vmatpush1.bf16.msra.mxu0 %v2074
    %3048 = vmatprep.subr.bf16.mxu0 %v2079
    %3049 = vmatpush1.bf16.msra.mxu0 %v2078
    %3050 = vmatprep.subr.bf16.mxu0 %v2083
    %3051 = vmatpush1.bf16.msra.mxu0 %v2082
    %3052 = vmatprep.subr.bf16.mxu0 %v2087
    %3053 = vmatpush1.bf16.msra.mxu0 %v2086
    %3054 = vmatprep.subr.bf16.mxu0 %v2091
    %3055 = vmatpush1.bf16.msra.mxu0 %v2090
    %3056 = vmatprep.subr.bf16.mxu0 %v2095
    %3057 = vmatpush1.bf16.msra.mxu0 %v2094
    %3058 = vmatprep.subr.bf16.mxu0 %v2099
    %3059 = vmatpush1.bf16.msra.mxu0 %v2098
    %3060 = vmatprep.subr.bf16.mxu0 %v2103
    %3061 = vmatpush1.bf16.msra.mxu0 %v2102
    %3062 = vmatprep.subr.bf16.mxu0 %v2107
    %3063 = vmatpush1.bf16.msra.mxu0 %v2106
    %3064 = vmatprep.subr.bf16.mxu0 %v2111
    %3065 = vmatpush1.bf16.msra.mxu0 %v2110
    %3066 = vmatprep.subr.bf16.mxu0 %v2115
    %3067 = vmatpush1.bf16.msra.mxu0 %v2114
    %3068 = vmatprep.subr.bf16.mxu0 %v2119
    %3069 = vmatpush1.bf16.msra.mxu0 %v2118
    %3070 = vmatprep.subr.bf16.mxu0 %v2123
    %3071 = vmatpush1.bf16.msra.mxu0 %v2122
    %3072 = vmatprep.subr.bf16.mxu0 %v2127
    %3073 = vmatpush1.bf16.msra.mxu0 %v2126
    %3074 = vmatprep.subr.bf16.mxu0 %v2131
    %3075 = vmatpush1.bf16.msra.mxu0 %v2130
    %3076 = vmatprep.mubr.bf16.mxu0 %v535
    %3077 = vmatmul.mubr.bf16.gmra.mrb[0].mxu0 %v534
    %v3078 = vpop.f32.mrb[0].mxu0
    %v3079 = vadd.f32 %v3038, %v3078
    %v3080 = vpop.f32.mrb[0].mxu0
    %v3081 = vadd.f32 %v3040, %v3080
    %v3082 = vpop.f32.mrb[0].mxu0
    %v3083 = vpop.f32.mrb[0].mxu0
    %3084 = vdwg.mxu0
    %3085 = vmatprep.subr.bf16.mxu0 %v2135
    %3086 = vmatpush1.bf16.msra.mxu0 %v2134
    %3087 = vmatprep.subr.bf16.mxu0 %v2139
    %3088 = vmatpush1.bf16.msra.mxu0 %v2138
    %3089 = vmatprep.subr.bf16.mxu0 %v2143
    %3090 = vmatpush1.bf16.msra.mxu0 %v2142
    %3091 = vmatprep.subr.bf16.mxu0 %v2147
    %3092 = vmatpush1.bf16.msra.mxu0 %v2146
    %3093 = vmatprep.subr.bf16.mxu0 0
    %3094 = vmatpush1.bf16.msra.mxu0 0
    %3095 = vmatprep.subr.bf16.mxu0 0
    %3096 = vmatpush1.bf16.msra.mxu0 0
    %3097 = vmatprep.subr.bf16.mxu0 0
    %3098 = vmatpush1.bf16.msra.mxu0 0
    %3099 = vmatprep.subr.bf16.mxu0 0
    %3100 = vmatpush1.bf16.msra.mxu0 0
    %3101 = vmatprep.subr.bf16.mxu0 0
    %3102 = vmatpush1.bf16.msra.mxu0 0
    %3103 = vmatprep.subr.bf16.mxu0 0
    %3104 = vmatpush1.bf16.msra.mxu0 0
    %3105 = vmatprep.subr.bf16.mxu0 0
    %3106 = vmatpush1.bf16.msra.mxu0 0
    %3107 = vmatprep.subr.bf16.mxu0 0
    %3108 = vmatpush1.bf16.msra.mxu0 0
    %3109 = vmatprep.subr.bf16.mxu0 0
    %3110 = vmatpush1.bf16.msra.mxu0 0
    %3111 = vmatprep.subr.bf16.mxu0 0
    %3112 = vmatpush1.bf16.msra.mxu0 0
    %3113 = vmatprep.subr.bf16.mxu0 0
    %3114 = vmatpush1.bf16.msra.mxu0 0
    %3115 = vmatprep.subr.bf16.mxu0 0
    %3116 = vmatpush1.bf16.msra.mxu0 0
    %3117 = vmatprep.mubr.bf16.mxu0 0
    %3118 = vmatmul.mubr.bf16.gmra.mrb[0].mxu0 %v2550
    %v3119 = vpop.f32.mrb[0].mxu0
    %v3120 = vadd.f32 %v3079, %v3119
    %v3121 = vpop.f32.mrb[0].mxu0
    %v3122 = vadd.f32 %v3081, %v3121
    %v3123 = vpop.f32.mrb[0].mxu0
    %v3124 = vpop.f32.mrb[0].mxu0
    %3125 = vdwg.mxu0
    %v3126 = vmax.f32 %v2833, 0.0
    %v3127 = vmax.f32 %v2835, 0.0
    %v3128 = vmax.f32 %v3120, 0.0
    %v3129 = vmax.f32 %v3122, 0.0
    %v3130 = vpack.c.bf16 %v3126, %v3126
    %v3131 = vpack.c.bf16 %v3127, %v3127
    %v3132 = vpack.c.bf16 %v3128, %v3128
    %v3133 = vpack.c.bf16 %v3129, %v3129
    %v3134 = vld [vmem:[%s3] sm:$0xf]
    %v3135 = vld [vmem:[%s3 + $0x4] sm:$0xf]
    %v3136 = vld [vmem:[%s3 + $0x8] sm:$0xf]
    %v3137 = vld [vmem:[%s3 + $0xc] sm:$0xf]
    %v3138 = vld [vmem:[%s3 + $0x10] sm:$0xf]
    %v3139 = vld [vmem:[%s3 + $0x14] sm:$0xf]
    %v3140 = vld [vmem:[%s3 + $0x18] sm:$0xf]
    %v3141 = vld [vmem:[%s3 + $0x1c] sm:$0xf]
    %v3142 = vld [vmem:[%s3 + $0x20] sm:$0xf]
    %v3143 = vld [vmem:[%s3 + $0x24] sm:$0xf]
    %v3144 = vld [vmem:[%s3 + $0x28] sm:$0xf]
    %v3145 = vld [vmem:[%s3 + $0x2c] sm:$0xf]
    %v3146 = vld [vmem:[%s3 + $0x30] sm:$0xf]
    %v3147 = vld [vmem:[%s3 + $0x34] sm:$0xf]
    %v3148 = vld [vmem:[%s3 + $0x38] sm:$0xf]
    %v3149 = vld [vmem:[%s3 + $0x3c] sm:$0xf]
    %v3150 = vld [vmem:[%s3 + $0x40] sm:$0xf]
    %v3151 = vld [vmem:[%s3 + $0x44] sm:$0xf]
    %v3152 = vld [vmem:[%s3 + $0x48] sm:$0xf]
    %v3153 = vld [vmem:[%s3 + $0x4c] sm:$0xf]
    %v3154 = vld [vmem:[%s3 + $0x50] sm:$0xf]
    %v3155 = vld [vmem:[%s3 + $0x54] sm:$0xf]
    %v3156 = vld [vmem:[%s3 + $0x58] sm:$0xf]
    %v3157 = vld [vmem:[%s3 + $0x5c] sm:$0xf]
    %v3158 = vld [vmem:[%s3 + $0x60] sm:$0xf]
    %v3159 = vld [vmem:[%s3 + $0x64] sm:$0xf]
    %v3160 = vld [vmem:[%s3 + $0x68] sm:$0xf]
    %v3161 = vld [vmem:[%s3 + $0x6c] sm:$0xf]
    %v3162 = vld [vmem:[%s3 + $0x70] sm:$0xf]
    %v3163 = vld [vmem:[%s3 + $0x74] sm:$0xf]
    %v3164 = vld [vmem:[%s3 + $0x78] sm:$0xf]
    %v3165 = vld [vmem:[%s3 + $0x7c] sm:$0xf]
    %v3166 = vld [vmem:[%s3 + $0x80] sm:$0xf]
    %v3167 = vld [vmem:[%s3 + $0x84] sm:$0xf]
    %v3168 = vld [vmem:[%s3 + $0x88] sm:$0xf]
    %v3169 = vld [vmem:[%s3 + $0x8c] sm:$0xf]
    %v3170 = vld [vmem:[%s3 + $0x90] sm:$0xf]
    %v3171 = vld [vmem:[%s3 + $0x94] sm:$0xf]
    %v3172 = vld [vmem:[%s3 + $0x98] sm:$0xf]
    %v3173 = vld [vmem:[%s3 + $0x9c] sm:$0xf]
    %v3174 = vld [vmem:[%s3 + $0xa0] sm:$0xf]
    %v3175 = vld [vmem:[%s3 + $0xa4] sm:$0xf]
    %v3176 = vld [vmem:[%s3 + $0xa8] sm:$0xf]
    %v3177 = vld [vmem:[%s3 + $0xac] sm:$0xf]
    %v3178 = vld [vmem:[%s3 + $0xb0] sm:$0xf]
    %v3179 = vld [vmem:[%s3 + $0xb4] sm:$0xf]
    %v3180 = vld [vmem:[%s3 + $0xb8] sm:$0xf]
    %v3181 = vld [vmem:[%s3 + $0xbc] sm:$0xf]
    %v3182 = vld [vmem:[%s3 + $0xc0] sm:$0xf]
    %v3183 = vld [vmem:[%s3 + $0xc4] sm:$0xf]
    %v3184 = vld [vmem:[%s3 + $0xc8] sm:$0xf]
    %v3185 = vld [vmem:[%s3 + $0xcc] sm:$0xf]
    %v3186 = vld [vmem:[%s3 + $0xd0] sm:$0xf]
    %v3187 = vld [vmem:[%s3 + $0xd4] sm:$0xf]
    %v3188 = vld [vmem:[%s3 + $0xd8] sm:$0xf]
    %v3189 = vld [vmem:[%s3 + $0xdc] sm:$0xf]
    %v3190 = vld [vmem:[%s3 + $0xe0] sm:$0xf]
    %v3191 = vld [vmem:[%s3 + $0xe4] sm:$0xf]
    %v3192 = vld [vmem:[%s3 + $0xe8] sm:$0xf]
    %v3193 = vld [vmem:[%s3 + $0xec] sm:$0xf]
    %v3194 = vld [vmem:[%s3 + $0xf0] sm:$0xf]
    %v3195 = vld [vmem:[%s3 + $0xf4] sm:$0xf]
    %v3196 = vld [vmem:[%s3 + $0xf8] sm:$0xf]
    %v3197 = vld [vmem:[%s3 + $0xfc] sm:$0xf]
    %v3198 = vld [vmem:[%s4] sm:$0x1]
    %v3200 = vlaneseq
    %v3201 = vshrl.u32 %v3200, 7
    %v3202 = vsub.s32 0, %v3201
    %v3203 = vrot.slane %v3198, %v3202
    %v3269 = vunpack.c.l.b16 %v3134
    %v3270 = vunpack.c.l.b16 %v3135
    %v3271 = vunpack.c.l.b16 %v3136
    %v3272 = vunpack.c.l.b16 %v3137
    %v3273 = vunpack.c.l.b16 %v3138
    %v3274 = vunpack.c.l.b16 %v3139
    %v3275 = vunpack.c.l.b16 %v3140
    %v3276 = vunpack.c.l.b16 %v3141
    %v3277 = vunpack.c.l.b16 %v3142
    %v3278 = vunpack.c.l.b16 %v3143
    %v3279 = vunpack.c.l.b16 %v3144
    %v3280 = vunpack.c.l.b16 %v3145
    %v3281 = vunpack.c.l.b16 %v3146
    %v3282 = vunpack.c.l.b16 %v3147
    %v3283 = vunpack.c.l.b16 %v3148
    %v3284 = vunpack.c.l.b16 %v3149
    %v3285 = vunpack.c.l.b16 %v3150
    %v3286 = vunpack.c.l.b16 %v3151
    %v3287 = vunpack.c.l.b16 %v3152
    %v3288 = vunpack.c.l.b16 %v3153
    %v3289 = vunpack.c.l.b16 %v3154
    %v3290 = vunpack.c.l.b16 %v3155
    %v3291 = vunpack.c.l.b16 %v3156
    %v3292 = vunpack.c.l.b16 %v3157
    %v3293 = vunpack.c.l.b16 %v3158
    %v3294 = vunpack.c.l.b16 %v3159
    %v3295 = vunpack.c.l.b16 %v3160
    %v3296 = vunpack.c.l.b16 %v3161
    %v3297 = vunpack.c.l.b16 %v3162
    %v3298 = vunpack.c.l.b16 %v3163
    %v3299 = vunpack.c.l.b16 %v3164
    %v3300 = vunpack.c.l.b16 %v3165
    %v3301 = vunpack.c.l.b16 %v3166
    %v3302 = vunpack.c.l.b16 %v3167
    %v3303 = vunpack.c.l.b16 %v3168
    %v3304 = vunpack.c.l.b16 %v3169
    %v3305 = vunpack.c.l.b16 %v3170
    %v3306 = vunpack.c.l.b16 %v3171
    %v3307 = vunpack.c.l.b16 %v3172
    %v3308 = vunpack.c.l.b16 %v3173
    %v3309 = vunpack.c.l.b16 %v3174
    %v3310 = vunpack.c.l.b16 %v3175
    %v3311 = vunpack.c.l.b16 %v3176
    %v3312 = vunpack.c.l.b16 %v3177
    %v3313 = vunpack.c.l.b16 %v3178
    %v3314 = vunpack.c.l.b16 %v3179
    %v3315 = vunpack.c.l.b16 %v3180
    %v3316 = vunpack.c.l.b16 %v3181
    %v3317 = vunpack.c.l.b16 %v3182
    %v3318 = vunpack.c.l.b16 %v3183
    %v3319 = vunpack.c.l.b16 %v3184
    %v3320 = vunpack.c.l.b16 %v3185
    %v3321 = vunpack.c.l.b16 %v3186
    %v3322 = vunpack.c.l.b16 %v3187
    %v3323 = vunpack.c.l.b16 %v3188
    %v3324 = vunpack.c.l.b16 %v3189
    %v3325 = vunpack.c.l.b16 %v3190
    %v3326 = vunpack.c.l.b16 %v3191
    %v3327 = vunpack.c.l.b16 %v3192
    %v3328 = vunpack.c.l.b16 %v3193
    %v3329 = vunpack.c.l.b16 %v3194
    %v3330 = vunpack.c.l.b16 %v3195
    %v3331 = vunpack.c.l.b16 %v3196
    %v3332 = vunpack.c.l.b16 %v3197
    %v3333 = vpack.c.b16 %v3270, %v3269
    %v3334 = vpack.c.b16 %v3272, %v3271
    %v3335 = vpack.c.b16 %v3274, %v3273
    %v3336 = vpack.c.b16 %v3276, %v3275
    %v3337 = vpack.c.b16 %v3278, %v3277
    %v3338 = vpack.c.b16 %v3280, %v3279
    %v3339 = vpack.c.b16 %v3282, %v3281
    %v3340 = vpack.c.b16 %v3284, %v3283
    %v3341 = vpack.c.b16 %v3286, %v3285
    %v3342 = vpack.c.b16 %v3288, %v3287
    %v3343 = vpack.c.b16 %v3290, %v3289
    %v3344 = vpack.c.b16 %v3292, %v3291
    %v3345 = vpack.c.b16 %v3294, %v3293
    %v3346 = vpack.c.b16 %v3296, %v3295
    %v3347 = vpack.c.b16 %v3298, %v3297
    %v3348 = vpack.c.b16 %v3300, %v3299
    %v3349 = vpack.c.b16 %v3302, %v3301
    %v3350 = vpack.c.b16 %v3304, %v3303
    %v3351 = vpack.c.b16 %v3306, %v3305
    %v3352 = vpack.c.b16 %v3308, %v3307
    %v3353 = vpack.c.b16 %v3310, %v3309
    %v3354 = vpack.c.b16 %v3312, %v3311
    %v3355 = vpack.c.b16 %v3314, %v3313
    %v3356 = vpack.c.b16 %v3316, %v3315
    %v3357 = vpack.c.b16 %v3318, %v3317
    %v3358 = vpack.c.b16 %v3320, %v3319
    %v3359 = vpack.c.b16 %v3322, %v3321
    %v3360 = vpack.c.b16 %v3324, %v3323
    %v3361 = vpack.c.b16 %v3326, %v3325
    %v3362 = vpack.c.b16 %v3328, %v3327
    %v3363 = vpack.c.b16 %v3330, %v3329
    %v3364 = vpack.c.b16 %v3332, %v3331
    %3397 = vmatprep.subr.bf16.mxu0 0
    %3398 = vmatpush1.bf16.msra.mxu0 %v3333
    %3399 = vmatprep.subr.bf16.mxu0 0
    %3400 = vmatpush1.bf16.msra.mxu0 %v3334
    %3401 = vmatprep.subr.bf16.mxu0 0
    %3402 = vmatpush1.bf16.msra.mxu0 %v3335
    %3403 = vmatprep.subr.bf16.mxu0 0
    %3404 = vmatpush1.bf16.msra.mxu0 %v3336
    %3405 = vmatprep.subr.bf16.mxu0 0
    %3406 = vmatpush1.bf16.msra.mxu0 %v3337
    %3407 = vmatprep.subr.bf16.mxu0 0
    %3408 = vmatpush1.bf16.msra.mxu0 %v3338
    %3409 = vmatprep.subr.bf16.mxu0 0
    %3410 = vmatpush1.bf16.msra.mxu0 %v3339
    %3411 = vmatprep.subr.bf16.mxu0 0
    %3412 = vmatpush1.bf16.msra.mxu0 %v3340
    %3413 = vmatprep.subr.bf16.mxu0 0
    %3414 = vmatpush1.bf16.msra.mxu0 %v3341
    %3415 = vmatprep.subr.bf16.mxu0 0
    %3416 = vmatpush1.bf16.msra.mxu0 %v3342
    %3417 = vmatprep.subr.bf16.mxu0 0
    %3418 = vmatpush1.bf16.msra.mxu0 %v3343
    %3419 = vmatprep.subr.bf16.mxu0 0
    %3420 = vmatpush1.bf16.msra.mxu0 %v3344
    %3421 = vmatprep.subr.bf16.mxu0 0
    %3422 = vmatpush1.bf16.msra.mxu0 %v3345
    %3423 = vmatprep.subr.bf16.mxu0 0
    %3424 = vmatpush1.bf16.msra.mxu0 %v3346
    %3425 = vmatprep.subr.bf16.mxu0 0
    %3426 = vmatpush1.bf16.msra.mxu0 %v3347
    %3427 = vmatprep.subr.bf16.mxu0 0
    %3428 = vmatpush1.bf16.msra.mxu0 %v3348
    %3429 = vmatprep.mubr.bf16.mxu0 %v3131
    %3430 = vmatmul.mubr.bf16.gmra.mrb[0].mxu0 %v3130
    %v3431 = vpop.f32.mrb[0].mxu0
    %v3432 = vadd.f32 %v3203, %v3431
    %v3433 = vpop.f32.mrb[0].mxu0
    %v3434 = vpop.f32.mrb[0].mxu0
    %v3435 = vpop.f32.mrb[0].mxu0
    %3436 = vdwg.mxu0
    %3437 = vmatprep.subr.bf16.mxu0 0
    %3438 = vmatpush1.bf16.msra.mxu0 %v3349
    %3439 = vmatprep.subr.bf16.mxu0 0
    %3440 = vmatpush1.bf16.msra.mxu0 %v3350
    %3441 = vmatprep.subr.bf16.mxu0 0
    %3442 = vmatpush1.bf16.msra.mxu0 %v3351
    %3443 = vmatprep.subr.bf16.mxu0 0
    %3444 = vmatpush1.bf16.msra.mxu0 %v3352
    %3445 = vmatprep.subr.bf16.mxu0 0
    %3446 = vmatpush1.bf16.msra.mxu0 %v3353
    %3447 = vmatprep.subr.bf16.mxu0 0
    %3448 = vmatpush1.bf16.msra.mxu0 %v3354
    %3449 = vmatprep.subr.bf16.mxu0 0
    %3450 = vmatpush1.bf16.msra.mxu0 %v3355
    %3451 = vmatprep.subr.bf16.mxu0 0
    %3452 = vmatpush1.bf16.msra.mxu0 %v3356
    %3453 = vmatprep.subr.bf16.mxu0 0
    %3454 = vmatpush1.bf16.msra.mxu0 %v3357
    %3455 = vmatprep.subr.bf16.mxu0 0
    %3456 = vmatpush1.bf16.msra.mxu0 %v3358
    %3457 = vmatprep.subr.bf16.mxu0 0
    %3458 = vmatpush1.bf16.msra.mxu0 %v3359
    %3459 = vmatprep.subr.bf16.mxu0 0
    %3460 = vmatpush1.bf16.msra.mxu0 %v3360
    %3461 = vmatprep.subr.bf16.mxu0 0
    %3462 = vmatpush1.bf16.msra.mxu0 %v3361
    %3463 = vmatprep.subr.bf16.mxu0 0
    %3464 = vmatpush1.bf16.msra.mxu0 %v3362
    %3465 = vmatprep.subr.bf16.mxu0 0
    %3466 = vmatpush1.bf16.msra.mxu0 %v3363
    %3467 = vmatprep.subr.bf16.mxu0 0
    %3468 = vmatpush1.bf16.msra.mxu0 %v3364
    %3469 = vmatprep.mubr.bf16.mxu0 %v3133
    %3470 = vmatmul.mubr.bf16.gmra.mrb[0].mxu0 %v3132
    %v3471 = vpop.f32.mrb[0].mxu0
    %v3472 = vadd.f32 %v3432, %v3471
    %v3473 = vpop.f32.mrb[0].mxu0
    %v3474 = vpop.f32.mrb[0].mxu0
    %v3475 = vpop.f32.mrb[0].mxu0
    %3476 = vdwg.mxu0
    %vm3477 = vcmask 9216
    %3478 = vst.msk [vmem:[#allocation2] sm:$0x3] %vm3477, %v3472
    // Predicated region
    $region22: #{dqn_forward.7} parent=1 // pred_check
      _
    $region23: #{dqn_forward.7} parent=1 // pred_check_branch
      %3480 = sbr.rel (0) target = $region25
    $region24: #{dqn_forward.7} parent=1 // pred_region
      %s3482 = ssub.s32 32, 32
      %3483 = vsyncadd [#allocation3], %s3482
      %s3485 = sshll.u32 [#allocation2], 4
      %s3486 = int_to_ptr.vmem [resolvable:$true] %s3485
      %3488 = dma.vmem_to_hbm [thread:$0]  %s3486, 32, %s5, [#allocation3]
    $region25: #{dqn_forward.7} parent=1 // pred_fallthru
      _
    // Predicated region
    $region26: #{dqn_forward.7} parent=1 // pred_check
      _
    $region27: #{dqn_forward.7} parent=1 // pred_check_branch
      %3490 = sbr.rel (0) target = $region29
    $region28: #{dqn_forward.7} parent=1 // pred_region
      %3491 = dma.done [#allocation3], 32
    $region29: #{dqn_forward.7} parent=1 // pred_fallthru
      _
    %3492 = vsyncpa [#allocation3], 1

</llo_original>
